<compile_context>
chip_gen: v7x
topology: tpu7x:2x2x1
jax: 0.10.0
libtpu: 0.0.40
codegen_flags: <defaults>
</compile_context>

<pallas_src>
import jax
import jax.numpy as jnp
from jax.experimental import pallas as pl
from jax.experimental.pallas import tpu as pltpu

BN_EPS = 1e-5
MXU_DTYPE = jnp.bfloat16   # matmul operand dtype (f32 accumulation)


# ---------------------------------------------------------------------------
# Fused Pallas kernel: conv1+BN1+ReLU -> conv2+BN2 -> +residual -> ReLU
# ---------------------------------------------------------------------------
def _basic_block_kernel(x_ref, w1_ref, b1_ref, w2_ref, b2_ref, o_ref,
                        xp_ref, mp_ref):
    _, H, W, _ = x_ref.shape
    mxu_dtype = w1_ref.dtype

    # Zero-fill the padded scratch buffers: this provides the 1-px zero halo
    # for both convs. (Done every grid step so the kernel is safe under
    # megacore sharding of the batch axis.)
    xp_ref[...] = jnp.zeros_like(xp_ref)
    mp_ref[...] = jnp.zeros_like(mp_ref)

    x = x_ref[0]                                   # (H, W, Cin) f32; also the residual
    xp_ref[1:H + 1, 1:W + 1, :] = x                # interior write, halo stays zero

    def conv3x3(src_ref, w_ref):
        """3x3 conv (stride 1, SAME) as 9 shifted MXU matmuls, f32 accumulation."""
        cout = w_ref.shape[-1]
        acc = jnp.zeros((H, W, cout), jnp.float32)
        for dy in range(3):                        # statically unrolled taps
            for dx in range(3):
                patch = src_ref[dy:dy + H, dx:dx + W, :].astype(mxu_dtype)
                acc = acc + jax.lax.dot_general(
                    patch, w_ref[dy * 3 + dx],     # (H,W,Cin) x (Cin,Cout)
                    (((2,), (0,)), ((), ())),
                    preferred_element_type=jnp.float32)
        return acc

    # conv1 + BN1 (scale pre-folded into w1, so epilogue is +bias) + ReLU.
    h1 = jnp.maximum(conv3x3(xp_ref, w1_ref) + b1_ref[...], 0.0)
    mp_ref[1:H + 1, 1:W + 1, :] = h1               # intermediate stays in VMEM

    # conv2 + BN2 + identity shortcut + ReLU.
    y = conv3x3(mp_ref, w2_ref) + b2_ref[...] + x
    o_ref[0] = jnp.maximum(y, 0.0).astype(o_ref.dtype)


def basic_block_fused_nhwc(x_nhwc, w1_hwio, s1, b1, w2_hwio, s2, b2,
                           compute_dtype=MXU_DTYPE):
    """One fused pallas_call for the whole BasicBlock (identity shortcut)."""
    N, H, W, Cin = x_nhwc.shape
    Cmid = w1_hwio.shape[-1]
    Cout = w2_hwio.shape[-1]
    assert Cin == Cout, "identity shortcut requires in_planes == planes"

    # Fold BN scale into the conv weights (trace-time, once).
    w1f = (w1_hwio * s1[None, None, None, :]).reshape(9, Cin, Cmid).astype(compute_dtype)
    w2f = (w2_hwio * s2[None, None, None, :]).reshape(9, Cmid, Cout).astype(compute_dtype)
    b1r = b1.reshape(1, 1, Cmid).astype(jnp.float32)
    b2r = b2.reshape(1, 1, Cout).astype(jnp.float32)

    return pl.pallas_call(
        _basic_block_kernel,
        out_shape=jax.ShapeDtypeStruct((N, H, W, Cout), x_nhwc.dtype),
        grid=(N,),
        in_specs=[
            pl.BlockSpec((1, H, W, Cin), lambda n: (n, 0, 0, 0)),
            pl.BlockSpec((9, Cin, Cmid), lambda n: (0, 0, 0)),
            pl.BlockSpec((1, 1, Cmid), lambda n: (0, 0, 0)),
            pl.BlockSpec((9, Cmid, Cout), lambda n: (0, 0, 0)),
            pl.BlockSpec((1, 1, Cout), lambda n: (0, 0, 0)),
        ],
        out_specs=pl.BlockSpec((1, H, W, Cout), lambda n: (n, 0, 0, 0)),
        scratch_shapes=[
            pltpu.VMEM((H + 2, W + 2, Cin), jnp.float32),    # padded conv1 input
            pltpu.VMEM((H + 2, W + 2, Cmid), jnp.float32),   # padded conv1 output
        ],
        compiler_params=pltpu.CompilerParams(
            dimension_semantics=("parallel",)),
    )(x_nhwc, w1f, b1r, w2f, b2r)


# ---------------------------------------------------------------------------
# Wrapper (PyTorch-style NCHW interface) + BN folding
# ---------------------------------------------------------------------------
def _fold_bn(bn):
    scale = bn["gamma"] * jax.lax.rsqrt(bn["var"] + BN_EPS)
    bias = bn["beta"] - bn["mean"] * scale
    return scale, bias


@jax.jit
def basic_block_forward(x_nchw, params):
    """BasicBlock.forward for stride=1, in_planes==planes, pact=False.

    NOTE: for production, keep the surrounding model NHWC end-to-end; the two
    transposes below are only boundary adapters for the PyTorch NCHW API.
    """
    x = jnp.transpose(x_nchw, (0, 2, 3, 1))        # NCHW -> NHWC
    s1, b1 = _fold_bn(params["bn1"])
    s2, b2 = _fold_bn(params["bn2"])
    out = basic_block_fused_nhwc(x, params["w1_hwio"], s1, b1,
                                 params["w2_hwio"], s2, b2)
    return jnp.transpose(out, (0, 3, 1, 2))        # NHWC -> NCHW


# ---------------------------------------------------------------------------
# Deterministic parameter init + references
# ---------------------------------------------------------------------------
def init_params(key, in_planes, planes):
    k_w1, k_w2, k_bn1, k_bn2 = jax.random.split(key, 4)

    def bn_params(k, c):
        kg, kb, km, kv = jax.random.split(k, 4)
        return {
            "gamma": 0.5 + jax.random.uniform(kg, (c,), jnp.float32),
            "beta": 0.1 * jax.random.normal(kb, (c,), jnp.float32),
            "mean": 0.05 * jax.random.normal(km, (c,), jnp.float32),
            "var": 0.5 + jax.random.uniform(kv, (c,), jnp.float32),
        }

    # PyTorch conv weights are (Cout, Cin, kH, kW); the kernel uses HWIO.
    w1_oihw = 0.1 * jax.random.normal(k_w1, (planes, in_planes, 3, 3), jnp.float32)
    w2_oihw = 0.1 * jax.random.normal(k_w2, (planes, planes, 3, 3), jnp.float32)

    return {
        "w1_oihw": w1_oihw,
        "w2_oihw": w2_oihw,
        "w1_hwio": jnp.transpose(w1_oihw, (2, 3, 1, 0)),
        "w2_hwio": jnp.transpose(w2_oihw, (2, 3, 1, 0)),
        "bn1": bn_params(k_bn1, planes),
        "bn2": bn_params(k_bn2, planes),
    }


def reference_forward_f32(x_nchw, params):
    """Pure-f32 PyTorch-semantics reference (HIGHEST-precision convs)."""
    def conv(x, w):
        return jax.lax.conv_general_dilated(
            x, w, (1, 1), ((1, 1), (1, 1)),
            dimension_numbers=("NCHW", "OIHW", "NCHW"),
            precision=jax.lax.Precision.HIGHEST)

    def bn(x, p):
        s = p["gamma"] / jnp.sqrt(p["var"] + BN_EPS)
        b = p["beta"] - p["mean"] * s
        return x * s[None, :, None, None] + b[None, :, None, None]

    out = jax.nn.relu(bn(conv(x_nchw, params["w1_oihw"]), params["bn1"]))
    out = bn(conv(out, params["w2_oihw"]), params["bn2"]) + x_nchw
    return jax.nn.relu(out)


def reference_forward_matched(x_nchw, params, compute_dtype=MXU_DTYPE):
    """Reference mirroring the kernel's arithmetic: BN scale folded into the
    weights, conv operands cast to the MXU dtype (bf16), f32 accumulation."""
    s1, b1 = _fold_bn(params["bn1"])
    s2, b2 = _fold_bn(params["bn2"])
    w1 = (params["w1_oihw"] * s1[:, None, None, None]).astype(compute_dtype)
    w2 = (params["w2_oihw"] * s2[:, None, None, None]).astype(compute_dtype)

    def conv(x, w):
        return jax.lax.conv_general_dilated(
            x.astype(compute_dtype), w, (1, 1), ((1, 1), (1, 1)),
            dimension_numbers=("NCHW", "OIHW", "NCHW"),
            preferred_element_type=jnp.float32)

    h1 = jax.nn.relu(conv(x_nchw, w1) + b1[None, :, None, None])
    y = conv(h1, w2) + b2[None, :, None, None] + x_nchw
    return jax.nn.relu(y)


# ---------------------------------------------------------------------------
if __name__ == "__main__":
    key = jax.random.PRNGKey(0)
    k_x, k_p = jax.random.split(key)

    N, C, H, W = 2, 8, 16, 16                      # in_planes == planes, stride=1
    x = jax.random.normal(k_x, (N, C, H, W), jnp.float32)
    params = init_params(k_p, in_planes=C, planes=C)

    out = jax.block_until_ready(basic_block_forward(x, params))
    assert out.shape == (N, C, H, W)

    # Tight check vs a precision-matched (bf16-MXU, f32-accum) reference:
    # catches any structural bug (padding/halo, tap offsets, BN fold, residual,
    # ReLU). Small slack covers conv accumulation-order differences.
    ref_m = reference_forward_matched(x, params)
    err_m = float(jnp.max(jnp.abs(out - ref_m)))
    assert jnp.allclose(out, ref_m, atol=5e-3, rtol=5e-3), err_m

    # Sanity check vs the pure-f32 PyTorch-semantics reference (looser, since
    # the kernel intentionally uses bf16 MXU operands).
    ref_f = reference_forward_f32(x, params)
    err_f = float(jnp.max(jnp.abs(out - ref_f)))
    assert jnp.allclose(out, ref_f, atol=1e-1, rtol=1e-1), err_f

    print("KERNEL_OK")
</pallas_src>

<mosaic_0001>
module attributes {stable_mosaic.version = 11 : i64} {
  func.func @_basic_block_kernel(%arg0: i32, %arg1: memref<1x16x16x8xf32, #tpu.memory_space<vmem>>, %arg2: memref<9x8x8xbf16, #tpu.memory_space<vmem>>, %arg3: memref<1x1x8xf32, #tpu.memory_space<vmem>>, %arg4: memref<9x8x8xbf16, #tpu.memory_space<vmem>>, %arg5: memref<1x1x8xf32, #tpu.memory_space<vmem>>, %arg6: memref<1x16x16x8xf32, #tpu.memory_space<vmem>>, %arg7: memref<18x18x8xf32, #tpu.memory_space<vmem>>, %arg8: memref<18x18x8xf32, #tpu.memory_space<vmem>>) attributes {dimension_semantics = [#tpu.dimension_semantics<parallel>], iteration_bounds = array<i64: 2>, scalar_prefetch = 0 : i64, scratch_operands = 2 : i64, tpu.core_type = #tpu.core_type<tc>, window_params = [{transform_indices = @transform_0, window_bounds = array<i64: 1, 16, 16, 8>}, {pipeline_mode = #tpu.pipeline_mode<synchronous>, transform_indices = @transform_1, window_bounds = array<i64: 9, 8, 8>}, {pipeline_mode = #tpu.pipeline_mode<synchronous>, transform_indices = @transform_2, window_bounds = array<i64: 1, 1, 8>}, {pipeline_mode = #tpu.pipeline_mode<synchronous>, transform_indices = @transform_3, window_bounds = array<i64: 9, 8, 8>}, {pipeline_mode = #tpu.pipeline_mode<synchronous>, transform_indices = @transform_4, window_bounds = array<i64: 1, 1, 8>}, {transform_indices = @transform_5, window_bounds = array<i64: 1, 16, 16, 8>}]} {
    %cst = arith.constant 0.000000e+00 : f32
    %0 = vector.broadcast %cst : f32 to vector<18x18x8xf32>
    %c0 = arith.constant 0 : index
    %c0_0 = arith.constant 0 : index
    %c0_1 = arith.constant 0 : index
    %1 = vector.load %arg7[%c0, %c0_0, %c0_1] : memref<18x18x8xf32, #tpu.memory_space<vmem>>, vector<18x18x8xf32>
    tpu.vector_store %arg7[%c0, %c0_0, %c0_1], %0 {strides = array<i32>} : memref<18x18x8xf32, #tpu.memory_space<vmem>>, vector<18x18x8xf32>,
    %cst_2 = arith.constant 0.000000e+00 : f32
    %2 = vector.broadcast %cst_2 : f32 to vector<18x18x8xf32>
    %c0_3 = arith.constant 0 : index
    %c0_4 = arith.constant 0 : index
    %c0_5 = arith.constant 0 : index
    %3 = vector.load %arg8[%c0_3, %c0_4, %c0_5] : memref<18x18x8xf32, #tpu.memory_space<vmem>>, vector<18x18x8xf32>
    tpu.vector_store %arg8[%c0_3, %c0_4, %c0_5], %2 {strides = array<i32>} : memref<18x18x8xf32, #tpu.memory_space<vmem>>, vector<18x18x8xf32>,
    %c0_6 = arith.constant 0 : index
    %c0_7 = arith.constant 0 : index
    %c0_8 = arith.constant 0 : index
    %c0_9 = arith.constant 0 : index
    %4 = vector.load %arg1[%c0_6, %c0_7, %c0_8, %c0_9] : memref<1x16x16x8xf32, #tpu.memory_space<vmem>>, vector<1x16x16x8xf32>
    %5 = vector.shape_cast %4 : vector<1x16x16x8xf32> to vector<16x16x8xf32>
    %c1 = arith.constant 1 : index
    %c1_10 = arith.constant 1 : index
    %c0_11 = arith.constant 0 : index
    %6 = vector.load %arg7[%c1, %c1_10, %c0_11] : memref<18x18x8xf32, #tpu.memory_space<vmem>>, vector<16x16x8xf32>
    tpu.vector_store %arg7[%c1, %c1_10, %c0_11], %5 {strides = array<i32>} : memref<18x18x8xf32, #tpu.memory_space<vmem>>, vector<16x16x8xf32>,
    %cst_12 = arith.constant 0.000000e+00 : f32
    %7 = vector.broadcast %cst_12 : f32 to vector<16x16x8xf32>
    %c0_13 = arith.constant 0 : index
    %c0_14 = arith.constant 0 : index
    %c0_15 = arith.constant 0 : index
    %8 = vector.load %arg7[%c0_13, %c0_14, %c0_15] : memref<18x18x8xf32, #tpu.memory_space<vmem>>, vector<16x16x8xf32>
    %9 = arith.truncf %8 : vector<16x16x8xf32> to vector<16x16x8xbf16>
    %c0_16 = arith.constant 0 : index
    %c0_17 = arith.constant 0 : index
    %c0_18 = arith.constant 0 : index
    %10 = vector.load %arg2[%c0_16, %c0_17, %c0_18] : memref<9x8x8xbf16, #tpu.memory_space<vmem>>, vector<1x8x8xbf16>
    %11 = vector.shape_cast %10 : vector<1x8x8xbf16> to vector<8x8xbf16>
    %cst_19 = arith.constant dense<0.000000e+00> : vector<16x16x8xf32>
    %12 = tpu.matmul %9, %11, %cst_19 {dimension_numbers = #tpu.dot_dimension_numbers<[2], [0], [0, 1], [1], [0, 0, 0, 1, 1, 1], [], []>} : vector<16x16x8xbf16>, vector<8x8xbf16>, vector<16x16x8xf32> -> vector<16x16x8xf32>
    %13 = arith.addf %7, %12 : vector<16x16x8xf32>
    %c0_20 = arith.constant 0 : index
    %c1_21 = arith.constant 1 : index
    %c0_22 = arith.constant 0 : index
    %14 = vector.load %arg7[%c0_20, %c1_21, %c0_22] : memref<18x18x8xf32, #tpu.memory_space<vmem>>, vector<16x16x8xf32>
    %15 = arith.truncf %14 : vector<16x16x8xf32> to vector<16x16x8xbf16>
    %c1_23 = arith.constant 1 : index
    %c0_24 = arith.constant 0 : index
    %c0_25 = arith.constant 0 : index
    %16 = vector.load %arg2[%c1_23, %c0_24, %c0_25] : memref<9x8x8xbf16, #tpu.memory_space<vmem>>, vector<1x8x8xbf16>
    %17 = vector.shape_cast %16 : vector<1x8x8xbf16> to vector<8x8xbf16>
    %cst_26 = arith.constant dense<0.000000e+00> : vector<16x16x8xf32>
    %18 = tpu.matmul %15, %17, %cst_26 {dimension_numbers = #tpu.dot_dimension_numbers<[2], [0], [0, 1], [1], [0, 0, 0, 1, 1, 1], [], []>} : vector<16x16x8xbf16>, vector<8x8xbf16>, vector<16x16x8xf32> -> vector<16x16x8xf32>
    %19 = arith.addf %13, %18 : vector<16x16x8xf32>
    %c0_27 = arith.constant 0 : index
    %c2 = arith.constant 2 : index
    %c0_28 = arith.constant 0 : index
    %20 = vector.load %arg7[%c0_27, %c2, %c0_28] : memref<18x18x8xf32, #tpu.memory_space<vmem>>, vector<16x16x8xf32>
    %21 = arith.truncf %20 : vector<16x16x8xf32> to vector<16x16x8xbf16>
    %c2_29 = arith.constant 2 : index
    %c0_30 = arith.constant 0 : index
    %c0_31 = arith.constant 0 : index
    %22 = vector.load %arg2[%c2_29, %c0_30, %c0_31] : memref<9x8x8xbf16, #tpu.memory_space<vmem>>, vector<1x8x8xbf16>
    %23 = vector.shape_cast %22 : vector<1x8x8xbf16> to vector<8x8xbf16>
    %cst_32 = arith.constant dense<0.000000e+00> : vector<16x16x8xf32>
    %24 = tpu.matmul %21, %23, %cst_32 {dimension_numbers = #tpu.dot_dimension_numbers<[2], [0], [0, 1], [1], [0, 0, 0, 1, 1, 1], [], []>} : vector<16x16x8xbf16>, vector<8x8xbf16>, vector<16x16x8xf32> -> vector<16x16x8xf32>
    %25 = arith.addf %19, %24 : vector<16x16x8xf32>
    %c1_33 = arith.constant 1 : index
    %c0_34 = arith.constant 0 : index
    %c0_35 = arith.constant 0 : index
    %26 = vector.load %arg7[%c1_33, %c0_34, %c0_35] : memref<18x18x8xf32, #tpu.memory_space<vmem>>, vector<16x16x8xf32>
    %27 = arith.truncf %26 : vector<16x16x8xf32> to vector<16x16x8xbf16>
    %c3 = arith.constant 3 : index
    %c0_36 = arith.constant 0 : index
    %c0_37 = arith.constant 0 : index
    %28 = vector.load %arg2[%c3, %c0_36, %c0_37] : memref<9x8x8xbf16, #tpu.memory_space<vmem>>, vector<1x8x8xbf16>
    %29 = vector.shape_cast %28 : vector<1x8x8xbf16> to vector<8x8xbf16>
    %cst_38 = arith.constant dense<0.000000e+00> : vector<16x16x8xf32>
    %30 = tpu.matmul %27, %29, %cst_38 {dimension_numbers = #tpu.dot_dimension_numbers<[2], [0], [0, 1], [1], [0, 0, 0, 1, 1, 1], [], []>} : vector<16x16x8xbf16>, vector<8x8xbf16>, vector<16x16x8xf32> -> vector<16x16x8xf32>
    %31 = arith.addf %25, %30 : vector<16x16x8xf32>
    %c1_39 = arith.constant 1 : index
    %c1_40 = arith.constant 1 : index
    %c0_41 = arith.constant 0 : index
    %32 = vector.load %arg7[%c1_39, %c1_40, %c0_41] : memref<18x18x8xf32, #tpu.memory_space<vmem>>, vector<16x16x8xf32>
    %33 = arith.truncf %32 : vector<16x16x8xf32> to vector<16x16x8xbf16>
    %c4 = arith.constant 4 : index
    %c0_42 = arith.constant 0 : index
    %c0_43 = arith.constant 0 : index
    %34 = vector.load %arg2[%c4, %c0_42, %c0_43] : memref<9x8x8xbf16, #tpu.memory_space<vmem>>, vector<1x8x8xbf16>
    %35 = vector.shape_cast %34 : vector<1x8x8xbf16> to vector<8x8xbf16>
    %cst_44 = arith.constant dense<0.000000e+00> : vector<16x16x8xf32>
    %36 = tpu.matmul %33, %35, %cst_44 {dimension_numbers = #tpu.dot_dimension_numbers<[2], [0], [0, 1], [1], [0, 0, 0, 1, 1, 1], [], []>} : vector<16x16x8xbf16>, vector<8x8xbf16>, vector<16x16x8xf32> -> vector<16x16x8xf32>
    %37 = arith.addf %31, %36 : vector<16x16x8xf32>
    %c1_45 = arith.constant 1 : index
    %c2_46 = arith.constant 2 : index
    %c0_47 = arith.constant 0 : index
    %38 = vector.load %arg7[%c1_45, %c2_46, %c0_47] : memref<18x18x8xf32, #tpu.memory_space<vmem>>, vector<16x16x8xf32>
    %39 = arith.truncf %38 : vector<16x16x8xf32> to vector<16x16x8xbf16>
    %c5 = arith.constant 5 : index
    %c0_48 = arith.constant 0 : index
    %c0_49 = arith.constant 0 : index
    %40 = vector.load %arg2[%c5, %c0_48, %c0_49] : memref<9x8x8xbf16, #tpu.memory_space<vmem>>, vector<1x8x8xbf16>
    %41 = vector.shape_cast %40 : vector<1x8x8xbf16> to vector<8x8xbf16>
    %cst_50 = arith.constant dense<0.000000e+00> : vector<16x16x8xf32>
    %42 = tpu.matmul %39, %41, %cst_50 {dimension_numbers = #tpu.dot_dimension_numbers<[2], [0], [0, 1], [1], [0, 0, 0, 1, 1, 1], [], []>} : vector<16x16x8xbf16>, vector<8x8xbf16>, vector<16x16x8xf32> -> vector<16x16x8xf32>
    %43 = arith.addf %37, %42 : vector<16x16x8xf32>
    %c2_51 = arith.constant 2 : index
    %c0_52 = arith.constant 0 : index
    %c0_53 = arith.constant 0 : index
    %44 = vector.load %arg7[%c2_51, %c0_52, %c0_53] : memref<18x18x8xf32, #tpu.memory_space<vmem>>, vector<16x16x8xf32>
    %45 = arith.truncf %44 : vector<16x16x8xf32> to vector<16x16x8xbf16>
    %c6 = arith.constant 6 : index
    %c0_54 = arith.constant 0 : index
    %c0_55 = arith.constant 0 : index
    %46 = vector.load %arg2[%c6, %c0_54, %c0_55] : memref<9x8x8xbf16, #tpu.memory_space<vmem>>, vector<1x8x8xbf16>
    %47 = vector.shape_cast %46 : vector<1x8x8xbf16> to vector<8x8xbf16>
    %cst_56 = arith.constant dense<0.000000e+00> : vector<16x16x8xf32>
    %48 = tpu.matmul %45, %47, %cst_56 {dimension_numbers = #tpu.dot_dimension_numbers<[2], [0], [0, 1], [1], [0, 0, 0, 1, 1, 1], [], []>} : vector<16x16x8xbf16>, vector<8x8xbf16>, vector<16x16x8xf32> -> vector<16x16x8xf32>
    %49 = arith.addf %43, %48 : vector<16x16x8xf32>
    %c2_57 = arith.constant 2 : index
    %c1_58 = arith.constant 1 : index
    %c0_59 = arith.constant 0 : index
    %50 = vector.load %arg7[%c2_57, %c1_58, %c0_59] : memref<18x18x8xf32, #tpu.memory_space<vmem>>, vector<16x16x8xf32>
    %51 = arith.truncf %50 : vector<16x16x8xf32> to vector<16x16x8xbf16>
    %c7 = arith.constant 7 : index
    %c0_60 = arith.constant 0 : index
    %c0_61 = arith.constant 0 : index
    %52 = vector.load %arg2[%c7, %c0_60, %c0_61] : memref<9x8x8xbf16, #tpu.memory_space<vmem>>, vector<1x8x8xbf16>
    %53 = vector.shape_cast %52 : vector<1x8x8xbf16> to vector<8x8xbf16>
    %cst_62 = arith.constant dense<0.000000e+00> : vector<16x16x8xf32>
    %54 = tpu.matmul %51, %53, %cst_62 {dimension_numbers = #tpu.dot_dimension_numbers<[2], [0], [0, 1], [1], [0, 0, 0, 1, 1, 1], [], []>} : vector<16x16x8xbf16>, vector<8x8xbf16>, vector<16x16x8xf32> -> vector<16x16x8xf32>
    %55 = arith.addf %49, %54 : vector<16x16x8xf32>
    %c2_63 = arith.constant 2 : index
    %c2_64 = arith.constant 2 : index
    %c0_65 = arith.constant 0 : index
    %56 = vector.load %arg7[%c2_63, %c2_64, %c0_65] : memref<18x18x8xf32, #tpu.memory_space<vmem>>, vector<16x16x8xf32>
    %57 = arith.truncf %56 : vector<16x16x8xf32> to vector<16x16x8xbf16>
    %c8 = arith.constant 8 : index
    %c0_66 = arith.constant 0 : index
    %c0_67 = arith.constant 0 : index
    %58 = vector.load %arg2[%c8, %c0_66, %c0_67] : memref<9x8x8xbf16, #tpu.memory_space<vmem>>, vector<1x8x8xbf16>
    %59 = vector.shape_cast %58 : vector<1x8x8xbf16> to vector<8x8xbf16>
    %cst_68 = arith.constant dense<0.000000e+00> : vector<16x16x8xf32>
    %60 = tpu.matmul %57, %59, %cst_68 {dimension_numbers = #tpu.dot_dimension_numbers<[2], [0], [0, 1], [1], [0, 0, 0, 1, 1, 1], [], []>} : vector<16x16x8xbf16>, vector<8x8xbf16>, vector<16x16x8xf32> -> vector<16x16x8xf32>
    %61 = arith.addf %55, %60 : vector<16x16x8xf32>
    %c0_69 = arith.constant 0 : index
    %c0_70 = arith.constant 0 : index
    %c0_71 = arith.constant 0 : index
    %62 = vector.load %arg3[%c0_69, %c0_70, %c0_71] : memref<1x1x8xf32, #tpu.memory_space<vmem>>, vector<1x1x8xf32>
    %63 = vector.broadcast %62 : vector<1x1x8xf32> to vector<16x16x8xf32>
    %64 = arith.addf %61, %63 : vector<16x16x8xf32>
    %cst_72 = arith.constant 0.000000e+00 : f32
    %65 = vector.broadcast %cst_72 : f32 to vector<16x16x8xf32>
    %66 = arith.maximumf %64, %65 : vector<16x16x8xf32>
    %c1_73 = arith.constant 1 : index
    %c1_74 = arith.constant 1 : index
    %c0_75 = arith.constant 0 : index
    %67 = vector.load %arg8[%c1_73, %c1_74, %c0_75] : memref<18x18x8xf32, #tpu.memory_space<vmem>>, vector<16x16x8xf32>
    tpu.vector_store %arg8[%c1_73, %c1_74, %c0_75], %66 {strides = array<i32>} : memref<18x18x8xf32, #tpu.memory_space<vmem>>, vector<16x16x8xf32>,
    %cst_76 = arith.constant 0.000000e+00 : f32
    %68 = vector.broadcast %cst_76 : f32 to vector<16x16x8xf32>
    %c0_77 = arith.constant 0 : index
    %c0_78 = arith.constant 0 : index
    %c0_79 = arith.constant 0 : index
    %69 = vector.load %arg8[%c0_77, %c0_78, %c0_79] : memref<18x18x8xf32, #tpu.memory_space<vmem>>, vector<16x16x8xf32>
    %70 = arith.truncf %69 : vector<16x16x8xf32> to vector<16x16x8xbf16>
    %c0_80 = arith.constant 0 : index
    %c0_81 = arith.constant 0 : index
    %c0_82 = arith.constant 0 : index
    %71 = vector.load %arg4[%c0_80, %c0_81, %c0_82] : memref<9x8x8xbf16, #tpu.memory_space<vmem>>, vector<1x8x8xbf16>
    %72 = vector.shape_cast %71 : vector<1x8x8xbf16> to vector<8x8xbf16>
    %cst_83 = arith.constant dense<0.000000e+00> : vector<16x16x8xf32>
    %73 = tpu.matmul %70, %72, %cst_83 {dimension_numbers = #tpu.dot_dimension_numbers<[2], [0], [0, 1], [1], [0, 0, 0, 1, 1, 1], [], []>} : vector<16x16x8xbf16>, vector<8x8xbf16>, vector<16x16x8xf32> -> vector<16x16x8xf32>
    %74 = arith.addf %68, %73 : vector<16x16x8xf32>
    %c0_84 = arith.constant 0 : index
    %c1_85 = arith.constant 1 : index
    %c0_86 = arith.constant 0 : index
    %75 = vector.load %arg8[%c0_84, %c1_85, %c0_86] : memref<18x18x8xf32, #tpu.memory_space<vmem>>, vector<16x16x8xf32>
    %76 = arith.truncf %75 : vector<16x16x8xf32> to vector<16x16x8xbf16>
    %c1_87 = arith.constant 1 : index
    %c0_88 = arith.constant 0 : index
    %c0_89 = arith.constant 0 : index
    %77 = vector.load %arg4[%c1_87, %c0_88, %c0_89] : memref<9x8x8xbf16, #tpu.memory_space<vmem>>, vector<1x8x8xbf16>
    %78 = vector.shape_cast %77 : vector<1x8x8xbf16> to vector<8x8xbf16>
    %cst_90 = arith.constant dense<0.000000e+00> : vector<16x16x8xf32>
    %79 = tpu.matmul %76, %78, %cst_90 {dimension_numbers = #tpu.dot_dimension_numbers<[2], [0], [0, 1], [1], [0, 0, 0, 1, 1, 1], [], []>} : vector<16x16x8xbf16>, vector<8x8xbf16>, vector<16x16x8xf32> -> vector<16x16x8xf32>
    %80 = arith.addf %74, %79 : vector<16x16x8xf32>
    %c0_91 = arith.constant 0 : index
    %c2_92 = arith.constant 2 : index
    %c0_93 = arith.constant 0 : index
    %81 = vector.load %arg8[%c0_91, %c2_92, %c0_93] : memref<18x18x8xf32, #tpu.memory_space<vmem>>, vector<16x16x8xf32>
    %82 = arith.truncf %81 : vector<16x16x8xf32> to vector<16x16x8xbf16>
    %c2_94 = arith.constant 2 : index
    %c0_95 = arith.constant 0 : index
    %c0_96 = arith.constant 0 : index
    %83 = vector.load %arg4[%c2_94, %c0_95, %c0_96] : memref<9x8x8xbf16, #tpu.memory_space<vmem>>, vector<1x8x8xbf16>
    %84 = vector.shape_cast %83 : vector<1x8x8xbf16> to vector<8x8xbf16>
    %cst_97 = arith.constant dense<0.000000e+00> : vector<16x16x8xf32>
    %85 = tpu.matmul %82, %84, %cst_97 {dimension_numbers = #tpu.dot_dimension_numbers<[2], [0], [0, 1], [1], [0, 0, 0, 1, 1, 1], [], []>} : vector<16x16x8xbf16>, vector<8x8xbf16>, vector<16x16x8xf32> -> vector<16x16x8xf32>
    %86 = arith.addf %80, %85 : vector<16x16x8xf32>
    %c1_98 = arith.constant 1 : index
    %c0_99 = arith.constant 0 : index
    %c0_100 = arith.constant 0 : index
    %87 = vector.load %arg8[%c1_98, %c0_99, %c0_100] : memref<18x18x8xf32, #tpu.memory_space<vmem>>, vector<16x16x8xf32>
    %88 = arith.truncf %87 : vector<16x16x8xf32> to vector<16x16x8xbf16>
    %c3_101 = arith.constant 3 : index
    %c0_102 = arith.constant 0 : index
    %c0_103 = arith.constant 0 : index
    %89 = vector.load %arg4[%c3_101, %c0_102, %c0_103] : memref<9x8x8xbf16, #tpu.memory_space<vmem>>, vector<1x8x8xbf16>
    %90 = vector.shape_cast %89 : vector<1x8x8xbf16> to vector<8x8xbf16>
    %cst_104 = arith.constant dense<0.000000e+00> : vector<16x16x8xf32>
    %91 = tpu.matmul %88, %90, %cst_104 {dimension_numbers = #tpu.dot_dimension_numbers<[2], [0], [0, 1], [1], [0, 0, 0, 1, 1, 1], [], []>} : vector<16x16x8xbf16>, vector<8x8xbf16>, vector<16x16x8xf32> -> vector<16x16x8xf32>
    %92 = arith.addf %86, %91 : vector<16x16x8xf32>
    %c1_105 = arith.constant 1 : index
    %c1_106 = arith.constant 1 : index
    %c0_107 = arith.constant 0 : index
    %93 = vector.load %arg8[%c1_105, %c1_106, %c0_107] : memref<18x18x8xf32, #tpu.memory_space<vmem>>, vector<16x16x8xf32>
    %94 = arith.truncf %93 : vector<16x16x8xf32> to vector<16x16x8xbf16>
    %c4_108 = arith.constant 4 : index
    %c0_109 = arith.constant 0 : index
    %c0_110 = arith.constant 0 : index
    %95 = vector.load %arg4[%c4_108, %c0_109, %c0_110] : memref<9x8x8xbf16, #tpu.memory_space<vmem>>, vector<1x8x8xbf16>
    %96 = vector.shape_cast %95 : vector<1x8x8xbf16> to vector<8x8xbf16>
    %cst_111 = arith.constant dense<0.000000e+00> : vector<16x16x8xf32>
    %97 = tpu.matmul %94, %96, %cst_111 {dimension_numbers = #tpu.dot_dimension_numbers<[2], [0], [0, 1], [1], [0, 0, 0, 1, 1, 1], [], []>} : vector<16x16x8xbf16>, vector<8x8xbf16>, vector<16x16x8xf32> -> vector<16x16x8xf32>
    %98 = arith.addf %92, %97 : vector<16x16x8xf32>
    %c1_112 = arith.constant 1 : index
    %c2_113 = arith.constant 2 : index
    %c0_114 = arith.constant 0 : index
    %99 = vector.load %arg8[%c1_112, %c2_113, %c0_114] : memref<18x18x8xf32, #tpu.memory_space<vmem>>, vector<16x16x8xf32>
    %100 = arith.truncf %99 : vector<16x16x8xf32> to vector<16x16x8xbf16>
    %c5_115 = arith.constant 5 : index
    %c0_116 = arith.constant 0 : index
    %c0_117 = arith.constant 0 : index
    %101 = vector.load %arg4[%c5_115, %c0_116, %c0_117] : memref<9x8x8xbf16, #tpu.memory_space<vmem>>, vector<1x8x8xbf16>
    %102 = vector.shape_cast %101 : vector<1x8x8xbf16> to vector<8x8xbf16>
    %cst_118 = arith.constant dense<0.000000e+00> : vector<16x16x8xf32>
    %103 = tpu.matmul %100, %102, %cst_118 {dimension_numbers = #tpu.dot_dimension_numbers<[2], [0], [0, 1], [1], [0, 0, 0, 1, 1, 1], [], []>} : vector<16x16x8xbf16>, vector<8x8xbf16>, vector<16x16x8xf32> -> vector<16x16x8xf32>
    %104 = arith.addf %98, %103 : vector<16x16x8xf32>
    %c2_119 = arith.constant 2 : index
    %c0_120 = arith.constant 0 : index
    %c0_121 = arith.constant 0 : index
    %105 = vector.load %arg8[%c2_119, %c0_120, %c0_121] : memref<18x18x8xf32, #tpu.memory_space<vmem>>, vector<16x16x8xf32>
    %106 = arith.truncf %105 : vector<16x16x8xf32> to vector<16x16x8xbf16>
    %c6_122 = arith.constant 6 : index
    %c0_123 = arith.constant 0 : index
    %c0_124 = arith.constant 0 : index
    %107 = vector.load %arg4[%c6_122, %c0_123, %c0_124] : memref<9x8x8xbf16, #tpu.memory_space<vmem>>, vector<1x8x8xbf16>
    %108 = vector.shape_cast %107 : vector<1x8x8xbf16> to vector<8x8xbf16>
    %cst_125 = arith.constant dense<0.000000e+00> : vector<16x16x8xf32>
    %109 = tpu.matmul %106, %108, %cst_125 {dimension_numbers = #tpu.dot_dimension_numbers<[2], [0], [0, 1], [1], [0, 0, 0, 1, 1, 1], [], []>} : vector<16x16x8xbf16>, vector<8x8xbf16>, vector<16x16x8xf32> -> vector<16x16x8xf32>
    %110 = arith.addf %104, %109 : vector<16x16x8xf32>
    %c2_126 = arith.constant 2 : index
    %c1_127 = arith.constant 1 : index
    %c0_128 = arith.constant 0 : index
    %111 = vector.load %arg8[%c2_126, %c1_127, %c0_128] : memref<18x18x8xf32, #tpu.memory_space<vmem>>, vector<16x16x8xf32>
    %112 = arith.truncf %111 : vector<16x16x8xf32> to vector<16x16x8xbf16>
    %c7_129 = arith.constant 7 : index
    %c0_130 = arith.constant 0 : index
    %c0_131 = arith.constant 0 : index
    %113 = vector.load %arg4[%c7_129, %c0_130, %c0_131] : memref<9x8x8xbf16, #tpu.memory_space<vmem>>, vector<1x8x8xbf16>
    %114 = vector.shape_cast %113 : vector<1x8x8xbf16> to vector<8x8xbf16>
    %cst_132 = arith.constant dense<0.000000e+00> : vector<16x16x8xf32>
    %115 = tpu.matmul %112, %114, %cst_132 {dimension_numbers = #tpu.dot_dimension_numbers<[2], [0], [0, 1], [1], [0, 0, 0, 1, 1, 1], [], []>} : vector<16x16x8xbf16>, vector<8x8xbf16>, vector<16x16x8xf32> -> vector<16x16x8xf32>
    %116 = arith.addf %110, %115 : vector<16x16x8xf32>
    %c2_133 = arith.constant 2 : index
    %c2_134 = arith.constant 2 : index
    %c0_135 = arith.constant 0 : index
    %117 = vector.load %arg8[%c2_133, %c2_134, %c0_135] : memref<18x18x8xf32, #tpu.memory_space<vmem>>, vector<16x16x8xf32>
    %118 = arith.truncf %117 : vector<16x16x8xf32> to vector<16x16x8xbf16>
    %c8_136 = arith.constant 8 : index
    %c0_137 = arith.constant 0 : index
    %c0_138 = arith.constant 0 : index
    %119 = vector.load %arg4[%c8_136, %c0_137, %c0_138] : memref<9x8x8xbf16, #tpu.memory_space<vmem>>, vector<1x8x8xbf16>
    %120 = vector.shape_cast %119 : vector<1x8x8xbf16> to vector<8x8xbf16>
    %cst_139 = arith.constant dense<0.000000e+00> : vector<16x16x8xf32>
    %121 = tpu.matmul %118, %120, %cst_139 {dimension_numbers = #tpu.dot_dimension_numbers<[2], [0], [0, 1], [1], [0, 0, 0, 1, 1, 1], [], []>} : vector<16x16x8xbf16>, vector<8x8xbf16>, vector<16x16x8xf32> -> vector<16x16x8xf32>
    %122 = arith.addf %116, %121 : vector<16x16x8xf32>
    %c0_140 = arith.constant 0 : index
    %c0_141 = arith.constant 0 : index
    %c0_142 = arith.constant 0 : index
    %123 = vector.load %arg5[%c0_140, %c0_141, %c0_142] : memref<1x1x8xf32, #tpu.memory_space<vmem>>, vector<1x1x8xf32>
    %124 = vector.broadcast %123 : vector<1x1x8xf32> to vector<16x16x8xf32>
    %125 = arith.addf %122, %124 : vector<16x16x8xf32>
    %126 = arith.addf %125, %5 : vector<16x16x8xf32>
    %cst_143 = arith.constant 0.000000e+00 : f32
    %127 = vector.broadcast %cst_143 : f32 to vector<16x16x8xf32>
    %128 = arith.maximumf %126, %127 : vector<16x16x8xf32>
    %c0_144 = arith.constant 0 : index
    %c0_145 = arith.constant 0 : index
    %c0_146 = arith.constant 0 : index
    %c0_147 = arith.constant 0 : index
    %129 = vector.load %arg6[%c0_144, %c0_145, %c0_146, %c0_147] : memref<1x16x16x8xf32, #tpu.memory_space<vmem>>, vector<1x16x16x8xf32>
    %130 = vector.shape_cast %129 : vector<1x16x16x8xf32> to vector<16x16x8xf32>
    %131 = vector.shape_cast %128 : vector<16x16x8xf32> to vector<1x16x16x8xf32>
    tpu.vector_store %arg6[%c0_144, %c0_145, %c0_146, %c0_147], %131 {strides = array<i32>} : memref<1x16x16x8xf32, #tpu.memory_space<vmem>>, vector<1x16x16x8xf32>,
    return
  }
  func.func @transform_0(%arg0: i32) -> (i32, i32, i32, i32) {
    %c0_i32 = arith.constant 0 : i32
    %c0_i32_0 = arith.constant 0 : i32
    %c0_i32_1 = arith.constant 0 : i32
    %c0_i32_2 = arith.constant 0 : i32
    return %arg0, %c0_i32, %c0_i32_0, %c0_i32_1 : i32, i32, i32, i32
  }
  func.func @transform_1(%arg0: i32) -> (i32, i32, i32) {
    %c0_i32 = arith.constant 0 : i32
    %c0_i32_0 = arith.constant 0 : i32
    %c0_i32_1 = arith.constant 0 : i32
    %c0_i32_2 = arith.constant 0 : i32
    return %c0_i32, %c0_i32_0, %c0_i32_1 : i32, i32, i32
  }
  func.func @transform_2(%arg0: i32) -> (i32, i32, i32) {
    %c0_i32 = arith.constant 0 : i32
    %c0_i32_0 = arith.constant 0 : i32
    %c0_i32_1 = arith.constant 0 : i32
    %c0_i32_2 = arith.constant 0 : i32
    return %c0_i32, %c0_i32_0, %c0_i32_1 : i32, i32, i32
  }
  func.func @transform_3(%arg0: i32) -> (i32, i32, i32) {
    %c0_i32 = arith.constant 0 : i32
    %c0_i32_0 = arith.constant 0 : i32
    %c0_i32_1 = arith.constant 0 : i32
    %c0_i32_2 = arith.constant 0 : i32
    return %c0_i32, %c0_i32_0, %c0_i32_1 : i32, i32, i32
  }
  func.func @transform_4(%arg0: i32) -> (i32, i32, i32) {
    %c0_i32 = arith.constant 0 : i32
    %c0_i32_0 = arith.constant 0 : i32
    %c0_i32_1 = arith.constant 0 : i32
    %c0_i32_2 = arith.constant 0 : i32
    return %c0_i32, %c0_i32_0, %c0_i32_1 : i32, i32, i32
  }
  func.func @transform_5(%arg0: i32) -> (i32, i32, i32, i32) {
    %c0_i32 = arith.constant 0 : i32
    %c0_i32_0 = arith.constant 0 : i32
    %c0_i32_1 = arith.constant 0 : i32
    %c0_i32_2 = arith.constant 0 : i32
    return %arg0, %c0_i32, %c0_i32_0, %c0_i32_1 : i32, i32, i32, i32
  }
}

</mosaic_0001>

<llo_original>
// kernel: basic_block_forward.1
$region0: #{basic_block_forward.1}
  #allocation0 [shape = 'u32[]', space=smem, size = 0x4, offset = 0x4, fixed_abs, tag = 'smem constant byte address 0x4 - core index']
  #allocation1 [shape = 'u32[144,128]{1,0:T(1,128)}', space=vmem, size = 0x12000, scoped, tag = 'internal scratch']
  #allocation2 [shape = 'f32[18,18,8]{2,1,0:T(8,128)}', space=vmem, size = 0x36000, scoped, tag = 'scratch operand']
  #allocation3 [shape = 'f32[18,18,8]{2,1,0:T(8,128)}', space=vmem, size = 0x36000, scoped, tag = 'scratch operand']
  %s0 = inlined_call_operand.vmem [shape: f32[2,16,16,8], index: 0, kind: input, shape index: {}]
  %s1 = inlined_call_operand.vmem [shape: bf16[9,8,8], index: 1, kind: input, shape index: {}]
  %s2 = inlined_call_operand.vmem [shape: f32[1,1,8], index: 2, kind: input, shape index: {}]
  %s3 = inlined_call_operand.vmem [shape: bf16[9,8,8], index: 3, kind: input, shape index: {}]
  %s4 = inlined_call_operand.vmem [shape: f32[1,1,8], index: 4, kind: input, shape index: {}]
  %s5 = inlined_call_operand.vmem [shape: f32[2,16,16,8], index: 5, kind: output, shape index: {}]
  %s6 = sld [smem:[#allocation0]]
  $region53: #{basic_block_forward.1} parent=0
    _
  %s8 = ssub.s32 1, %s6
  %s9 = scalar_select 0, %s8, %s6
  loop: start=0, step=1, limit=4
  $region2: #{basic_block_forward.1} parent=0 // loop_pre_header
    _
  $region3: #{basic_block_forward.1} parent=0 // loop_header
    %s11 = sphi 0, %s15
    %p12 = scmp.ge.s32.totalorder %s11, 4
    %s21 = sphi 0, %s23
    %s24 = sphi 0, %s21
    %s25 = sphi 0, %s24
    %s41 = sphi 0, %s25
    %s45 = sphi 0, %s45
    %s47 = sphi 0, %s45
    %s48 = sphi 0, %s47
    %s62 = sphi 0, %s48
    %s66 = sphi 0, %s66
    %s68 = sphi 0, %s66
    %s69 = sphi 0, %s68
    %s83 = sphi 0, %s69
    %s87 = sphi 0, %s87
    %s89 = sphi 0, %s87
    %s90 = sphi 0, %s89
    %s104 = sphi 0, %s90
    %s108 = sphi 0, %s108
    %s110 = sphi 0, %s108
    %s111 = sphi 0, %s110
    %s125 = sphi 0, %s111
    %s131 = sphi 0, %s133
    %s134 = sphi 0, %s131
    %s135 = sphi 0, %s134
    %s151 = sphi 0, %s135
  $region4: #{basic_block_forward.1} parent=0 // loop_header_branch
    %14 = sbr.rel (%p12) target = $region8
  $region5: #{basic_block_forward.1} parent=0 // loop_body
    %s16 = ssub.s32 %s11, 1
    %s17 = ssub.s32 %s11, 2
    %s18 = sadd.s32 %s11, 1
    %s19 = ssub.s32 %s11, %s18
    %p20 = scmp.eq.s32.totalorder %s19, 0
    %s22 = sadd.s32 %s21, 1
    %s23 = scalar_select %p20, %s21, %s22
    %p26 = pneg %p20
    %p27 = scmp.eq.s32.totalorder %s11, 1
    %p28 = por %p26, %p27
    %p29 = scmp.ne.s32.totalorder %s21, %s24
    %p30 = scmp.eq.s32.totalorder %s11, 0
    %p31 = por %p29, %p30
    %p32 = scmp.ne.s32.totalorder %s21, %s24
    %p33 = scmp.eq.s32.totalorder %s16, 1
    %p34 = por %p32, %p33
    %p35 = scmp.ne.s32.totalorder %s24, %s25
    %p36 = scmp.eq.s32.totalorder %s16, 0
    %p37 = por %p35, %p36
    %p38 = scmp.ne.s32.totalorder %s24, %s25
    %p39 = scmp.eq.s32.totalorder %s17, 1
    %p40 = por %p38, %p39
    %p42 = scmp.ne.s32.totalorder %s25, %s41
    %p43 = scmp.eq.s32.totalorder %s17, 0
    %p44 = por %p42, %p43
    %s46 = sadd.s32 %s45, 1
    %p49 = scmp.eq.s32.totalorder %s11, 1
    %p50 = scmp.ne.s32.totalorder %s45, %s47
    %p51 = scmp.eq.s32.totalorder %s11, 0
    %p52 = por %p50, %p51
    %p53 = scmp.ne.s32.totalorder %s45, %s47
    %p54 = scmp.eq.s32.totalorder %s16, 1
    %p55 = por %p53, %p54
    %p56 = scmp.ne.s32.totalorder %s47, %s48
    %p57 = scmp.eq.s32.totalorder %s16, 0
    %p58 = por %p56, %p57
    %p59 = scmp.ne.s32.totalorder %s47, %s48
    %p60 = scmp.eq.s32.totalorder %s17, 1
    %p61 = por %p59, %p60
    %p63 = scmp.ne.s32.totalorder %s48, %s62
    %p64 = scmp.eq.s32.totalorder %s17, 0
    %p65 = por %p63, %p64
    %s67 = sadd.s32 %s66, 1
    %p70 = scmp.eq.s32.totalorder %s11, 1
    %p71 = scmp.ne.s32.totalorder %s66, %s68
    %p72 = scmp.eq.s32.totalorder %s11, 0
    %p73 = por %p71, %p72
    %p74 = scmp.ne.s32.totalorder %s66, %s68
    %p75 = scmp.eq.s32.totalorder %s16, 1
    %p76 = por %p74, %p75
    %p77 = scmp.ne.s32.totalorder %s68, %s69
    %p78 = scmp.eq.s32.totalorder %s16, 0
    %p79 = por %p77, %p78
    %p80 = scmp.ne.s32.totalorder %s68, %s69
    %p81 = scmp.eq.s32.totalorder %s17, 1
    %p82 = por %p80, %p81
    %p84 = scmp.ne.s32.totalorder %s69, %s83
    %p85 = scmp.eq.s32.totalorder %s17, 0
    %p86 = por %p84, %p85
    %s88 = sadd.s32 %s87, 1
    %p91 = scmp.eq.s32.totalorder %s11, 1
    %p92 = scmp.ne.s32.totalorder %s87, %s89
    %p93 = scmp.eq.s32.totalorder %s11, 0
    %p94 = por %p92, %p93
    %p95 = scmp.ne.s32.totalorder %s87, %s89
    %p96 = scmp.eq.s32.totalorder %s16, 1
    %p97 = por %p95, %p96
    %p98 = scmp.ne.s32.totalorder %s89, %s90
    %p99 = scmp.eq.s32.totalorder %s16, 0
    %p100 = por %p98, %p99
    %p101 = scmp.ne.s32.totalorder %s89, %s90
    %p102 = scmp.eq.s32.totalorder %s17, 1
    %p103 = por %p101, %p102
    %p105 = scmp.ne.s32.totalorder %s90, %s104
    %p106 = scmp.eq.s32.totalorder %s17, 0
    %p107 = por %p105, %p106
    %s109 = sadd.s32 %s108, 1
    %p112 = scmp.eq.s32.totalorder %s11, 1
    %p113 = scmp.ne.s32.totalorder %s108, %s110
    %p114 = scmp.eq.s32.totalorder %s11, 0
    %p115 = por %p113, %p114
    %p116 = scmp.ne.s32.totalorder %s108, %s110
    %p117 = scmp.eq.s32.totalorder %s16, 1
    %p118 = por %p116, %p117
    %p119 = scmp.ne.s32.totalorder %s110, %s111
    %p120 = scmp.eq.s32.totalorder %s16, 0
    %p121 = por %p119, %p120
    %p122 = scmp.ne.s32.totalorder %s110, %s111
    %p123 = scmp.eq.s32.totalorder %s17, 1
    %p124 = por %p122, %p123
    %p126 = scmp.ne.s32.totalorder %s111, %s125
    %p127 = scmp.eq.s32.totalorder %s17, 0
    %p128 = por %p126, %p127
    %s129 = ssub.s32 %s11, %s18
    %p130 = scmp.eq.s32.totalorder %s129, 0
    %s132 = sadd.s32 %s131, 1
    %s133 = scalar_select %p130, %s131, %s132
    %p136 = pneg %p130
    %p137 = scmp.eq.s32.totalorder %s11, 1
    %p138 = por %p136, %p137
    %p139 = scmp.ne.s32.totalorder %s131, %s134
    %p140 = scmp.eq.s32.totalorder %s11, 0
    %p141 = por %p139, %p140
    %p142 = scmp.ne.s32.totalorder %s131, %s134
    %p143 = scmp.eq.s32.totalorder %s16, 1
    %p144 = por %p142, %p143
    %p145 = scmp.ne.s32.totalorder %s134, %s135
    %p146 = scmp.eq.s32.totalorder %s16, 0
    %p147 = por %p145, %p146
    %p148 = scmp.ne.s32.totalorder %s134, %s135
    %p149 = scmp.eq.s32.totalorder %s17, 1
    %p150 = por %p148, %p149
    %p152 = scmp.ne.s32.totalorder %s135, %s151
    %p153 = scmp.eq.s32.totalorder %s17, 0
    %p154 = por %p152, %p153
    %p155 = scmp.le.s32.totalorder 1, %s11
    %p156 = scmp.lt.s32.totalorder %s11, 3
    %p157 = pnand %p155, %p156
    %p158 = pneg %p157
    // Predicated region
    $region9: #{basic_block_forward.1} parent=5 // pred_check
      _
    $region10: #{basic_block_forward.1} parent=5 // pred_check_branch
      %160 = sbr.rel (%p157) target = $region12
    $region11: #{basic_block_forward.1} parent=5 // pred_region
      %s161 = ssub.s32 %s11, 1
      // Predicated region
      $region13: #{basic_block_forward.1} parent=11 // pred_check
        %p162 = pneg %p58
      $region14: #{basic_block_forward.1} parent=11 // pred_check_branch
        %164 = sbr.rel (%p162) target = $region16
      $region15: #{basic_block_forward.1} parent=11 // pred_region
        _
      $region16: #{basic_block_forward.1} parent=11 // pred_fallthru
        _
      // Predicated region
      $region17: #{basic_block_forward.1} parent=11 // pred_check
        %p165 = pneg %p79
      $region18: #{basic_block_forward.1} parent=11 // pred_check_branch
        %167 = sbr.rel (%p165) target = $region20
      $region19: #{basic_block_forward.1} parent=11 // pred_region
        _
      $region20: #{basic_block_forward.1} parent=11 // pred_fallthru
        _
      // Predicated region
      $region21: #{basic_block_forward.1} parent=11 // pred_check
        %p168 = pneg %p100
      $region22: #{basic_block_forward.1} parent=11 // pred_check_branch
        %170 = sbr.rel (%p168) target = $region24
      $region23: #{basic_block_forward.1} parent=11 // pred_region
        _
      $region24: #{basic_block_forward.1} parent=11 // pred_fallthru
        _
      // Predicated region
      $region25: #{basic_block_forward.1} parent=11 // pred_check
        %p171 = pneg %p121
      $region26: #{basic_block_forward.1} parent=11 // pred_check_branch
        %173 = sbr.rel (%p171) target = $region28
      $region27: #{basic_block_forward.1} parent=11 // pred_region
        _
      $region28: #{basic_block_forward.1} parent=11 // pred_fallthru
        _
    $region12: #{basic_block_forward.1} parent=5 // pred_fallthru
      _
    %p174 = scmp.lt.s32.totalorder %s11, 2
    // Predicated region
    $region29: #{basic_block_forward.1} parent=5 // pred_check
      %p175 = pneg %p174
    $region30: #{basic_block_forward.1} parent=5 // pred_check_branch
      %177 = sbr.rel (%p175) target = $region32
    $region31: #{basic_block_forward.1} parent=5 // pred_region
      // Predicated region
      $region33: #{basic_block_forward.1} parent=31 // pred_check
        %p178 = pneg %p31
      $region34: #{basic_block_forward.1} parent=31 // pred_check_branch
        %180 = sbr.rel (%p178) target = $region36
      $region35: #{basic_block_forward.1} parent=31 // pred_region
        %p181 = scmp.lt.s32.totalorder %s11, 1
        %s182 = scalar_select %p181, %s11, 1
        %s183 = smul.addr %s182, 32
        %s184 = smul.addr %s183, 8
        %s185 = scalar_lea.vmem %s0, %s184
      $region36: #{basic_block_forward.1} parent=31 // pred_fallthru
        _
    $region32: #{basic_block_forward.1} parent=5 // pred_fallthru
      _
    %p186 = scmp.le.s32.totalorder 1, %s11
    %p187 = scmp.lt.s32.totalorder %s11, 3
    %p188 = pnand %p186, %p187
    %p189 = pneg %p188
    // Predicated region
    $region37: #{basic_block_forward.1} parent=5 // pred_check
      _
    $region38: #{basic_block_forward.1} parent=5 // pred_check_branch
      %191 = sbr.rel (%p188) target = $region40
    $region39: #{basic_block_forward.1} parent=5 // pred_region
      %s192 = ssub.s32 %s11, 1
      %p193 = scmp.lt.s32.totalorder %s16, 1
      %s194 = scalar_select %p193, %s16, 1
      %s195 = smul.addr %s194, 32
      %s196 = smul.addr %s195, 8
      %s197 = scalar_lea.vmem %s0, %s196
      %p198 = pneg %p37
      %p199 = pneg %p34
      %p200 = pneg %p58
      %p201 = pneg %p55
      %p202 = pneg %p79
      %p203 = pneg %p76
      %p204 = pneg %p100
      %p205 = pneg %p97
      %p206 = pneg %p121
      %p207 = pneg %p118
      %p208 = pneg %p147
      %p209 = pneg %p144
      %p210 = scmp.lt.s32.totalorder %s16, 1
      %s211 = scalar_select %p210, %s16, 1
      %s212 = smul.addr %s211, 32
      %s213 = smul.addr %s212, 8
      %s214 = scalar_lea.vmem %s5, %s213
      %p215 = scmp.lt.s32.totalorder %s16, 1
      %s216 = scalar_select %p215, %s16, 1
      %s217 = smul.addr %s216, 32
      %s218 = smul.addr %s217, 8
      %s219 = scalar_lea.vmem %s0, %s218
      %p220 = scmp.lt.s32.totalorder %s16, 1
      %s221 = scalar_select %p220, %s16, 1
      %s222 = smul.addr %s221, 32
      %s223 = smul.addr %s222, 8
      %s224 = scalar_lea.vmem %s5, %s223
      %vm226 = vcmask 64512
      %227 = vst.msk [vmem:[#allocation2] sm:$0xff] %vm226, 0.0
      %228 = vst.msk [vmem:[#allocation2 + $0x8] sm:$0xff] %vm226, 0.0
      %vm229 = vcmask 58368
      %230 = vst.msk [vmem:[#allocation2 + $0x10] sm:$0x3] %vm229, 0.0
      %231 = vst.msk [vmem:[#allocation2 + $0x18] sm:$0xff] %vm226, 0.0
      %232 = vst.msk [vmem:[#allocation2 + $0x20] sm:$0xff] %vm226, 0.0
      %233 = vst.msk [vmem:[#allocation2 + $0x28] sm:$0x3] %vm229, 0.0
      %234 = vst.msk [vmem:[#allocation2 + $0x30] sm:$0xff] %vm226, 0.0
      %235 = vst.msk [vmem:[#allocation2 + $0x38] sm:$0xff] %vm226, 0.0
      %236 = vst.msk [vmem:[#allocation2 + $0x40] sm:$0x3] %vm229, 0.0
      %237 = vst.msk [vmem:[#allocation2 + $0x48] sm:$0xff] %vm226, 0.0
      %238 = vst.msk [vmem:[#allocation2 + $0x50] sm:$0xff] %vm226, 0.0
      %239 = vst.msk [vmem:[#allocation2 + $0x58] sm:$0x3] %vm229, 0.0
      %240 = vst.msk [vmem:[#allocation2 + $0x60] sm:$0xff] %vm226, 0.0
      %241 = vst.msk [vmem:[#allocation2 + $0x68] sm:$0xff] %vm226, 0.0
      %242 = vst.msk [vmem:[#allocation2 + $0x70] sm:$0x3] %vm229, 0.0
      %243 = vst.msk [vmem:[#allocation2 + $0x78] sm:$0xff] %vm226, 0.0
      %244 = vst.msk [vmem:[#allocation2 + $0x80] sm:$0xff] %vm226, 0.0
      %245 = vst.msk [vmem:[#allocation2 + $0x88] sm:$0x3] %vm229, 0.0
      %246 = vst.msk [vmem:[#allocation2 + $0x90] sm:$0xff] %vm226, 0.0
      %247 = vst.msk [vmem:[#allocation2 + $0x98] sm:$0xff] %vm226, 0.0
      %248 = vst.msk [vmem:[#allocation2 + $0xa0] sm:$0x3] %vm229, 0.0
      %249 = vst.msk [vmem:[#allocation2 + $0xa8] sm:$0xff] %vm226, 0.0
      %250 = vst.msk [vmem:[#allocation2 + $0xb0] sm:$0xff] %vm226, 0.0
      %251 = vst.msk [vmem:[#allocation2 + $0xb8] sm:$0x3] %vm229, 0.0
      %252 = vst.msk [vmem:[#allocation2 + $0xc0] sm:$0xff] %vm226, 0.0
      %253 = vst.msk [vmem:[#allocation2 + $0xc8] sm:$0xff] %vm226, 0.0
      %254 = vst.msk [vmem:[#allocation2 + $0xd0] sm:$0x3] %vm229, 0.0
      %255 = vst.msk [vmem:[#allocation2 + $0xd8] sm:$0xff] %vm226, 0.0
      %256 = vst.msk [vmem:[#allocation2 + $0xe0] sm:$0xff] %vm226, 0.0
      %257 = vst.msk [vmem:[#allocation2 + $0xe8] sm:$0x3] %vm229, 0.0
      %258 = vst.msk [vmem:[#allocation2 + $0xf0] sm:$0xff] %vm226, 0.0
      %259 = vst.msk [vmem:[#allocation2 + $0xf8] sm:$0xff] %vm226, 0.0
      %260 = vst.msk [vmem:[#allocation2 + $0x100] sm:$0x3] %vm229, 0.0
      %261 = vst.msk [vmem:[#allocation2 + $0x108] sm:$0xff] %vm226, 0.0
      %262 = vst.msk [vmem:[#allocation2 + $0x110] sm:$0xff] %vm226, 0.0
      %263 = vst.msk [vmem:[#allocation2 + $0x118] sm:$0x3] %vm229, 0.0
      %264 = vst.msk [vmem:[#allocation2 + $0x120] sm:$0xff] %vm226, 0.0
      %265 = vst.msk [vmem:[#allocation2 + $0x128] sm:$0xff] %vm226, 0.0
      %266 = vst.msk [vmem:[#allocation2 + $0x130] sm:$0x3] %vm229, 0.0
      %267 = vst.msk [vmem:[#allocation2 + $0x138] sm:$0xff] %vm226, 0.0
      %268 = vst.msk [vmem:[#allocation2 + $0x140] sm:$0xff] %vm226, 0.0
      %269 = vst.msk [vmem:[#allocation2 + $0x148] sm:$0x3] %vm229, 0.0
      %270 = vst.msk [vmem:[#allocation2 + $0x150] sm:$0xff] %vm226, 0.0
      %271 = vst.msk [vmem:[#allocation2 + $0x158] sm:$0xff] %vm226, 0.0
      %272 = vst.msk [vmem:[#allocation2 + $0x160] sm:$0x3] %vm229, 0.0
      %273 = vst.msk [vmem:[#allocation2 + $0x168] sm:$0xff] %vm226, 0.0
      %274 = vst.msk [vmem:[#allocation2 + $0x170] sm:$0xff] %vm226, 0.0
      %275 = vst.msk [vmem:[#allocation2 + $0x178] sm:$0x3] %vm229, 0.0
      %276 = vst.msk [vmem:[#allocation2 + $0x180] sm:$0xff] %vm226, 0.0
      %277 = vst.msk [vmem:[#allocation2 + $0x188] sm:$0xff] %vm226, 0.0
      %278 = vst.msk [vmem:[#allocation2 + $0x190] sm:$0x3] %vm229, 0.0
      %279 = vst.msk [vmem:[#allocation2 + $0x198] sm:$0xff] %vm226, 0.0
      %280 = vst.msk [vmem:[#allocation2 + $0x1a0] sm:$0xff] %vm226, 0.0
      %281 = vst.msk [vmem:[#allocation2 + $0x1a8] sm:$0x3] %vm229, 0.0
      %282 = vst.msk [vmem:[#allocation3] sm:$0xff] %vm226, 0.0
      %283 = vst.msk [vmem:[#allocation3 + $0x8] sm:$0xff] %vm226, 0.0
      %284 = vst.msk [vmem:[#allocation3 + $0x10] sm:$0x3] %vm229, 0.0
      %285 = vst.msk [vmem:[#allocation3 + $0x18] sm:$0xff] %vm226, 0.0
      %286 = vst.msk [vmem:[#allocation3 + $0x20] sm:$0xff] %vm226, 0.0
      %287 = vst.msk [vmem:[#allocation3 + $0x28] sm:$0x3] %vm229, 0.0
      %288 = vst.msk [vmem:[#allocation3 + $0x30] sm:$0xff] %vm226, 0.0
      %289 = vst.msk [vmem:[#allocation3 + $0x38] sm:$0xff] %vm226, 0.0
      %290 = vst.msk [vmem:[#allocation3 + $0x40] sm:$0x3] %vm229, 0.0
      %291 = vst.msk [vmem:[#allocation3 + $0x48] sm:$0xff] %vm226, 0.0
      %292 = vst.msk [vmem:[#allocation3 + $0x50] sm:$0xff] %vm226, 0.0
      %293 = vst.msk [vmem:[#allocation3 + $0x58] sm:$0x3] %vm229, 0.0
      %294 = vst.msk [vmem:[#allocation3 + $0x60] sm:$0xff] %vm226, 0.0
      %295 = vst.msk [vmem:[#allocation3 + $0x68] sm:$0xff] %vm226, 0.0
      %296 = vst.msk [vmem:[#allocation3 + $0x70] sm:$0x3] %vm229, 0.0
      %297 = vst.msk [vmem:[#allocation3 + $0x78] sm:$0xff] %vm226, 0.0
      %298 = vst.msk [vmem:[#allocation3 + $0x80] sm:$0xff] %vm226, 0.0
      %299 = vst.msk [vmem:[#allocation3 + $0x88] sm:$0x3] %vm229, 0.0
      %300 = vst.msk [vmem:[#allocation3 + $0x90] sm:$0xff] %vm226, 0.0
      %301 = vst.msk [vmem:[#allocation3 + $0x98] sm:$0xff] %vm226, 0.0
      %302 = vst.msk [vmem:[#allocation3 + $0xa0] sm:$0x3] %vm229, 0.0
      %303 = vst.msk [vmem:[#allocation3 + $0xa8] sm:$0xff] %vm226, 0.0
      %304 = vst.msk [vmem:[#allocation3 + $0xb0] sm:$0xff] %vm226, 0.0
      %305 = vst.msk [vmem:[#allocation3 + $0xb8] sm:$0x3] %vm229, 0.0
      %306 = vst.msk [vmem:[#allocation3 + $0xc0] sm:$0xff] %vm226, 0.0
      %307 = vst.msk [vmem:[#allocation3 + $0xc8] sm:$0xff] %vm226, 0.0
      %308 = vst.msk [vmem:[#allocation3 + $0xd0] sm:$0x3] %vm229, 0.0
      %309 = vst.msk [vmem:[#allocation3 + $0xd8] sm:$0xff] %vm226, 0.0
      %310 = vst.msk [vmem:[#allocation3 + $0xe0] sm:$0xff] %vm226, 0.0
      %311 = vst.msk [vmem:[#allocation3 + $0xe8] sm:$0x3] %vm229, 0.0
      %312 = vst.msk [vmem:[#allocation3 + $0xf0] sm:$0xff] %vm226, 0.0
      %313 = vst.msk [vmem:[#allocation3 + $0xf8] sm:$0xff] %vm226, 0.0
      %314 = vst.msk [vmem:[#allocation3 + $0x100] sm:$0x3] %vm229, 0.0
      %315 = vst.msk [vmem:[#allocation3 + $0x108] sm:$0xff] %vm226, 0.0
      %316 = vst.msk [vmem:[#allocation3 + $0x110] sm:$0xff] %vm226, 0.0
      %317 = vst.msk [vmem:[#allocation3 + $0x118] sm:$0x3] %vm229, 0.0
      %318 = vst.msk [vmem:[#allocation3 + $0x120] sm:$0xff] %vm226, 0.0
      %319 = vst.msk [vmem:[#allocation3 + $0x128] sm:$0xff] %vm226, 0.0
      %320 = vst.msk [vmem:[#allocation3 + $0x130] sm:$0x3] %vm229, 0.0
      %321 = vst.msk [vmem:[#allocation3 + $0x138] sm:$0xff] %vm226, 0.0
      %322 = vst.msk [vmem:[#allocation3 + $0x140] sm:$0xff] %vm226, 0.0
      %323 = vst.msk [vmem:[#allocation3 + $0x148] sm:$0x3] %vm229, 0.0
      %324 = vst.msk [vmem:[#allocation3 + $0x150] sm:$0xff] %vm226, 0.0
      %325 = vst.msk [vmem:[#allocation3 + $0x158] sm:$0xff] %vm226, 0.0
      %326 = vst.msk [vmem:[#allocation3 + $0x160] sm:$0x3] %vm229, 0.0
      %327 = vst.msk [vmem:[#allocation3 + $0x168] sm:$0xff] %vm226, 0.0
      %328 = vst.msk [vmem:[#allocation3 + $0x170] sm:$0xff] %vm226, 0.0
      %329 = vst.msk [vmem:[#allocation3 + $0x178] sm:$0x3] %vm229, 0.0
      %330 = vst.msk [vmem:[#allocation3 + $0x180] sm:$0xff] %vm226, 0.0
      %331 = vst.msk [vmem:[#allocation3 + $0x188] sm:$0xff] %vm226, 0.0
      %332 = vst.msk [vmem:[#allocation3 + $0x190] sm:$0x3] %vm229, 0.0
      %333 = vst.msk [vmem:[#allocation3 + $0x198] sm:$0xff] %vm226, 0.0
      %334 = vst.msk [vmem:[#allocation3 + $0x1a0] sm:$0xff] %vm226, 0.0
      %335 = vst.msk [vmem:[#allocation3 + $0x1a8] sm:$0x3] %vm229, 0.0
      %v336 = vld [vmem:[%s219] sm:$0xff]
      %v337 = vld [vmem:[%s219 + $0x8] sm:$0xff]
      %v338 = vld [vmem:[%s219 + $0x10] sm:$0xff]
      %v339 = vld [vmem:[%s219 + $0x18] sm:$0xff]
      %v340 = vld [vmem:[%s219 + $0x20] sm:$0xff]
      %v341 = vld [vmem:[%s219 + $0x28] sm:$0xff]
      %v342 = vld [vmem:[%s219 + $0x30] sm:$0xff]
      %v343 = vld [vmem:[%s219 + $0x38] sm:$0xff]
      %v344 = vld [vmem:[%s219 + $0x40] sm:$0xff]
      %v345 = vld [vmem:[%s219 + $0x48] sm:$0xff]
      %v346 = vld [vmem:[%s219 + $0x50] sm:$0xff]
      %v347 = vld [vmem:[%s219 + $0x58] sm:$0xff]
      %v348 = vld [vmem:[%s219 + $0x60] sm:$0xff]
      %v349 = vld [vmem:[%s219 + $0x68] sm:$0xff]
      %v350 = vld [vmem:[%s219 + $0x70] sm:$0xff]
      %v351 = vld [vmem:[%s219 + $0x78] sm:$0xff]
      %v352 = vld [vmem:[%s219 + $0x80] sm:$0xff]
      %v353 = vld [vmem:[%s219 + $0x88] sm:$0xff]
      %v354 = vld [vmem:[%s219 + $0x90] sm:$0xff]
      %v355 = vld [vmem:[%s219 + $0x98] sm:$0xff]
      %v356 = vld [vmem:[%s219 + $0xa0] sm:$0xff]
      %v357 = vld [vmem:[%s219 + $0xa8] sm:$0xff]
      %v358 = vld [vmem:[%s219 + $0xb0] sm:$0xff]
      %v359 = vld [vmem:[%s219 + $0xb8] sm:$0xff]
      %v360 = vld [vmem:[%s219 + $0xc0] sm:$0xff]
      %v361 = vld [vmem:[%s219 + $0xc8] sm:$0xff]
      %v362 = vld [vmem:[%s219 + $0xd0] sm:$0xff]
      %v363 = vld [vmem:[%s219 + $0xd8] sm:$0xff]
      %v364 = vld [vmem:[%s219 + $0xe0] sm:$0xff]
      %v365 = vld [vmem:[%s219 + $0xe8] sm:$0xff]
      %v366 = vld [vmem:[%s219 + $0xf0] sm:$0xff]
      %v367 = vld [vmem:[%s219 + $0xf8] sm:$0xff]
      %s368 = scalar_lea.vmem [#allocation2], 24
      %369 = vst.msk [vmem:[%s368 + $0x1] sm:$0xff] %vm226, %v336
      %370 = vst.msk [vmem:[%s368 + $0x9] sm:$0xff] %vm226, %v337
      %371 = vst.msk [vmem:[%s368 + $0x19] sm:$0xff] %vm226, %v338
      %372 = vst.msk [vmem:[%s368 + $0x21] sm:$0xff] %vm226, %v339
      %373 = vst.msk [vmem:[%s368 + $0x31] sm:$0xff] %vm226, %v340
      %374 = vst.msk [vmem:[%s368 + $0x39] sm:$0xff] %vm226, %v341
      %375 = vst.msk [vmem:[%s368 + $0x49] sm:$0xff] %vm226, %v342
      %376 = vst.msk [vmem:[%s368 + $0x51] sm:$0xff] %vm226, %v343
      %377 = vst.msk [vmem:[%s368 + $0x61] sm:$0xff] %vm226, %v344
      %378 = vst.msk [vmem:[%s368 + $0x69] sm:$0xff] %vm226, %v345
      %379 = vst.msk [vmem:[%s368 + $0x79] sm:$0xff] %vm226, %v346
      %380 = vst.msk [vmem:[%s368 + $0x81] sm:$0xff] %vm226, %v347
      %381 = vst.msk [vmem:[%s368 + $0x91] sm:$0xff] %vm226, %v348
      %382 = vst.msk [vmem:[%s368 + $0x99] sm:$0xff] %vm226, %v349
      %383 = vst.msk [vmem:[%s368 + $0xa9] sm:$0xff] %vm226, %v350
      %384 = vst.msk [vmem:[%s368 + $0xb1] sm:$0xff] %vm226, %v351
      %385 = vst.msk [vmem:[%s368 + $0xc1] sm:$0xff] %vm226, %v352
      %386 = vst.msk [vmem:[%s368 + $0xc9] sm:$0xff] %vm226, %v353
      %387 = vst.msk [vmem:[%s368 + $0xd9] sm:$0xff] %vm226, %v354
      %388 = vst.msk [vmem:[%s368 + $0xe1] sm:$0xff] %vm226, %v355
      %389 = vst.msk [vmem:[%s368 + $0xf1] sm:$0xff] %vm226, %v356
      %390 = vst.msk [vmem:[%s368 + $0xf9] sm:$0xff] %vm226, %v357
      %391 = vst.msk [vmem:[%s368 + $0x109] sm:$0xff] %vm226, %v358
      %392 = vst.msk [vmem:[%s368 + $0x111] sm:$0xff] %vm226, %v359
      %393 = vst.msk [vmem:[%s368 + $0x121] sm:$0xff] %vm226, %v360
      %394 = vst.msk [vmem:[%s368 + $0x129] sm:$0xff] %vm226, %v361
      %395 = vst.msk [vmem:[%s368 + $0x139] sm:$0xff] %vm226, %v362
      %396 = vst.msk [vmem:[%s368 + $0x141] sm:$0xff] %vm226, %v363
      %397 = vst.msk [vmem:[%s368 + $0x151] sm:$0xff] %vm226, %v364
      %398 = vst.msk [vmem:[%s368 + $0x159] sm:$0xff] %vm226, %v365
      %399 = vst.msk [vmem:[%s368 + $0x169] sm:$0xff] %vm226, %v366
      %400 = vst.msk [vmem:[%s368 + $0x171] sm:$0xff] %vm226, %v367
      %v401 = vld [vmem:[#allocation2] sm:$0xff]
      %v402 = vld [vmem:[#allocation2 + $0x8] sm:$0xff]
      %v403 = vld [vmem:[#allocation2 + $0x18] sm:$0xff]
      %v404 = vld [vmem:[#allocation2 + $0x20] sm:$0xff]
      %v405 = vld [vmem:[#allocation2 + $0x30] sm:$0xff]
      %v406 = vld [vmem:[#allocation2 + $0x38] sm:$0xff]
      %v407 = vld [vmem:[#allocation2 + $0x48] sm:$0xff]
      %v408 = vld [vmem:[#allocation2 + $0x50] sm:$0xff]
      %v409 = vld [vmem:[#allocation2 + $0x60] sm:$0xff]
      %v410 = vld [vmem:[#allocation2 + $0x68] sm:$0xff]
      %v411 = vld [vmem:[#allocation2 + $0x78] sm:$0xff]
      %v412 = vld [vmem:[#allocation2 + $0x80] sm:$0xff]
      %v413 = vld [vmem:[#allocation2 + $0x90] sm:$0xff]
      %v414 = vld [vmem:[#allocation2 + $0x98] sm:$0xff]
      %v415 = vld [vmem:[#allocation2 + $0xa8] sm:$0xff]
      %v416 = vld [vmem:[#allocation2 + $0xb0] sm:$0xff]
      %v417 = vld [vmem:[#allocation2 + $0xc0] sm:$0xff]
      %v418 = vld [vmem:[#allocation2 + $0xc8] sm:$0xff]
      %v419 = vld [vmem:[#allocation2 + $0xd8] sm:$0xff]
      %v420 = vld [vmem:[#allocation2 + $0xe0] sm:$0xff]
      %v421 = vld [vmem:[#allocation2 + $0xf0] sm:$0xff]
      %v422 = vld [vmem:[#allocation2 + $0xf8] sm:$0xff]
      %v423 = vld [vmem:[#allocation2 + $0x108] sm:$0xff]
      %v424 = vld [vmem:[#allocation2 + $0x110] sm:$0xff]
      %v425 = vld [vmem:[#allocation2 + $0x120] sm:$0xff]
      %v426 = vld [vmem:[#allocation2 + $0x128] sm:$0xff]
      %v427 = vld [vmem:[#allocation2 + $0x138] sm:$0xff]
      %v428 = vld [vmem:[#allocation2 + $0x140] sm:$0xff]
      %v429 = vld [vmem:[#allocation2 + $0x150] sm:$0xff]
      %v430 = vld [vmem:[#allocation2 + $0x158] sm:$0xff]
      %v431 = vld [vmem:[#allocation2 + $0x168] sm:$0xff]
      %v432 = vld [vmem:[#allocation2 + $0x170] sm:$0xff]
      %v433 = vpack.c.bf16 %v402, %v401
      %v434 = vpack.c.bf16 %v404, %v403
      %v435 = vpack.c.bf16 %v406, %v405
      %v436 = vpack.c.bf16 %v408, %v407
      %v437 = vpack.c.bf16 %v410, %v409
      %v438 = vpack.c.bf16 %v412, %v411
      %v439 = vpack.c.bf16 %v414, %v413
      %v440 = vpack.c.bf16 %v416, %v415
      %v441 = vpack.c.bf16 %v418, %v417
      %v442 = vpack.c.bf16 %v420, %v419
      %v443 = vpack.c.bf16 %v422, %v421
      %v444 = vpack.c.bf16 %v424, %v423
      %v445 = vpack.c.bf16 %v426, %v425
      %v446 = vpack.c.bf16 %v428, %v427
      %v447 = vpack.c.bf16 %v430, %v429
      %v448 = vpack.c.bf16 %v432, %v431
      %v449 = vld [vmem:[%s1] sm:$0xf]
      %v450 = vld [vmem:[#allocation2 + $0x1] sm:$0xff]
      %v451 = vld [vmem:[#allocation2 + $0x9] sm:$0xff]
      %v452 = vld [vmem:[#allocation2 + $0x19] sm:$0xff]
      %v453 = vld [vmem:[#allocation2 + $0x21] sm:$0xff]
      %v454 = vld [vmem:[#allocation2 + $0x31] sm:$0xff]
      %v455 = vld [vmem:[#allocation2 + $0x39] sm:$0xff]
      %v456 = vld [vmem:[#allocation2 + $0x49] sm:$0xff]
      %v457 = vld [vmem:[#allocation2 + $0x51] sm:$0xff]
      %v458 = vld [vmem:[#allocation2 + $0x61] sm:$0xff]
      %v459 = vld [vmem:[#allocation2 + $0x69] sm:$0xff]
      %v460 = vld [vmem:[#allocation2 + $0x79] sm:$0xff]
      %v461 = vld [vmem:[#allocation2 + $0x81] sm:$0xff]
      %v462 = vld [vmem:[#allocation2 + $0x91] sm:$0xff]
      %v463 = vld [vmem:[#allocation2 + $0x99] sm:$0xff]
      %v464 = vld [vmem:[#allocation2 + $0xa9] sm:$0xff]
      %v465 = vld [vmem:[#allocation2 + $0xb1] sm:$0xff]
      %v466 = vld [vmem:[#allocation2 + $0xc1] sm:$0xff]
      %v467 = vld [vmem:[#allocation2 + $0xc9] sm:$0xff]
      %v468 = vld [vmem:[#allocation2 + $0xd9] sm:$0xff]
      %v469 = vld [vmem:[#allocation2 + $0xe1] sm:$0xff]
      %v470 = vld [vmem:[#allocation2 + $0xf1] sm:$0xff]
      %v471 = vld [vmem:[#allocation2 + $0xf9] sm:$0xff]
      %v472 = vld [vmem:[#allocation2 + $0x109] sm:$0xff]
      %v473 = vld [vmem:[#allocation2 + $0x111] sm:$0xff]
      %v474 = vld [vmem:[#allocation2 + $0x121] sm:$0xff]
      %v475 = vld [vmem:[#allocation2 + $0x129] sm:$0xff]
      %v476 = vld [vmem:[#allocation2 + $0x139] sm:$0xff]
      %v477 = vld [vmem:[#allocation2 + $0x141] sm:$0xff]
      %v478 = vld [vmem:[#allocation2 + $0x151] sm:$0xff]
      %v479 = vld [vmem:[#allocation2 + $0x159] sm:$0xff]
      %v480 = vld [vmem:[#allocation2 + $0x169] sm:$0xff]
      %v481 = vld [vmem:[#allocation2 + $0x171] sm:$0xff]
      %v482 = vpack.c.bf16 %v451, %v450
      %v483 = vpack.c.bf16 %v453, %v452
      %v484 = vpack.c.bf16 %v455, %v454
      %v485 = vpack.c.bf16 %v457, %v456
      %v486 = vpack.c.bf16 %v459, %v458
      %v487 = vpack.c.bf16 %v461, %v460
      %v488 = vpack.c.bf16 %v463, %v462
      %v489 = vpack.c.bf16 %v465, %v464
      %v490 = vpack.c.bf16 %v467, %v466
      %v491 = vpack.c.bf16 %v469, %v468
      %v492 = vpack.c.bf16 %v471, %v470
      %v493 = vpack.c.bf16 %v473, %v472
      %v494 = vpack.c.bf16 %v475, %v474
      %v495 = vpack.c.bf16 %v477, %v476
      %v496 = vpack.c.bf16 %v479, %v478
      %v497 = vpack.c.bf16 %v481, %v480
      %s498 = scalar_lea.vmem %s1, 4
      %v499 = vld [vmem:[%s498] sm:$0xf]
      %v501 = vsel %vm226, %v482, 0
      %v504 = vsel %vm226, %v483, 0
      %v507 = vsel %vm226, %v484, 0
      %v510 = vsel %vm226, %v485, 0
      %v513 = vsel %vm226, %v486, 0
      %v516 = vsel %vm226, %v487, 0
      %v519 = vsel %vm226, %v488, 0
      %v522 = vsel %vm226, %v489, 0
      %v525 = vsel %vm226, %v490, 0
      %v528 = vsel %vm226, %v491, 0
      %v531 = vsel %vm226, %v492, 0
      %v534 = vsel %vm226, %v493, 0
      %v537 = vsel %vm226, %v494, 0
      %v540 = vsel %vm226, %v495, 0
      %v543 = vsel %vm226, %v496, 0
      %v546 = vsel %vm226, %v497, 0
      %vm548 = vcmask 1043456
      %v550 = vsel %vm548, %v499, 0
      %552 = vmatprep.subr.bf16.mxu0 0
      %553 = vmatpush1.bf16.msra.mxu0 %v550
      %554 = vmatprep.subr.bf16.mxu0 0
      %555 = vmatpush1.bf16.msra.mxu0 0
      %556 = vmatprep.subr.bf16.mxu0 0
      %557 = vmatpush1.bf16.msra.mxu0 0
      %558 = vmatprep.subr.bf16.mxu0 0
      %559 = vmatpush1.bf16.msra.mxu0 0
      %560 = vmatprep.subr.bf16.mxu0 0
      %561 = vmatpush1.bf16.msra.mxu0 0
      %562 = vmatprep.subr.bf16.mxu0 0
      %563 = vmatpush1.bf16.msra.mxu0 0
      %564 = vmatprep.subr.bf16.mxu0 0
      %565 = vmatpush1.bf16.msra.mxu0 0
      %566 = vmatprep.subr.bf16.mxu0 0
      %567 = vmatpush1.bf16.msra.mxu0 0
      %568 = vmatprep.subr.bf16.mxu0 0
      %569 = vmatpush1.bf16.msra.mxu0 0
      %570 = vmatprep.subr.bf16.mxu0 0
      %571 = vmatpush1.bf16.msra.mxu0 0
      %572 = vmatprep.subr.bf16.mxu0 0
      %573 = vmatpush1.bf16.msra.mxu0 0
      %574 = vmatprep.subr.bf16.mxu0 0
      %575 = vmatpush1.bf16.msra.mxu0 0
      %576 = vmatprep.subr.bf16.mxu0 0
      %577 = vmatpush1.bf16.msra.mxu0 0
      %578 = vmatprep.subr.bf16.mxu0 0
      %579 = vmatpush1.bf16.msra.mxu0 0
      %580 = vmatprep.subr.bf16.mxu0 0
      %581 = vmatpush1.bf16.msra.mxu0 0
      %582 = vmatprep.subr.bf16.mxu0 0
      %583 = vmatpush1.bf16.msra.mxu0 0
      %584 = vmatprep.mubr.bf16.mxu0 0
      %585 = vmatmul.mubr.bf16.gmra.mrb[0].mxu0 %v501
      %v586 = vpop.f32.mrb[0].mxu0
      %v587 = vadd.f32 0.0, %v586
      %v588 = vpop.f32.mrb[0].mxu0
      %v589 = vpop.f32.mrb[0].mxu0
      %v590 = vadd.f32 0.0, %v589
      %v591 = vpop.f32.mrb[0].mxu0
      %592 = vmatprep.mubr.bf16.mxu0 0
      %593 = vmatmul.mubr.bf16.gmra.mrb[0].mxu0 %v504
      %v594 = vpop.f32.mrb[0].mxu0
      %v595 = vadd.f32 0.0, %v594
      %v596 = vpop.f32.mrb[0].mxu0
      %v597 = vpop.f32.mrb[0].mxu0
      %v598 = vadd.f32 0.0, %v597
      %v599 = vpop.f32.mrb[0].mxu0
      %600 = vmatprep.mubr.bf16.mxu0 0
      %601 = vmatmul.mubr.bf16.gmra.mrb[0].mxu0 %v507
      %v602 = vpop.f32.mrb[0].mxu0
      %v603 = vadd.f32 0.0, %v602
      %v604 = vpop.f32.mrb[0].mxu0
      %v605 = vpop.f32.mrb[0].mxu0
      %v606 = vadd.f32 0.0, %v605
      %v607 = vpop.f32.mrb[0].mxu0
      %608 = vmatprep.mubr.bf16.mxu0 0
      %609 = vmatmul.mubr.bf16.gmra.mrb[0].mxu0 %v510
      %v610 = vpop.f32.mrb[0].mxu0
      %v611 = vadd.f32 0.0, %v610
      %v612 = vpop.f32.mrb[0].mxu0
      %v613 = vpop.f32.mrb[0].mxu0
      %v614 = vadd.f32 0.0, %v613
      %v615 = vpop.f32.mrb[0].mxu0
      %616 = vmatprep.mubr.bf16.mxu0 0
      %617 = vmatmul.mubr.bf16.gmra.mrb[0].mxu0 %v513
      %v618 = vpop.f32.mrb[0].mxu0
      %v619 = vadd.f32 0.0, %v618
      %v620 = vpop.f32.mrb[0].mxu0
      %v621 = vpop.f32.mrb[0].mxu0
      %v622 = vadd.f32 0.0, %v621
      %v623 = vpop.f32.mrb[0].mxu0
      %624 = vmatprep.mubr.bf16.mxu0 0
      %625 = vmatmul.mubr.bf16.gmra.mrb[0].mxu0 %v516
      %v626 = vpop.f32.mrb[0].mxu0
      %v627 = vadd.f32 0.0, %v626
      %v628 = vpop.f32.mrb[0].mxu0
      %v629 = vpop.f32.mrb[0].mxu0
      %v630 = vadd.f32 0.0, %v629
      %v631 = vpop.f32.mrb[0].mxu0
      %632 = vmatprep.mubr.bf16.mxu0 0
      %633 = vmatmul.mubr.bf16.gmra.mrb[0].mxu0 %v519
      %v634 = vpop.f32.mrb[0].mxu0
      %v635 = vadd.f32 0.0, %v634
      %v636 = vpop.f32.mrb[0].mxu0
      %v637 = vpop.f32.mrb[0].mxu0
      %v638 = vadd.f32 0.0, %v637
      %v639 = vpop.f32.mrb[0].mxu0
      %640 = vmatprep.mubr.bf16.mxu0 0
      %641 = vmatmul.mubr.bf16.gmra.mrb[0].mxu0 %v522
      %v642 = vpop.f32.mrb[0].mxu0
      %v643 = vadd.f32 0.0, %v642
      %v644 = vpop.f32.mrb[0].mxu0
      %v645 = vpop.f32.mrb[0].mxu0
      %v646 = vadd.f32 0.0, %v645
      %v647 = vpop.f32.mrb[0].mxu0
      %648 = vmatprep.mubr.bf16.mxu0 0
      %649 = vmatmul.mubr.bf16.gmra.mrb[0].mxu0 %v525
      %v650 = vpop.f32.mrb[0].mxu0
      %v651 = vadd.f32 0.0, %v650
      %v652 = vpop.f32.mrb[0].mxu0
      %v653 = vpop.f32.mrb[0].mxu0
      %v654 = vadd.f32 0.0, %v653
      %v655 = vpop.f32.mrb[0].mxu0
      %656 = vmatprep.mubr.bf16.mxu0 0
      %657 = vmatmul.mubr.bf16.gmra.mrb[0].mxu0 %v528
      %v658 = vpop.f32.mrb[0].mxu0
      %v659 = vadd.f32 0.0, %v658
      %v660 = vpop.f32.mrb[0].mxu0
      %v661 = vpop.f32.mrb[0].mxu0
      %v662 = vadd.f32 0.0, %v661
      %v663 = vpop.f32.mrb[0].mxu0
      %664 = vmatprep.mubr.bf16.mxu0 0
      %665 = vmatmul.mubr.bf16.gmra.mrb[0].mxu0 %v531
      %v666 = vpop.f32.mrb[0].mxu0
      %v667 = vadd.f32 0.0, %v666
      %v668 = vpop.f32.mrb[0].mxu0
      %v669 = vpop.f32.mrb[0].mxu0
      %v670 = vadd.f32 0.0, %v669
      %v671 = vpop.f32.mrb[0].mxu0
      %672 = vmatprep.mubr.bf16.mxu0 0
      %673 = vmatmul.mubr.bf16.gmra.mrb[0].mxu0 %v534
      %v674 = vpop.f32.mrb[0].mxu0
      %v675 = vadd.f32 0.0, %v674
      %v676 = vpop.f32.mrb[0].mxu0
      %v677 = vpop.f32.mrb[0].mxu0
      %v678 = vadd.f32 0.0, %v677
      %v679 = vpop.f32.mrb[0].mxu0
      %680 = vmatprep.mubr.bf16.mxu0 0
      %681 = vmatmul.mubr.bf16.gmra.mrb[0].mxu0 %v537
      %v682 = vpop.f32.mrb[0].mxu0
      %v683 = vadd.f32 0.0, %v682
      %v684 = vpop.f32.mrb[0].mxu0
      %v685 = vpop.f32.mrb[0].mxu0
      %v686 = vadd.f32 0.0, %v685
      %v687 = vpop.f32.mrb[0].mxu0
      %688 = vmatprep.mubr.bf16.mxu0 0
      %689 = vmatmul.mubr.bf16.gmra.mrb[0].mxu0 %v540
      %v690 = vpop.f32.mrb[0].mxu0
      %v691 = vadd.f32 0.0, %v690
      %v692 = vpop.f32.mrb[0].mxu0
      %v693 = vpop.f32.mrb[0].mxu0
      %v694 = vadd.f32 0.0, %v693
      %v695 = vpop.f32.mrb[0].mxu0
      %696 = vmatprep.mubr.bf16.mxu0 0
      %697 = vmatmul.mubr.bf16.gmra.mrb[0].mxu0 %v543
      %v698 = vpop.f32.mrb[0].mxu0
      %v699 = vadd.f32 0.0, %v698
      %v700 = vpop.f32.mrb[0].mxu0
      %v701 = vpop.f32.mrb[0].mxu0
      %v702 = vadd.f32 0.0, %v701
      %v703 = vpop.f32.mrb[0].mxu0
      %704 = vmatprep.mubr.bf16.mxu0 0
      %705 = vmatmul.mubr.bf16.gmra.mrb[0].mxu0 %v546
      %v706 = vpop.f32.mrb[0].mxu0
      %v707 = vadd.f32 0.0, %v706
      %v708 = vpop.f32.mrb[0].mxu0
      %v709 = vpop.f32.mrb[0].mxu0
      %v710 = vadd.f32 0.0, %v709
      %v711 = vpop.f32.mrb[0].mxu0
      %712 = vdwg.mxu0
      %v714 = vsel %vm226, %v433, 0
      %v717 = vsel %vm226, %v434, 0
      %v720 = vsel %vm226, %v435, 0
      %v723 = vsel %vm226, %v436, 0
      %v726 = vsel %vm226, %v437, 0
      %v729 = vsel %vm226, %v438, 0
      %v732 = vsel %vm226, %v439, 0
      %v735 = vsel %vm226, %v440, 0
      %v738 = vsel %vm226, %v441, 0
      %v741 = vsel %vm226, %v442, 0
      %v744 = vsel %vm226, %v443, 0
      %v747 = vsel %vm226, %v444, 0
      %v750 = vsel %vm226, %v445, 0
      %v753 = vsel %vm226, %v446, 0
      %v756 = vsel %vm226, %v447, 0
      %v759 = vsel %vm226, %v448, 0
      %v762 = vsel %vm548, %v449, 0
      %764 = vmatprep.subr.bf16.mxu0 0
      %765 = vmatpush1.bf16.msra.mxu0 %v762
      %766 = vmatprep.subr.bf16.mxu0 0
      %767 = vmatpush1.bf16.msra.mxu0 0
      %768 = vmatprep.subr.bf16.mxu0 0
      %769 = vmatpush1.bf16.msra.mxu0 0
      %770 = vmatprep.subr.bf16.mxu0 0
      %771 = vmatpush1.bf16.msra.mxu0 0
      %772 = vmatprep.subr.bf16.mxu0 0
      %773 = vmatpush1.bf16.msra.mxu0 0
      %774 = vmatprep.subr.bf16.mxu0 0
      %775 = vmatpush1.bf16.msra.mxu0 0
      %776 = vmatprep.subr.bf16.mxu0 0
      %777 = vmatpush1.bf16.msra.mxu0 0
      %778 = vmatprep.subr.bf16.mxu0 0
      %779 = vmatpush1.bf16.msra.mxu0 0
      %780 = vmatprep.subr.bf16.mxu0 0
      %781 = vmatpush1.bf16.msra.mxu0 0
      %782 = vmatprep.subr.bf16.mxu0 0
      %783 = vmatpush1.bf16.msra.mxu0 0
      %784 = vmatprep.subr.bf16.mxu0 0
      %785 = vmatpush1.bf16.msra.mxu0 0
      %786 = vmatprep.subr.bf16.mxu0 0
      %787 = vmatpush1.bf16.msra.mxu0 0
      %788 = vmatprep.subr.bf16.mxu0 0
      %789 = vmatpush1.bf16.msra.mxu0 0
      %790 = vmatprep.subr.bf16.mxu0 0
      %791 = vmatpush1.bf16.msra.mxu0 0
      %792 = vmatprep.subr.bf16.mxu0 0
      %793 = vmatpush1.bf16.msra.mxu0 0
      %794 = vmatprep.subr.bf16.mxu0 0
      %795 = vmatpush1.bf16.msra.mxu0 0
      %796 = vmatprep.mubr.bf16.mxu0 0
      %797 = vmatmul.mubr.bf16.gmra.mrb[0].mxu0 %v714
      %v798 = vpop.f32.mrb[0].mxu0
      %v799 = vadd.f32 %v587, %v798
      %v800 = vpop.f32.mrb[0].mxu0
      %v801 = vpop.f32.mrb[0].mxu0
      %v802 = vadd.f32 %v590, %v801
      %v803 = vpop.f32.mrb[0].mxu0
      %804 = vmatprep.mubr.bf16.mxu0 0
      %805 = vmatmul.mubr.bf16.gmra.mrb[0].mxu0 %v717
      %v806 = vpop.f32.mrb[0].mxu0
      %v807 = vadd.f32 %v595, %v806
      %v808 = vpop.f32.mrb[0].mxu0
      %v809 = vpop.f32.mrb[0].mxu0
      %v810 = vadd.f32 %v598, %v809
      %v811 = vpop.f32.mrb[0].mxu0
      %812 = vmatprep.mubr.bf16.mxu0 0
      %813 = vmatmul.mubr.bf16.gmra.mrb[0].mxu0 %v720
      %v814 = vpop.f32.mrb[0].mxu0
      %v815 = vadd.f32 %v603, %v814
      %v816 = vpop.f32.mrb[0].mxu0
      %v817 = vpop.f32.mrb[0].mxu0
      %v818 = vadd.f32 %v606, %v817
      %v819 = vpop.f32.mrb[0].mxu0
      %820 = vmatprep.mubr.bf16.mxu0 0
      %821 = vmatmul.mubr.bf16.gmra.mrb[0].mxu0 %v723
      %v822 = vpop.f32.mrb[0].mxu0
      %v823 = vadd.f32 %v611, %v822
      %v824 = vpop.f32.mrb[0].mxu0
      %v825 = vpop.f32.mrb[0].mxu0
      %v826 = vadd.f32 %v614, %v825
      %v827 = vpop.f32.mrb[0].mxu0
      %828 = vmatprep.mubr.bf16.mxu0 0
      %829 = vmatmul.mubr.bf16.gmra.mrb[0].mxu0 %v726
      %v830 = vpop.f32.mrb[0].mxu0
      %v831 = vadd.f32 %v619, %v830
      %v832 = vpop.f32.mrb[0].mxu0
      %v833 = vpop.f32.mrb[0].mxu0
      %v834 = vadd.f32 %v622, %v833
      %v835 = vpop.f32.mrb[0].mxu0
      %836 = vmatprep.mubr.bf16.mxu0 0
      %837 = vmatmul.mubr.bf16.gmra.mrb[0].mxu0 %v729
      %v838 = vpop.f32.mrb[0].mxu0
      %v839 = vadd.f32 %v627, %v838
      %v840 = vpop.f32.mrb[0].mxu0
      %v841 = vpop.f32.mrb[0].mxu0
      %v842 = vadd.f32 %v630, %v841
      %v843 = vpop.f32.mrb[0].mxu0
      %844 = vmatprep.mubr.bf16.mxu0 0
      %845 = vmatmul.mubr.bf16.gmra.mrb[0].mxu0 %v732
      %v846 = vpop.f32.mrb[0].mxu0
      %v847 = vadd.f32 %v635, %v846
      %v848 = vpop.f32.mrb[0].mxu0
      %v849 = vpop.f32.mrb[0].mxu0
      %v850 = vadd.f32 %v638, %v849
      %v851 = vpop.f32.mrb[0].mxu0
      %852 = vmatprep.mubr.bf16.mxu0 0
      %853 = vmatmul.mubr.bf16.gmra.mrb[0].mxu0 %v735
      %v854 = vpop.f32.mrb[0].mxu0
      %v855 = vadd.f32 %v643, %v854
      %v856 = vpop.f32.mrb[0].mxu0
      %v857 = vpop.f32.mrb[0].mxu0
      %v858 = vadd.f32 %v646, %v857
      %v859 = vpop.f32.mrb[0].mxu0
      %860 = vmatprep.mubr.bf16.mxu0 0
      %861 = vmatmul.mubr.bf16.gmra.mrb[0].mxu0 %v738
      %v862 = vpop.f32.mrb[0].mxu0
      %v863 = vadd.f32 %v651, %v862
      %v864 = vpop.f32.mrb[0].mxu0
      %v865 = vpop.f32.mrb[0].mxu0
      %v866 = vadd.f32 %v654, %v865
      %v867 = vpop.f32.mrb[0].mxu0
      %868 = vmatprep.mubr.bf16.mxu0 0
      %869 = vmatmul.mubr.bf16.gmra.mrb[0].mxu0 %v741
      %v870 = vpop.f32.mrb[0].mxu0
      %v871 = vadd.f32 %v659, %v870
      %v872 = vpop.f32.mrb[0].mxu0
      %v873 = vpop.f32.mrb[0].mxu0
      %v874 = vadd.f32 %v662, %v873
      %v875 = vpop.f32.mrb[0].mxu0
      %876 = vmatprep.mubr.bf16.mxu0 0
      %877 = vmatmul.mubr.bf16.gmra.mrb[0].mxu0 %v744
      %v878 = vpop.f32.mrb[0].mxu0
      %v879 = vadd.f32 %v667, %v878
      %v880 = vpop.f32.mrb[0].mxu0
      %v881 = vpop.f32.mrb[0].mxu0
      %v882 = vadd.f32 %v670, %v881
      %v883 = vpop.f32.mrb[0].mxu0
      %884 = vmatprep.mubr.bf16.mxu0 0
      %885 = vmatmul.mubr.bf16.gmra.mrb[0].mxu0 %v747
      %v886 = vpop.f32.mrb[0].mxu0
      %v887 = vadd.f32 %v675, %v886
      %v888 = vpop.f32.mrb[0].mxu0
      %v889 = vpop.f32.mrb[0].mxu0
      %v890 = vadd.f32 %v678, %v889
      %v891 = vpop.f32.mrb[0].mxu0
      %892 = vmatprep.mubr.bf16.mxu0 0
      %893 = vmatmul.mubr.bf16.gmra.mrb[0].mxu0 %v750
      %v894 = vpop.f32.mrb[0].mxu0
      %v895 = vadd.f32 %v683, %v894
      %v896 = vpop.f32.mrb[0].mxu0
      %v897 = vpop.f32.mrb[0].mxu0
      %v898 = vadd.f32 %v686, %v897
      %v899 = vpop.f32.mrb[0].mxu0
      %900 = vmatprep.mubr.bf16.mxu0 0
      %901 = vmatmul.mubr.bf16.gmra.mrb[0].mxu0 %v753
      %v902 = vpop.f32.mrb[0].mxu0
      %v903 = vadd.f32 %v691, %v902
      %v904 = vpop.f32.mrb[0].mxu0
      %v905 = vpop.f32.mrb[0].mxu0
      %v906 = vadd.f32 %v694, %v905
      %v907 = vpop.f32.mrb[0].mxu0
      %908 = vmatprep.mubr.bf16.mxu0 0
      %909 = vmatmul.mubr.bf16.gmra.mrb[0].mxu0 %v756
      %v910 = vpop.f32.mrb[0].mxu0
      %v911 = vadd.f32 %v699, %v910
      %v912 = vpop.f32.mrb[0].mxu0
      %v913 = vpop.f32.mrb[0].mxu0
      %v914 = vadd.f32 %v702, %v913
      %v915 = vpop.f32.mrb[0].mxu0
      %916 = vmatprep.mubr.bf16.mxu0 0
      %917 = vmatmul.mubr.bf16.gmra.mrb[0].mxu0 %v759
      %v918 = vpop.f32.mrb[0].mxu0
      %v919 = vadd.f32 %v707, %v918
      %v920 = vpop.f32.mrb[0].mxu0
      %v921 = vpop.f32.mrb[0].mxu0
      %v922 = vadd.f32 %v710, %v921
      %v923 = vpop.f32.mrb[0].mxu0
      %924 = vdwg.mxu0
      %v925 = vld [vmem:[#allocation2 + $0x2] sm:$0xff]
      %v926 = vld [vmem:[#allocation2 + $0xa] sm:$0xff]
      %v927 = vld [vmem:[#allocation2 + $0x1a] sm:$0xff]
      %v928 = vld [vmem:[#allocation2 + $0x22] sm:$0xff]
      %v929 = vld [vmem:[#allocation2 + $0x32] sm:$0xff]
      %v930 = vld [vmem:[#allocation2 + $0x3a] sm:$0xff]
      %v931 = vld [vmem:[#allocation2 + $0x4a] sm:$0xff]
      %v932 = vld [vmem:[#allocation2 + $0x52] sm:$0xff]
      %v933 = vld [vmem:[#allocation2 + $0x62] sm:$0xff]
      %v934 = vld [vmem:[#allocation2 + $0x6a] sm:$0xff]
      %v935 = vld [vmem:[#allocation2 + $0x7a] sm:$0xff]
      %v936 = vld [vmem:[#allocation2 + $0x82] sm:$0xff]
      %v937 = vld [vmem:[#allocation2 + $0x92] sm:$0xff]
      %v938 = vld [vmem:[#allocation2 + $0x9a] sm:$0xff]
      %v939 = vld [vmem:[#allocation2 + $0xaa] sm:$0xff]
      %v940 = vld [vmem:[#allocation2 + $0xb2] sm:$0xff]
      %v941 = vld [vmem:[#allocation2 + $0xc2] sm:$0xff]
      %v942 = vld [vmem:[#allocation2 + $0xca] sm:$0xff]
      %v943 = vld [vmem:[#allocation2 + $0xda] sm:$0xff]
      %v944 = vld [vmem:[#allocation2 + $0xe2] sm:$0xff]
      %v945 = vld [vmem:[#allocation2 + $0xf2] sm:$0xff]
      %v946 = vld [vmem:[#allocation2 + $0xfa] sm:$0xff]
      %v947 = vld [vmem:[#allocation2 + $0x10a] sm:$0xff]
      %v948 = vld [vmem:[#allocation2 + $0x112] sm:$0xff]
      %v949 = vld [vmem:[#allocation2 + $0x122] sm:$0xff]
      %v950 = vld [vmem:[#allocation2 + $0x12a] sm:$0xff]
      %v951 = vld [vmem:[#allocation2 + $0x13a] sm:$0xff]
      %v952 = vld [vmem:[#allocation2 + $0x142] sm:$0xff]
      %v953 = vld [vmem:[#allocation2 + $0x152] sm:$0xff]
      %v954 = vld [vmem:[#allocation2 + $0x15a] sm:$0xff]
      %v955 = vld [vmem:[#allocation2 + $0x16a] sm:$0xff]
      %v956 = vld [vmem:[#allocation2 + $0x172] sm:$0xff]
      %v957 = vpack.c.bf16 %v926, %v925
      %v958 = vpack.c.bf16 %v928, %v927
      %v959 = vpack.c.bf16 %v930, %v929
      %v960 = vpack.c.bf16 %v932, %v931
      %v961 = vpack.c.bf16 %v934, %v933
      %v962 = vpack.c.bf16 %v936, %v935
      %v963 = vpack.c.bf16 %v938, %v937
      %v964 = vpack.c.bf16 %v940, %v939
      %v965 = vpack.c.bf16 %v942, %v941
      %v966 = vpack.c.bf16 %v944, %v943
      %v967 = vpack.c.bf16 %v946, %v945
      %v968 = vpack.c.bf16 %v948, %v947
      %v969 = vpack.c.bf16 %v950, %v949
      %v970 = vpack.c.bf16 %v952, %v951
      %v971 = vpack.c.bf16 %v954, %v953
      %v972 = vpack.c.bf16 %v956, %v955
      %s973 = scalar_lea.vmem %s1, 8
      %v974 = vld [vmem:[%s973] sm:$0xf]
      %v976 = vsel %vm226, %v957, 0
      %v979 = vsel %vm226, %v958, 0
      %v982 = vsel %vm226, %v959, 0
      %v985 = vsel %vm226, %v960, 0
      %v988 = vsel %vm226, %v961, 0
      %v991 = vsel %vm226, %v962, 0
      %v994 = vsel %vm226, %v963, 0
      %v997 = vsel %vm226, %v964, 0
      %v1000 = vsel %vm226, %v965, 0
      %v1003 = vsel %vm226, %v966, 0
      %v1006 = vsel %vm226, %v967, 0
      %v1009 = vsel %vm226, %v968, 0
      %v1012 = vsel %vm226, %v969, 0
      %v1015 = vsel %vm226, %v970, 0
      %v1018 = vsel %vm226, %v971, 0
      %v1021 = vsel %vm226, %v972, 0
      %v1024 = vsel %vm548, %v974, 0
      %1026 = vmatprep.subr.bf16.mxu0 0
      %1027 = vmatpush1.bf16.msra.mxu0 %v1024
      %1028 = vmatprep.subr.bf16.mxu0 0
      %1029 = vmatpush1.bf16.msra.mxu0 0
      %1030 = vmatprep.subr.bf16.mxu0 0
      %1031 = vmatpush1.bf16.msra.mxu0 0
      %1032 = vmatprep.subr.bf16.mxu0 0
      %1033 = vmatpush1.bf16.msra.mxu0 0
      %1034 = vmatprep.subr.bf16.mxu0 0
      %1035 = vmatpush1.bf16.msra.mxu0 0
      %1036 = vmatprep.subr.bf16.mxu0 0
      %1037 = vmatpush1.bf16.msra.mxu0 0
      %1038 = vmatprep.subr.bf16.mxu0 0
      %1039 = vmatpush1.bf16.msra.mxu0 0
      %1040 = vmatprep.subr.bf16.mxu0 0
      %1041 = vmatpush1.bf16.msra.mxu0 0
      %1042 = vmatprep.subr.bf16.mxu0 0
      %1043 = vmatpush1.bf16.msra.mxu0 0
      %1044 = vmatprep.subr.bf16.mxu0 0
      %1045 = vmatpush1.bf16.msra.mxu0 0
      %1046 = vmatprep.subr.bf16.mxu0 0
      %1047 = vmatpush1.bf16.msra.mxu0 0
      %1048 = vmatprep.subr.bf16.mxu0 0
      %1049 = vmatpush1.bf16.msra.mxu0 0
      %1050 = vmatprep.subr.bf16.mxu0 0
      %1051 = vmatpush1.bf16.msra.mxu0 0
      %1052 = vmatprep.subr.bf16.mxu0 0
      %1053 = vmatpush1.bf16.msra.mxu0 0
      %1054 = vmatprep.subr.bf16.mxu0 0
      %1055 = vmatpush1.bf16.msra.mxu0 0
      %1056 = vmatprep.subr.bf16.mxu0 0
      %1057 = vmatpush1.bf16.msra.mxu0 0
      %1058 = vmatprep.mubr.bf16.mxu0 0
      %1059 = vmatmul.mubr.bf16.gmra.mrb[0].mxu0 %v976
      %v1060 = vpop.f32.mrb[0].mxu0
      %v1061 = vadd.f32 0.0, %v1060
      %v1062 = vpop.f32.mrb[0].mxu0
      %v1063 = vpop.f32.mrb[0].mxu0
      %v1064 = vadd.f32 0.0, %v1063
      %v1065 = vpop.f32.mrb[0].mxu0
      %1066 = vmatprep.mubr.bf16.mxu0 0
      %1067 = vmatmul.mubr.bf16.gmra.mrb[0].mxu0 %v979
      %v1068 = vpop.f32.mrb[0].mxu0
      %v1069 = vadd.f32 0.0, %v1068
      %v1070 = vpop.f32.mrb[0].mxu0
      %v1071 = vpop.f32.mrb[0].mxu0
      %v1072 = vadd.f32 0.0, %v1071
      %v1073 = vpop.f32.mrb[0].mxu0
      %1074 = vmatprep.mubr.bf16.mxu0 0
      %1075 = vmatmul.mubr.bf16.gmra.mrb[0].mxu0 %v982
      %v1076 = vpop.f32.mrb[0].mxu0
      %v1077 = vadd.f32 0.0, %v1076
      %v1078 = vpop.f32.mrb[0].mxu0
      %v1079 = vpop.f32.mrb[0].mxu0
      %v1080 = vadd.f32 0.0, %v1079
      %v1081 = vpop.f32.mrb[0].mxu0
      %1082 = vmatprep.mubr.bf16.mxu0 0
      %1083 = vmatmul.mubr.bf16.gmra.mrb[0].mxu0 %v985
      %v1084 = vpop.f32.mrb[0].mxu0
      %v1085 = vadd.f32 0.0, %v1084
      %v1086 = vpop.f32.mrb[0].mxu0
      %v1087 = vpop.f32.mrb[0].mxu0
      %v1088 = vadd.f32 0.0, %v1087
      %v1089 = vpop.f32.mrb[0].mxu0
      %1090 = vmatprep.mubr.bf16.mxu0 0
      %1091 = vmatmul.mubr.bf16.gmra.mrb[0].mxu0 %v988
      %v1092 = vpop.f32.mrb[0].mxu0
      %v1093 = vadd.f32 0.0, %v1092
      %v1094 = vpop.f32.mrb[0].mxu0
      %v1095 = vpop.f32.mrb[0].mxu0
      %v1096 = vadd.f32 0.0, %v1095
      %v1097 = vpop.f32.mrb[0].mxu0
      %1098 = vmatprep.mubr.bf16.mxu0 0
      %1099 = vmatmul.mubr.bf16.gmra.mrb[0].mxu0 %v991
      %v1100 = vpop.f32.mrb[0].mxu0
      %v1101 = vadd.f32 0.0, %v1100
      %v1102 = vpop.f32.mrb[0].mxu0
      %v1103 = vpop.f32.mrb[0].mxu0
      %v1104 = vadd.f32 0.0, %v1103
      %v1105 = vpop.f32.mrb[0].mxu0
      %1106 = vmatprep.mubr.bf16.mxu0 0
      %1107 = vmatmul.mubr.bf16.gmra.mrb[0].mxu0 %v994
      %v1108 = vpop.f32.mrb[0].mxu0
      %v1109 = vadd.f32 0.0, %v1108
      %v1110 = vpop.f32.mrb[0].mxu0
      %v1111 = vpop.f32.mrb[0].mxu0
      %v1112 = vadd.f32 0.0, %v1111
      %v1113 = vpop.f32.mrb[0].mxu0
      %1114 = vmatprep.mubr.bf16.mxu0 0
      %1115 = vmatmul.mubr.bf16.gmra.mrb[0].mxu0 %v997
      %v1116 = vpop.f32.mrb[0].mxu0
      %v1117 = vadd.f32 0.0, %v1116
      %v1118 = vpop.f32.mrb[0].mxu0
      %v1119 = vpop.f32.mrb[0].mxu0
      %v1120 = vadd.f32 0.0, %v1119
      %v1121 = vpop.f32.mrb[0].mxu0
      %1122 = vmatprep.mubr.bf16.mxu0 0
      %1123 = vmatmul.mubr.bf16.gmra.mrb[0].mxu0 %v1000
      %v1124 = vpop.f32.mrb[0].mxu0
      %v1125 = vadd.f32 0.0, %v1124
      %v1126 = vpop.f32.mrb[0].mxu0
      %v1127 = vpop.f32.mrb[0].mxu0
      %v1128 = vadd.f32 0.0, %v1127
      %v1129 = vpop.f32.mrb[0].mxu0
      %1130 = vmatprep.mubr.bf16.mxu0 0
      %1131 = vmatmul.mubr.bf16.gmra.mrb[0].mxu0 %v1003
      %v1132 = vpop.f32.mrb[0].mxu0
      %v1133 = vadd.f32 0.0, %v1132
      %v1134 = vpop.f32.mrb[0].mxu0
      %v1135 = vpop.f32.mrb[0].mxu0
      %v1136 = vadd.f32 0.0, %v1135
      %v1137 = vpop.f32.mrb[0].mxu0
      %1138 = vmatprep.mubr.bf16.mxu0 0
      %1139 = vmatmul.mubr.bf16.gmra.mrb[0].mxu0 %v1006
      %v1140 = vpop.f32.mrb[0].mxu0
      %v1141 = vadd.f32 0.0, %v1140
      %v1142 = vpop.f32.mrb[0].mxu0
      %v1143 = vpop.f32.mrb[0].mxu0
      %v1144 = vadd.f32 0.0, %v1143
      %v1145 = vpop.f32.mrb[0].mxu0
      %1146 = vmatprep.mubr.bf16.mxu0 0
      %1147 = vmatmul.mubr.bf16.gmra.mrb[0].mxu0 %v1009
      %v1148 = vpop.f32.mrb[0].mxu0
      %v1149 = vadd.f32 0.0, %v1148
      %v1150 = vpop.f32.mrb[0].mxu0
      %v1151 = vpop.f32.mrb[0].mxu0
      %v1152 = vadd.f32 0.0, %v1151
      %v1153 = vpop.f32.mrb[0].mxu0
      %1154 = vmatprep.mubr.bf16.mxu0 0
      %1155 = vmatmul.mubr.bf16.gmra.mrb[0].mxu0 %v1012
      %v1156 = vpop.f32.mrb[0].mxu0
      %v1157 = vadd.f32 0.0, %v1156
      %v1158 = vpop.f32.mrb[0].mxu0
      %v1159 = vpop.f32.mrb[0].mxu0
      %v1160 = vadd.f32 0.0, %v1159
      %v1161 = vpop.f32.mrb[0].mxu0
      %1162 = vmatprep.mubr.bf16.mxu0 0
      %1163 = vmatmul.mubr.bf16.gmra.mrb[0].mxu0 %v1015
      %v1164 = vpop.f32.mrb[0].mxu0
      %v1165 = vadd.f32 0.0, %v1164
      %v1166 = vpop.f32.mrb[0].mxu0
      %v1167 = vpop.f32.mrb[0].mxu0
      %v1168 = vadd.f32 0.0, %v1167
      %v1169 = vpop.f32.mrb[0].mxu0
      %1170 = vmatprep.mubr.bf16.mxu0 0
      %1171 = vmatmul.mubr.bf16.gmra.mrb[0].mxu0 %v1018
      %v1172 = vpop.f32.mrb[0].mxu0
      %v1173 = vadd.f32 0.0, %v1172
      %v1174 = vpop.f32.mrb[0].mxu0
      %v1175 = vpop.f32.mrb[0].mxu0
      %v1176 = vadd.f32 0.0, %v1175
      %v1177 = vpop.f32.mrb[0].mxu0
      %1178 = vmatprep.mubr.bf16.mxu0 0
      %1179 = vmatmul.mubr.bf16.gmra.mrb[0].mxu0 %v1021
      %v1180 = vpop.f32.mrb[0].mxu0
      %v1181 = vadd.f32 0.0, %v1180
      %v1182 = vpop.f32.mrb[0].mxu0
      %v1183 = vpop.f32.mrb[0].mxu0
      %v1184 = vadd.f32 0.0, %v1183
      %v1185 = vpop.f32.mrb[0].mxu0
      %1186 = vdwg.mxu0
      %v1187 = vadd.f32 %v799, %v1061
      %v1188 = vadd.f32 %v802, %v1064
      %v1189 = vadd.f32 %v807, %v1069
      %v1190 = vadd.f32 %v810, %v1072
      %v1191 = vadd.f32 %v815, %v1077
      %v1192 = vadd.f32 %v818, %v1080
      %v1193 = vadd.f32 %v823, %v1085
      %v1194 = vadd.f32 %v826, %v1088
      %v1195 = vadd.f32 %v831, %v1093
      %v1196 = vadd.f32 %v834, %v1096
      %v1197 = vadd.f32 %v839, %v1101
      %v1198 = vadd.f32 %v842, %v1104
      %v1199 = vadd.f32 %v847, %v1109
      %v1200 = vadd.f32 %v850, %v1112
      %v1201 = vadd.f32 %v855, %v1117
      %v1202 = vadd.f32 %v858, %v1120
      %v1203 = vadd.f32 %v863, %v1125
      %v1204 = vadd.f32 %v866, %v1128
      %v1205 = vadd.f32 %v871, %v1133
      %v1206 = vadd.f32 %v874, %v1136
      %v1207 = vadd.f32 %v879, %v1141
      %v1208 = vadd.f32 %v882, %v1144
      %v1209 = vadd.f32 %v887, %v1149
      %v1210 = vadd.f32 %v890, %v1152
      %v1211 = vadd.f32 %v895, %v1157
      %v1212 = vadd.f32 %v898, %v1160
      %v1213 = vadd.f32 %v903, %v1165
      %v1214 = vadd.f32 %v906, %v1168
      %v1215 = vadd.f32 %v911, %v1173
      %v1216 = vadd.f32 %v914, %v1176
      %v1217 = vadd.f32 %v919, %v1181
      %v1218 = vadd.f32 %v922, %v1184
      %v1219 = vld [vmem:[%s368] sm:$0xff]
      %v1220 = vld [vmem:[%s368 + $0x8] sm:$0xff]
      %v1221 = vld [vmem:[%s368 + $0x18] sm:$0xff]
      %v1222 = vld [vmem:[%s368 + $0x20] sm:$0xff]
      %v1223 = vld [vmem:[%s368 + $0x30] sm:$0xff]
      %v1224 = vld [vmem:[%s368 + $0x38] sm:$0xff]
      %v1225 = vld [vmem:[%s368 + $0x48] sm:$0xff]
      %v1226 = vld [vmem:[%s368 + $0x50] sm:$0xff]
      %v1227 = vld [vmem:[%s368 + $0x60] sm:$0xff]
      %v1228 = vld [vmem:[%s368 + $0x68] sm:$0xff]
      %v1229 = vld [vmem:[%s368 + $0x78] sm:$0xff]
      %v1230 = vld [vmem:[%s368 + $0x80] sm:$0xff]
      %v1231 = vld [vmem:[%s368 + $0x90] sm:$0xff]
      %v1232 = vld [vmem:[%s368 + $0x98] sm:$0xff]
      %v1233 = vld [vmem:[%s368 + $0xa8] sm:$0xff]
      %v1234 = vld [vmem:[%s368 + $0xb0] sm:$0xff]
      %v1235 = vld [vmem:[%s368 + $0xc0] sm:$0xff]
      %v1236 = vld [vmem:[%s368 + $0xc8] sm:$0xff]
      %v1237 = vld [vmem:[%s368 + $0xd8] sm:$0xff]
      %v1238 = vld [vmem:[%s368 + $0xe0] sm:$0xff]
      %v1239 = vld [vmem:[%s368 + $0xf0] sm:$0xff]
      %v1240 = vld [vmem:[%s368 + $0xf8] sm:$0xff]
      %v1241 = vld [vmem:[%s368 + $0x108] sm:$0xff]
      %v1242 = vld [vmem:[%s368 + $0x110] sm:$0xff]
      %v1243 = vld [vmem:[%s368 + $0x120] sm:$0xff]
      %v1244 = vld [vmem:[%s368 + $0x128] sm:$0xff]
      %v1245 = vld [vmem:[%s368 + $0x138] sm:$0xff]
      %v1246 = vld [vmem:[%s368 + $0x140] sm:$0xff]
      %v1247 = vld [vmem:[%s368 + $0x150] sm:$0xff]
      %v1248 = vld [vmem:[%s368 + $0x158] sm:$0xff]
      %v1249 = vld [vmem:[%s368 + $0x168] sm:$0xff]
      %v1250 = vld [vmem:[%s368 + $0x170] sm:$0xff]
      %v1251 = vpack.c.bf16 %v1220, %v1219
      %v1252 = vpack.c.bf16 %v1222, %v1221
      %v1253 = vpack.c.bf16 %v1224, %v1223
      %v1254 = vpack.c.bf16 %v1226, %v1225
      %v1255 = vpack.c.bf16 %v1228, %v1227
      %v1256 = vpack.c.bf16 %v1230, %v1229
      %v1257 = vpack.c.bf16 %v1232, %v1231
      %v1258 = vpack.c.bf16 %v1234, %v1233
      %v1259 = vpack.c.bf16 %v1236, %v1235
      %v1260 = vpack.c.bf16 %v1238, %v1237
      %v1261 = vpack.c.bf16 %v1240, %v1239
      %v1262 = vpack.c.bf16 %v1242, %v1241
      %v1263 = vpack.c.bf16 %v1244, %v1243
      %v1264 = vpack.c.bf16 %v1246, %v1245
      %v1265 = vpack.c.bf16 %v1248, %v1247
      %v1266 = vpack.c.bf16 %v1250, %v1249
      %s1267 = scalar_lea.vmem %s1, 12
      %v1268 = vld [vmem:[%s1267] sm:$0xf]
      %v1270 = vsel %vm226, %v1251, 0
      %v1273 = vsel %vm226, %v1252, 0
      %v1276 = vsel %vm226, %v1253, 0
      %v1279 = vsel %vm226, %v1254, 0
      %v1282 = vsel %vm226, %v1255, 0
      %v1285 = vsel %vm226, %v1256, 0
      %v1288 = vsel %vm226, %v1257, 0
      %v1291 = vsel %vm226, %v1258, 0
      %v1294 = vsel %vm226, %v1259, 0
      %v1297 = vsel %vm226, %v1260, 0
      %v1300 = vsel %vm226, %v1261, 0
      %v1303 = vsel %vm226, %v1262, 0
      %v1306 = vsel %vm226, %v1263, 0
      %v1309 = vsel %vm226, %v1264, 0
      %v1312 = vsel %vm226, %v1265, 0
      %v1315 = vsel %vm226, %v1266, 0
      %v1318 = vsel %vm548, %v1268, 0
      %1320 = vmatprep.subr.bf16.mxu0 0
      %1321 = vmatpush1.bf16.msra.mxu0 %v1318
      %1322 = vmatprep.subr.bf16.mxu0 0
      %1323 = vmatpush1.bf16.msra.mxu0 0
      %1324 = vmatprep.subr.bf16.mxu0 0
      %1325 = vmatpush1.bf16.msra.mxu0 0
      %1326 = vmatprep.subr.bf16.mxu0 0
      %1327 = vmatpush1.bf16.msra.mxu0 0
      %1328 = vmatprep.subr.bf16.mxu0 0
      %1329 = vmatpush1.bf16.msra.mxu0 0
      %1330 = vmatprep.subr.bf16.mxu0 0
      %1331 = vmatpush1.bf16.msra.mxu0 0
      %1332 = vmatprep.subr.bf16.mxu0 0
      %1333 = vmatpush1.bf16.msra.mxu0 0
      %1334 = vmatprep.subr.bf16.mxu0 0
      %1335 = vmatpush1.bf16.msra.mxu0 0
      %1336 = vmatprep.subr.bf16.mxu0 0
      %1337 = vmatpush1.bf16.msra.mxu0 0
      %1338 = vmatprep.subr.bf16.mxu0 0
      %1339 = vmatpush1.bf16.msra.mxu0 0
      %1340 = vmatprep.subr.bf16.mxu0 0
      %1341 = vmatpush1.bf16.msra.mxu0 0
      %1342 = vmatprep.subr.bf16.mxu0 0
      %1343 = vmatpush1.bf16.msra.mxu0 0
      %1344 = vmatprep.subr.bf16.mxu0 0
      %1345 = vmatpush1.bf16.msra.mxu0 0
      %1346 = vmatprep.subr.bf16.mxu0 0
      %1347 = vmatpush1.bf16.msra.mxu0 0
      %1348 = vmatprep.subr.bf16.mxu0 0
      %1349 = vmatpush1.bf16.msra.mxu0 0
      %1350 = vmatprep.subr.bf16.mxu0 0
      %1351 = vmatpush1.bf16.msra.mxu0 0
      %1352 = vmatprep.mubr.bf16.mxu0 0
      %1353 = vmatmul.mubr.bf16.gmra.mrb[0].mxu0 %v1270
      %v1354 = vpop.f32.mrb[0].mxu0
      %v1355 = vadd.f32 0.0, %v1354
      %v1356 = vpop.f32.mrb[0].mxu0
      %v1357 = vpop.f32.mrb[0].mxu0
      %v1358 = vadd.f32 0.0, %v1357
      %v1359 = vpop.f32.mrb[0].mxu0
      %1360 = vmatprep.mubr.bf16.mxu0 0
      %1361 = vmatmul.mubr.bf16.gmra.mrb[0].mxu0 %v1273
      %v1362 = vpop.f32.mrb[0].mxu0
      %v1363 = vadd.f32 0.0, %v1362
      %v1364 = vpop.f32.mrb[0].mxu0
      %v1365 = vpop.f32.mrb[0].mxu0
      %v1366 = vadd.f32 0.0, %v1365
      %v1367 = vpop.f32.mrb[0].mxu0
      %1368 = vmatprep.mubr.bf16.mxu0 0
      %1369 = vmatmul.mubr.bf16.gmra.mrb[0].mxu0 %v1276
      %v1370 = vpop.f32.mrb[0].mxu0
      %v1371 = vadd.f32 0.0, %v1370
      %v1372 = vpop.f32.mrb[0].mxu0
      %v1373 = vpop.f32.mrb[0].mxu0
      %v1374 = vadd.f32 0.0, %v1373
      %v1375 = vpop.f32.mrb[0].mxu0
      %1376 = vmatprep.mubr.bf16.mxu0 0
      %1377 = vmatmul.mubr.bf16.gmra.mrb[0].mxu0 %v1279
      %v1378 = vpop.f32.mrb[0].mxu0
      %v1379 = vadd.f32 0.0, %v1378
      %v1380 = vpop.f32.mrb[0].mxu0
      %v1381 = vpop.f32.mrb[0].mxu0
      %v1382 = vadd.f32 0.0, %v1381
      %v1383 = vpop.f32.mrb[0].mxu0
      %1384 = vmatprep.mubr.bf16.mxu0 0
      %1385 = vmatmul.mubr.bf16.gmra.mrb[0].mxu0 %v1282
      %v1386 = vpop.f32.mrb[0].mxu0
      %v1387 = vadd.f32 0.0, %v1386
      %v1388 = vpop.f32.mrb[0].mxu0
      %v1389 = vpop.f32.mrb[0].mxu0
      %v1390 = vadd.f32 0.0, %v1389
      %v1391 = vpop.f32.mrb[0].mxu0
      %1392 = vmatprep.mubr.bf16.mxu0 0
      %1393 = vmatmul.mubr.bf16.gmra.mrb[0].mxu0 %v1285
      %v1394 = vpop.f32.mrb[0].mxu0
      %v1395 = vadd.f32 0.0, %v1394
      %v1396 = vpop.f32.mrb[0].mxu0
      %v1397 = vpop.f32.mrb[0].mxu0
      %v1398 = vadd.f32 0.0, %v1397
      %v1399 = vpop.f32.mrb[0].mxu0
      %1400 = vmatprep.mubr.bf16.mxu0 0
      %1401 = vmatmul.mubr.bf16.gmra.mrb[0].mxu0 %v1288
      %v1402 = vpop.f32.mrb[0].mxu0
      %v1403 = vadd.f32 0.0, %v1402
      %v1404 = vpop.f32.mrb[0].mxu0
      %v1405 = vpop.f32.mrb[0].mxu0
      %v1406 = vadd.f32 0.0, %v1405
      %v1407 = vpop.f32.mrb[0].mxu0
      %1408 = vmatprep.mubr.bf16.mxu0 0
      %1409 = vmatmul.mubr.bf16.gmra.mrb[0].mxu0 %v1291
      %v1410 = vpop.f32.mrb[0].mxu0
      %v1411 = vadd.f32 0.0, %v1410
      %v1412 = vpop.f32.mrb[0].mxu0
      %v1413 = vpop.f32.mrb[0].mxu0
      %v1414 = vadd.f32 0.0, %v1413
      %v1415 = vpop.f32.mrb[0].mxu0
      %1416 = vmatprep.mubr.bf16.mxu0 0
      %1417 = vmatmul.mubr.bf16.gmra.mrb[0].mxu0 %v1294
      %v1418 = vpop.f32.mrb[0].mxu0
      %v1419 = vadd.f32 0.0, %v1418
      %v1420 = vpop.f32.mrb[0].mxu0
      %v1421 = vpop.f32.mrb[0].mxu0
      %v1422 = vadd.f32 0.0, %v1421
      %v1423 = vpop.f32.mrb[0].mxu0
      %1424 = vmatprep.mubr.bf16.mxu0 0
      %1425 = vmatmul.mubr.bf16.gmra.mrb[0].mxu0 %v1297
      %v1426 = vpop.f32.mrb[0].mxu0
      %v1427 = vadd.f32 0.0, %v1426
      %v1428 = vpop.f32.mrb[0].mxu0
      %v1429 = vpop.f32.mrb[0].mxu0
      %v1430 = vadd.f32 0.0, %v1429
      %v1431 = vpop.f32.mrb[0].mxu0
      %1432 = vmatprep.mubr.bf16.mxu0 0
      %1433 = vmatmul.mubr.bf16.gmra.mrb[0].mxu0 %v1300
      %v1434 = vpop.f32.mrb[0].mxu0
      %v1435 = vadd.f32 0.0, %v1434
      %v1436 = vpop.f32.mrb[0].mxu0
      %v1437 = vpop.f32.mrb[0].mxu0
      %v1438 = vadd.f32 0.0, %v1437
      %v1439 = vpop.f32.mrb[0].mxu0
      %1440 = vmatprep.mubr.bf16.mxu0 0
      %1441 = vmatmul.mubr.bf16.gmra.mrb[0].mxu0 %v1303
      %v1442 = vpop.f32.mrb[0].mxu0
      %v1443 = vadd.f32 0.0, %v1442
      %v1444 = vpop.f32.mrb[0].mxu0
      %v1445 = vpop.f32.mrb[0].mxu0
      %v1446 = vadd.f32 0.0, %v1445
      %v1447 = vpop.f32.mrb[0].mxu0
      %1448 = vmatprep.mubr.bf16.mxu0 0
      %1449 = vmatmul.mubr.bf16.gmra.mrb[0].mxu0 %v1306
      %v1450 = vpop.f32.mrb[0].mxu0
      %v1451 = vadd.f32 0.0, %v1450
      %v1452 = vpop.f32.mrb[0].mxu0
      %v1453 = vpop.f32.mrb[0].mxu0
      %v1454 = vadd.f32 0.0, %v1453
      %v1455 = vpop.f32.mrb[0].mxu0
      %1456 = vmatprep.mubr.bf16.mxu0 0
      %1457 = vmatmul.mubr.bf16.gmra.mrb[0].mxu0 %v1309
      %v1458 = vpop.f32.mrb[0].mxu0
      %v1459 = vadd.f32 0.0, %v1458
      %v1460 = vpop.f32.mrb[0].mxu0
      %v1461 = vpop.f32.mrb[0].mxu0
      %v1462 = vadd.f32 0.0, %v1461
      %v1463 = vpop.f32.mrb[0].mxu0
      %1464 = vmatprep.mubr.bf16.mxu0 0
      %1465 = vmatmul.mubr.bf16.gmra.mrb[0].mxu0 %v1312
      %v1466 = vpop.f32.mrb[0].mxu0
      %v1467 = vadd.f32 0.0, %v1466
      %v1468 = vpop.f32.mrb[0].mxu0
      %v1469 = vpop.f32.mrb[0].mxu0
      %v1470 = vadd.f32 0.0, %v1469
      %v1471 = vpop.f32.mrb[0].mxu0
      %1472 = vmatprep.mubr.bf16.mxu0 0
      %1473 = vmatmul.mubr.bf16.gmra.mrb[0].mxu0 %v1315
      %v1474 = vpop.f32.mrb[0].mxu0
      %v1475 = vadd.f32 0.0, %v1474
      %v1476 = vpop.f32.mrb[0].mxu0
      %v1477 = vpop.f32.mrb[0].mxu0
      %v1478 = vadd.f32 0.0, %v1477
      %v1479 = vpop.f32.mrb[0].mxu0
      %1480 = vdwg.mxu0
      %v1481 = vadd.f32 %v1187, %v1355
      %v1482 = vadd.f32 %v1188, %v1358
      %v1483 = vadd.f32 %v1189, %v1363
      %v1484 = vadd.f32 %v1190, %v1366
      %v1485 = vadd.f32 %v1191, %v1371
      %v1486 = vadd.f32 %v1192, %v1374
      %v1487 = vadd.f32 %v1193, %v1379
      %v1488 = vadd.f32 %v1194, %v1382
      %v1489 = vadd.f32 %v1195, %v1387
      %v1490 = vadd.f32 %v1196, %v1390
      %v1491 = vadd.f32 %v1197, %v1395
      %v1492 = vadd.f32 %v1198, %v1398
      %v1493 = vadd.f32 %v1199, %v1403
      %v1494 = vadd.f32 %v1200, %v1406
      %v1495 = vadd.f32 %v1201, %v1411
      %v1496 = vadd.f32 %v1202, %v1414
      %v1497 = vadd.f32 %v1203, %v1419
      %v1498 = vadd.f32 %v1204, %v1422
      %v1499 = vadd.f32 %v1205, %v1427
      %v1500 = vadd.f32 %v1206, %v1430
      %v1501 = vadd.f32 %v1207, %v1435
      %v1502 = vadd.f32 %v1208, %v1438
      %v1503 = vadd.f32 %v1209, %v1443
      %v1504 = vadd.f32 %v1210, %v1446
      %v1505 = vadd.f32 %v1211, %v1451
      %v1506 = vadd.f32 %v1212, %v1454
      %v1507 = vadd.f32 %v1213, %v1459
      %v1508 = vadd.f32 %v1214, %v1462
      %v1509 = vadd.f32 %v1215, %v1467
      %v1510 = vadd.f32 %v1216, %v1470
      %v1511 = vadd.f32 %v1217, %v1475
      %v1512 = vadd.f32 %v1218, %v1478
      %v1513 = vld [vmem:[%s368 + $0x1] sm:$0xff]
      %v1514 = vld [vmem:[%s368 + $0x9] sm:$0xff]
      %v1515 = vld [vmem:[%s368 + $0x19] sm:$0xff]
      %v1516 = vld [vmem:[%s368 + $0x21] sm:$0xff]
      %v1517 = vld [vmem:[%s368 + $0x31] sm:$0xff]
      %v1518 = vld [vmem:[%s368 + $0x39] sm:$0xff]
      %v1519 = vld [vmem:[%s368 + $0x49] sm:$0xff]
      %v1520 = vld [vmem:[%s368 + $0x51] sm:$0xff]
      %v1521 = vld [vmem:[%s368 + $0x61] sm:$0xff]
      %v1522 = vld [vmem:[%s368 + $0x69] sm:$0xff]
      %v1523 = vld [vmem:[%s368 + $0x79] sm:$0xff]
      %v1524 = vld [vmem:[%s368 + $0x81] sm:$0xff]
      %v1525 = vld [vmem:[%s368 + $0x91] sm:$0xff]
      %v1526 = vld [vmem:[%s368 + $0x99] sm:$0xff]
      %v1527 = vld [vmem:[%s368 + $0xa9] sm:$0xff]
      %v1528 = vld [vmem:[%s368 + $0xb1] sm:$0xff]
      %v1529 = vld [vmem:[%s368 + $0xc1] sm:$0xff]
      %v1530 = vld [vmem:[%s368 + $0xc9] sm:$0xff]
      %v1531 = vld [vmem:[%s368 + $0xd9] sm:$0xff]
      %v1532 = vld [vmem:[%s368 + $0xe1] sm:$0xff]
      %v1533 = vld [vmem:[%s368 + $0xf1] sm:$0xff]
      %v1534 = vld [vmem:[%s368 + $0xf9] sm:$0xff]
      %v1535 = vld [vmem:[%s368 + $0x109] sm:$0xff]
      %v1536 = vld [vmem:[%s368 + $0x111] sm:$0xff]
      %v1537 = vld [vmem:[%s368 + $0x121] sm:$0xff]
      %v1538 = vld [vmem:[%s368 + $0x129] sm:$0xff]
      %v1539 = vld [vmem:[%s368 + $0x139] sm:$0xff]
      %v1540 = vld [vmem:[%s368 + $0x141] sm:$0xff]
      %v1541 = vld [vmem:[%s368 + $0x151] sm:$0xff]
      %v1542 = vld [vmem:[%s368 + $0x159] sm:$0xff]
      %v1543 = vld [vmem:[%s368 + $0x169] sm:$0xff]
      %v1544 = vld [vmem:[%s368 + $0x171] sm:$0xff]
      %v1545 = vpack.c.bf16 %v1514, %v1513
      %v1546 = vpack.c.bf16 %v1516, %v1515
      %v1547 = vpack.c.bf16 %v1518, %v1517
      %v1548 = vpack.c.bf16 %v1520, %v1519
      %v1549 = vpack.c.bf16 %v1522, %v1521
      %v1550 = vpack.c.bf16 %v1524, %v1523
      %v1551 = vpack.c.bf16 %v1526, %v1525
      %v1552 = vpack.c.bf16 %v1528, %v1527
      %v1553 = vpack.c.bf16 %v1530, %v1529
      %v1554 = vpack.c.bf16 %v1532, %v1531
      %v1555 = vpack.c.bf16 %v1534, %v1533
      %v1556 = vpack.c.bf16 %v1536, %v1535
      %v1557 = vpack.c.bf16 %v1538, %v1537
      %v1558 = vpack.c.bf16 %v1540, %v1539
      %v1559 = vpack.c.bf16 %v1542, %v1541
      %v1560 = vpack.c.bf16 %v1544, %v1543
      %s1561 = scalar_lea.vmem %s1, 16
      %v1562 = vld [vmem:[%s1561] sm:$0xf]
      %v1564 = vsel %vm226, %v1545, 0
      %v1567 = vsel %vm226, %v1546, 0
      %v1570 = vsel %vm226, %v1547, 0
      %v1573 = vsel %vm226, %v1548, 0
      %v1576 = vsel %vm226, %v1549, 0
      %v1579 = vsel %vm226, %v1550, 0
      %v1582 = vsel %vm226, %v1551, 0
      %v1585 = vsel %vm226, %v1552, 0
      %v1588 = vsel %vm226, %v1553, 0
      %v1591 = vsel %vm226, %v1554, 0
      %v1594 = vsel %vm226, %v1555, 0
      %v1597 = vsel %vm226, %v1556, 0
      %v1600 = vsel %vm226, %v1557, 0
      %v1603 = vsel %vm226, %v1558, 0
      %v1606 = vsel %vm226, %v1559, 0
      %v1609 = vsel %vm226, %v1560, 0
      %v1612 = vsel %vm548, %v1562, 0
      %1614 = vmatprep.subr.bf16.mxu0 0
      %1615 = vmatpush1.bf16.msra.mxu0 %v1612
      %1616 = vmatprep.subr.bf16.mxu0 0
      %1617 = vmatpush1.bf16.msra.mxu0 0
      %1618 = vmatprep.subr.bf16.mxu0 0
      %1619 = vmatpush1.bf16.msra.mxu0 0
      %1620 = vmatprep.subr.bf16.mxu0 0
      %1621 = vmatpush1.bf16.msra.mxu0 0
      %1622 = vmatprep.subr.bf16.mxu0 0
      %1623 = vmatpush1.bf16.msra.mxu0 0
      %1624 = vmatprep.subr.bf16.mxu0 0
      %1625 = vmatpush1.bf16.msra.mxu0 0
      %1626 = vmatprep.subr.bf16.mxu0 0
      %1627 = vmatpush1.bf16.msra.mxu0 0
      %1628 = vmatprep.subr.bf16.mxu0 0
      %1629 = vmatpush1.bf16.msra.mxu0 0
      %1630 = vmatprep.subr.bf16.mxu0 0
      %1631 = vmatpush1.bf16.msra.mxu0 0
      %1632 = vmatprep.subr.bf16.mxu0 0
      %1633 = vmatpush1.bf16.msra.mxu0 0
      %1634 = vmatprep.subr.bf16.mxu0 0
      %1635 = vmatpush1.bf16.msra.mxu0 0
      %1636 = vmatprep.subr.bf16.mxu0 0
      %1637 = vmatpush1.bf16.msra.mxu0 0
      %1638 = vmatprep.subr.bf16.mxu0 0
      %1639 = vmatpush1.bf16.msra.mxu0 0
      %1640 = vmatprep.subr.bf16.mxu0 0
      %1641 = vmatpush1.bf16.msra.mxu0 0
      %1642 = vmatprep.subr.bf16.mxu0 0
      %1643 = vmatpush1.bf16.msra.mxu0 0
      %1644 = vmatprep.subr.bf16.mxu0 0
      %1645 = vmatpush1.bf16.msra.mxu0 0
      %1646 = vmatprep.mubr.bf16.mxu0 0
      %1647 = vmatmul.mubr.bf16.gmra.mrb[0].mxu0 %v1564
      %v1648 = vpop.f32.mrb[0].mxu0
      %v1649 = vadd.f32 0.0, %v1648
      %v1650 = vpop.f32.mrb[0].mxu0
      %v1651 = vpop.f32.mrb[0].mxu0
      %v1652 = vadd.f32 0.0, %v1651
      %v1653 = vpop.f32.mrb[0].mxu0
      %1654 = vmatprep.mubr.bf16.mxu0 0
      %1655 = vmatmul.mubr.bf16.gmra.mrb[0].mxu0 %v1567
      %v1656 = vpop.f32.mrb[0].mxu0
      %v1657 = vadd.f32 0.0, %v1656
      %v1658 = vpop.f32.mrb[0].mxu0
      %v1659 = vpop.f32.mrb[0].mxu0
      %v1660 = vadd.f32 0.0, %v1659
      %v1661 = vpop.f32.mrb[0].mxu0
      %1662 = vmatprep.mubr.bf16.mxu0 0
      %1663 = vmatmul.mubr.bf16.gmra.mrb[0].mxu0 %v1570
      %v1664 = vpop.f32.mrb[0].mxu0
      %v1665 = vadd.f32 0.0, %v1664
      %v1666 = vpop.f32.mrb[0].mxu0
      %v1667 = vpop.f32.mrb[0].mxu0
      %v1668 = vadd.f32 0.0, %v1667
      %v1669 = vpop.f32.mrb[0].mxu0
      %1670 = vmatprep.mubr.bf16.mxu0 0
      %1671 = vmatmul.mubr.bf16.gmra.mrb[0].mxu0 %v1573
      %v1672 = vpop.f32.mrb[0].mxu0
      %v1673 = vadd.f32 0.0, %v1672
      %v1674 = vpop.f32.mrb[0].mxu0
      %v1675 = vpop.f32.mrb[0].mxu0
      %v1676 = vadd.f32 0.0, %v1675
      %v1677 = vpop.f32.mrb[0].mxu0
      %1678 = vmatprep.mubr.bf16.mxu0 0
      %1679 = vmatmul.mubr.bf16.gmra.mrb[0].mxu0 %v1576
      %v1680 = vpop.f32.mrb[0].mxu0
      %v1681 = vadd.f32 0.0, %v1680
      %v1682 = vpop.f32.mrb[0].mxu0
      %v1683 = vpop.f32.mrb[0].mxu0
      %v1684 = vadd.f32 0.0, %v1683
      %v1685 = vpop.f32.mrb[0].mxu0
      %1686 = vmatprep.mubr.bf16.mxu0 0
      %1687 = vmatmul.mubr.bf16.gmra.mrb[0].mxu0 %v1579
      %v1688 = vpop.f32.mrb[0].mxu0
      %v1689 = vadd.f32 0.0, %v1688
      %v1690 = vpop.f32.mrb[0].mxu0
      %v1691 = vpop.f32.mrb[0].mxu0
      %v1692 = vadd.f32 0.0, %v1691
      %v1693 = vpop.f32.mrb[0].mxu0
      %1694 = vmatprep.mubr.bf16.mxu0 0
      %1695 = vmatmul.mubr.bf16.gmra.mrb[0].mxu0 %v1582
      %v1696 = vpop.f32.mrb[0].mxu0
      %v1697 = vadd.f32 0.0, %v1696
      %v1698 = vpop.f32.mrb[0].mxu0
      %v1699 = vpop.f32.mrb[0].mxu0
      %v1700 = vadd.f32 0.0, %v1699
      %v1701 = vpop.f32.mrb[0].mxu0
      %1702 = vmatprep.mubr.bf16.mxu0 0
      %1703 = vmatmul.mubr.bf16.gmra.mrb[0].mxu0 %v1585
      %v1704 = vpop.f32.mrb[0].mxu0
      %v1705 = vadd.f32 0.0, %v1704
      %v1706 = vpop.f32.mrb[0].mxu0
      %v1707 = vpop.f32.mrb[0].mxu0
      %v1708 = vadd.f32 0.0, %v1707
      %v1709 = vpop.f32.mrb[0].mxu0
      %1710 = vmatprep.mubr.bf16.mxu0 0
      %1711 = vmatmul.mubr.bf16.gmra.mrb[0].mxu0 %v1588
      %v1712 = vpop.f32.mrb[0].mxu0
      %v1713 = vadd.f32 0.0, %v1712
      %v1714 = vpop.f32.mrb[0].mxu0
      %v1715 = vpop.f32.mrb[0].mxu0
      %v1716 = vadd.f32 0.0, %v1715
      %v1717 = vpop.f32.mrb[0].mxu0
      %1718 = vmatprep.mubr.bf16.mxu0 0
      %1719 = vmatmul.mubr.bf16.gmra.mrb[0].mxu0 %v1591
      %v1720 = vpop.f32.mrb[0].mxu0
      %v1721 = vadd.f32 0.0, %v1720
      %v1722 = vpop.f32.mrb[0].mxu0
      %v1723 = vpop.f32.mrb[0].mxu0
      %v1724 = vadd.f32 0.0, %v1723
      %v1725 = vpop.f32.mrb[0].mxu0
      %1726 = vmatprep.mubr.bf16.mxu0 0
      %1727 = vmatmul.mubr.bf16.gmra.mrb[0].mxu0 %v1594
      %v1728 = vpop.f32.mrb[0].mxu0
      %v1729 = vadd.f32 0.0, %v1728
      %v1730 = vpop.f32.mrb[0].mxu0
      %v1731 = vpop.f32.mrb[0].mxu0
      %v1732 = vadd.f32 0.0, %v1731
      %v1733 = vpop.f32.mrb[0].mxu0
      %1734 = vmatprep.mubr.bf16.mxu0 0
      %1735 = vmatmul.mubr.bf16.gmra.mrb[0].mxu0 %v1597
      %v1736 = vpop.f32.mrb[0].mxu0
      %v1737 = vadd.f32 0.0, %v1736
      %v1738 = vpop.f32.mrb[0].mxu0
      %v1739 = vpop.f32.mrb[0].mxu0
      %v1740 = vadd.f32 0.0, %v1739
      %v1741 = vpop.f32.mrb[0].mxu0
      %1742 = vmatprep.mubr.bf16.mxu0 0
      %1743 = vmatmul.mubr.bf16.gmra.mrb[0].mxu0 %v1600
      %v1744 = vpop.f32.mrb[0].mxu0
      %v1745 = vadd.f32 0.0, %v1744
      %v1746 = vpop.f32.mrb[0].mxu0
      %v1747 = vpop.f32.mrb[0].mxu0
      %v1748 = vadd.f32 0.0, %v1747
      %v1749 = vpop.f32.mrb[0].mxu0
      %1750 = vmatprep.mubr.bf16.mxu0 0
      %1751 = vmatmul.mubr.bf16.gmra.mrb[0].mxu0 %v1603
      %v1752 = vpop.f32.mrb[0].mxu0
      %v1753 = vadd.f32 0.0, %v1752
      %v1754 = vpop.f32.mrb[0].mxu0
      %v1755 = vpop.f32.mrb[0].mxu0
      %v1756 = vadd.f32 0.0, %v1755
      %v1757 = vpop.f32.mrb[0].mxu0
      %1758 = vmatprep.mubr.bf16.mxu0 0
      %1759 = vmatmul.mubr.bf16.gmra.mrb[0].mxu0 %v1606
      %v1760 = vpop.f32.mrb[0].mxu0
      %v1761 = vadd.f32 0.0, %v1760
      %v1762 = vpop.f32.mrb[0].mxu0
      %v1763 = vpop.f32.mrb[0].mxu0
      %v1764 = vadd.f32 0.0, %v1763
      %v1765 = vpop.f32.mrb[0].mxu0
      %1766 = vmatprep.mubr.bf16.mxu0 0
      %1767 = vmatmul.mubr.bf16.gmra.mrb[0].mxu0 %v1609
      %v1768 = vpop.f32.mrb[0].mxu0
      %v1769 = vadd.f32 0.0, %v1768
      %v1770 = vpop.f32.mrb[0].mxu0
      %v1771 = vpop.f32.mrb[0].mxu0
      %v1772 = vadd.f32 0.0, %v1771
      %v1773 = vpop.f32.mrb[0].mxu0
      %1774 = vdwg.mxu0
      %v1775 = vadd.f32 %v1481, %v1649
      %v1776 = vadd.f32 %v1482, %v1652
      %v1777 = vadd.f32 %v1483, %v1657
      %v1778 = vadd.f32 %v1484, %v1660
      %v1779 = vadd.f32 %v1485, %v1665
      %v1780 = vadd.f32 %v1486, %v1668
      %v1781 = vadd.f32 %v1487, %v1673
      %v1782 = vadd.f32 %v1488, %v1676
      %v1783 = vadd.f32 %v1489, %v1681
      %v1784 = vadd.f32 %v1490, %v1684
      %v1785 = vadd.f32 %v1491, %v1689
      %v1786 = vadd.f32 %v1492, %v1692
      %v1787 = vadd.f32 %v1493, %v1697
      %v1788 = vadd.f32 %v1494, %v1700
      %v1789 = vadd.f32 %v1495, %v1705
      %v1790 = vadd.f32 %v1496, %v1708
      %v1791 = vadd.f32 %v1497, %v1713
      %v1792 = vadd.f32 %v1498, %v1716
      %v1793 = vadd.f32 %v1499, %v1721
      %v1794 = vadd.f32 %v1500, %v1724
      %v1795 = vadd.f32 %v1501, %v1729
      %v1796 = vadd.f32 %v1502, %v1732
      %v1797 = vadd.f32 %v1503, %v1737
      %v1798 = vadd.f32 %v1504, %v1740
      %v1799 = vadd.f32 %v1505, %v1745
      %v1800 = vadd.f32 %v1506, %v1748
      %v1801 = vadd.f32 %v1507, %v1753
      %v1802 = vadd.f32 %v1508, %v1756
      %v1803 = vadd.f32 %v1509, %v1761
      %v1804 = vadd.f32 %v1510, %v1764
      %v1805 = vadd.f32 %v1511, %v1769
      %v1806 = vadd.f32 %v1512, %v1772
      %v1807 = vld [vmem:[%s368 + $0x2] sm:$0xff]
      %v1808 = vld [vmem:[%s368 + $0xa] sm:$0xff]
      %v1809 = vld [vmem:[%s368 + $0x1a] sm:$0xff]
      %v1810 = vld [vmem:[%s368 + $0x22] sm:$0xff]
      %v1811 = vld [vmem:[%s368 + $0x32] sm:$0xff]
      %v1812 = vld [vmem:[%s368 + $0x3a] sm:$0xff]
      %v1813 = vld [vmem:[%s368 + $0x4a] sm:$0xff]
      %v1814 = vld [vmem:[%s368 + $0x52] sm:$0xff]
      %v1815 = vld [vmem:[%s368 + $0x62] sm:$0xff]
      %v1816 = vld [vmem:[%s368 + $0x6a] sm:$0xff]
      %v1817 = vld [vmem:[%s368 + $0x7a] sm:$0xff]
      %v1818 = vld [vmem:[%s368 + $0x82] sm:$0xff]
      %v1819 = vld [vmem:[%s368 + $0x92] sm:$0xff]
      %v1820 = vld [vmem:[%s368 + $0x9a] sm:$0xff]
      %v1821 = vld [vmem:[%s368 + $0xaa] sm:$0xff]
      %v1822 = vld [vmem:[%s368 + $0xb2] sm:$0xff]
      %v1823 = vld [vmem:[%s368 + $0xc2] sm:$0xff]
      %v1824 = vld [vmem:[%s368 + $0xca] sm:$0xff]
      %v1825 = vld [vmem:[%s368 + $0xda] sm:$0xff]
      %v1826 = vld [vmem:[%s368 + $0xe2] sm:$0xff]
      %v1827 = vld [vmem:[%s368 + $0xf2] sm:$0xff]
      %v1828 = vld [vmem:[%s368 + $0xfa] sm:$0xff]
      %v1829 = vld [vmem:[%s368 + $0x10a] sm:$0xff]
      %v1830 = vld [vmem:[%s368 + $0x112] sm:$0xff]
      %v1831 = vld [vmem:[%s368 + $0x122] sm:$0xff]
      %v1832 = vld [vmem:[%s368 + $0x12a] sm:$0xff]
      %v1833 = vld [vmem:[%s368 + $0x13a] sm:$0xff]
      %v1834 = vld [vmem:[%s368 + $0x142] sm:$0xff]
      %v1835 = vld [vmem:[%s368 + $0x152] sm:$0xff]
      %v1836 = vld [vmem:[%s368 + $0x15a] sm:$0xff]
      %v1837 = vld [vmem:[%s368 + $0x16a] sm:$0xff]
      %v1838 = vld [vmem:[%s368 + $0x172] sm:$0xff]
      %v1839 = vpack.c.bf16 %v1808, %v1807
      %v1840 = vpack.c.bf16 %v1810, %v1809
      %v1841 = vpack.c.bf16 %v1812, %v1811
      %v1842 = vpack.c.bf16 %v1814, %v1813
      %v1843 = vpack.c.bf16 %v1816, %v1815
      %v1844 = vpack.c.bf16 %v1818, %v1817
      %v1845 = vpack.c.bf16 %v1820, %v1819
      %v1846 = vpack.c.bf16 %v1822, %v1821
      %v1847 = vpack.c.bf16 %v1824, %v1823
      %v1848 = vpack.c.bf16 %v1826, %v1825
      %v1849 = vpack.c.bf16 %v1828, %v1827
      %v1850 = vpack.c.bf16 %v1830, %v1829
      %v1851 = vpack.c.bf16 %v1832, %v1831
      %v1852 = vpack.c.bf16 %v1834, %v1833
      %v1853 = vpack.c.bf16 %v1836, %v1835
      %v1854 = vpack.c.bf16 %v1838, %v1837
      %s1855 = scalar_lea.vmem %s1, 20
      %v1856 = vld [vmem:[%s1855] sm:$0xf]
      %v1858 = vsel %vm226, %v1839, 0
      %v1861 = vsel %vm226, %v1840, 0
      %v1864 = vsel %vm226, %v1841, 0
      %v1867 = vsel %vm226, %v1842, 0
      %v1870 = vsel %vm226, %v1843, 0
      %v1873 = vsel %vm226, %v1844, 0
      %v1876 = vsel %vm226, %v1845, 0
      %v1879 = vsel %vm226, %v1846, 0
      %v1882 = vsel %vm226, %v1847, 0
      %v1885 = vsel %vm226, %v1848, 0
      %v1888 = vsel %vm226, %v1849, 0
      %v1891 = vsel %vm226, %v1850, 0
      %v1894 = vsel %vm226, %v1851, 0
      %v1897 = vsel %vm226, %v1852, 0
      %v1900 = vsel %vm226, %v1853, 0
      %v1903 = vsel %vm226, %v1854, 0
      %v1906 = vsel %vm548, %v1856, 0
      %1908 = vmatprep.subr.bf16.mxu0 0
      %1909 = vmatpush1.bf16.msra.mxu0 %v1906
      %1910 = vmatprep.subr.bf16.mxu0 0
      %1911 = vmatpush1.bf16.msra.mxu0 0
      %1912 = vmatprep.subr.bf16.mxu0 0
      %1913 = vmatpush1.bf16.msra.mxu0 0
      %1914 = vmatprep.subr.bf16.mxu0 0
      %1915 = vmatpush1.bf16.msra.mxu0 0
      %1916 = vmatprep.subr.bf16.mxu0 0
      %1917 = vmatpush1.bf16.msra.mxu0 0
      %1918 = vmatprep.subr.bf16.mxu0 0
      %1919 = vmatpush1.bf16.msra.mxu0 0
      %1920 = vmatprep.subr.bf16.mxu0 0
      %1921 = vmatpush1.bf16.msra.mxu0 0
      %1922 = vmatprep.subr.bf16.mxu0 0
      %1923 = vmatpush1.bf16.msra.mxu0 0
      %1924 = vmatprep.subr.bf16.mxu0 0
      %1925 = vmatpush1.bf16.msra.mxu0 0
      %1926 = vmatprep.subr.bf16.mxu0 0
      %1927 = vmatpush1.bf16.msra.mxu0 0
      %1928 = vmatprep.subr.bf16.mxu0 0
      %1929 = vmatpush1.bf16.msra.mxu0 0
      %1930 = vmatprep.subr.bf16.mxu0 0
      %1931 = vmatpush1.bf16.msra.mxu0 0
      %1932 = vmatprep.subr.bf16.mxu0 0
      %1933 = vmatpush1.bf16.msra.mxu0 0
      %1934 = vmatprep.subr.bf16.mxu0 0
      %1935 = vmatpush1.bf16.msra.mxu0 0
      %1936 = vmatprep.subr.bf16.mxu0 0
      %1937 = vmatpush1.bf16.msra.mxu0 0
      %1938 = vmatprep.subr.bf16.mxu0 0
      %1939 = vmatpush1.bf16.msra.mxu0 0
      %1940 = vmatprep.mubr.bf16.mxu0 0
      %1941 = vmatmul.mubr.bf16.gmra.mrb[0].mxu0 %v1858
      %v1942 = vpop.f32.mrb[0].mxu0
      %v1943 = vadd.f32 0.0, %v1942
      %v1944 = vpop.f32.mrb[0].mxu0
      %v1945 = vpop.f32.mrb[0].mxu0
      %v1946 = vadd.f32 0.0, %v1945
      %v1947 = vpop.f32.mrb[0].mxu0
      %1948 = vmatprep.mubr.bf16.mxu0 0
      %1949 = vmatmul.mubr.bf16.gmra.mrb[0].mxu0 %v1861
      %v1950 = vpop.f32.mrb[0].mxu0
      %v1951 = vadd.f32 0.0, %v1950
      %v1952 = vpop.f32.mrb[0].mxu0
      %v1953 = vpop.f32.mrb[0].mxu0
      %v1954 = vadd.f32 0.0, %v1953
      %v1955 = vpop.f32.mrb[0].mxu0
      %1956 = vmatprep.mubr.bf16.mxu0 0
      %1957 = vmatmul.mubr.bf16.gmra.mrb[0].mxu0 %v1864
      %v1958 = vpop.f32.mrb[0].mxu0
      %v1959 = vadd.f32 0.0, %v1958
      %v1960 = vpop.f32.mrb[0].mxu0
      %v1961 = vpop.f32.mrb[0].mxu0
      %v1962 = vadd.f32 0.0, %v1961
      %v1963 = vpop.f32.mrb[0].mxu0
      %1964 = vmatprep.mubr.bf16.mxu0 0
      %1965 = vmatmul.mubr.bf16.gmra.mrb[0].mxu0 %v1867
      %v1966 = vpop.f32.mrb[0].mxu0
      %v1967 = vadd.f32 0.0, %v1966
      %v1968 = vpop.f32.mrb[0].mxu0
      %v1969 = vpop.f32.mrb[0].mxu0
      %v1970 = vadd.f32 0.0, %v1969
      %v1971 = vpop.f32.mrb[0].mxu0
      %1972 = vmatprep.mubr.bf16.mxu0 0
      %1973 = vmatmul.mubr.bf16.gmra.mrb[0].mxu0 %v1870
      %v1974 = vpop.f32.mrb[0].mxu0
      %v1975 = vadd.f32 0.0, %v1974
      %v1976 = vpop.f32.mrb[0].mxu0
      %v1977 = vpop.f32.mrb[0].mxu0
      %v1978 = vadd.f32 0.0, %v1977
      %v1979 = vpop.f32.mrb[0].mxu0
      %1980 = vmatprep.mubr.bf16.mxu0 0
      %1981 = vmatmul.mubr.bf16.gmra.mrb[0].mxu0 %v1873
      %v1982 = vpop.f32.mrb[0].mxu0
      %v1983 = vadd.f32 0.0, %v1982
      %v1984 = vpop.f32.mrb[0].mxu0
      %v1985 = vpop.f32.mrb[0].mxu0
      %v1986 = vadd.f32 0.0, %v1985
      %v1987 = vpop.f32.mrb[0].mxu0
      %1988 = vmatprep.mubr.bf16.mxu0 0
      %1989 = vmatmul.mubr.bf16.gmra.mrb[0].mxu0 %v1876
      %v1990 = vpop.f32.mrb[0].mxu0
      %v1991 = vadd.f32 0.0, %v1990
      %v1992 = vpop.f32.mrb[0].mxu0
      %v1993 = vpop.f32.mrb[0].mxu0
      %v1994 = vadd.f32 0.0, %v1993
      %v1995 = vpop.f32.mrb[0].mxu0
      %1996 = vmatprep.mubr.bf16.mxu0 0
      %1997 = vmatmul.mubr.bf16.gmra.mrb[0].mxu0 %v1879
      %v1998 = vpop.f32.mrb[0].mxu0
      %v1999 = vadd.f32 0.0, %v1998
      %v2000 = vpop.f32.mrb[0].mxu0
      %v2001 = vpop.f32.mrb[0].mxu0
      %v2002 = vadd.f32 0.0, %v2001
      %v2003 = vpop.f32.mrb[0].mxu0
      %2004 = vmatprep.mubr.bf16.mxu0 0
      %2005 = vmatmul.mubr.bf16.gmra.mrb[0].mxu0 %v1882
      %v2006 = vpop.f32.mrb[0].mxu0
      %v2007 = vadd.f32 0.0, %v2006
      %v2008 = vpop.f32.mrb[0].mxu0
      %v2009 = vpop.f32.mrb[0].mxu0
      %v2010 = vadd.f32 0.0, %v2009
      %v2011 = vpop.f32.mrb[0].mxu0
      %2012 = vmatprep.mubr.bf16.mxu0 0
      %2013 = vmatmul.mubr.bf16.gmra.mrb[0].mxu0 %v1885
      %v2014 = vpop.f32.mrb[0].mxu0
      %v2015 = vadd.f32 0.0, %v2014
      %v2016 = vpop.f32.mrb[0].mxu0
      %v2017 = vpop.f32.mrb[0].mxu0
      %v2018 = vadd.f32 0.0, %v2017
      %v2019 = vpop.f32.mrb[0].mxu0
      %2020 = vmatprep.mubr.bf16.mxu0 0
      %2021 = vmatmul.mubr.bf16.gmra.mrb[0].mxu0 %v1888
      %v2022 = vpop.f32.mrb[0].mxu0
      %v2023 = vadd.f32 0.0, %v2022
      %v2024 = vpop.f32.mrb[0].mxu0
      %v2025 = vpop.f32.mrb[0].mxu0
      %v2026 = vadd.f32 0.0, %v2025
      %v2027 = vpop.f32.mrb[0].mxu0
      %2028 = vmatprep.mubr.bf16.mxu0 0
      %2029 = vmatmul.mubr.bf16.gmra.mrb[0].mxu0 %v1891
      %v2030 = vpop.f32.mrb[0].mxu0
      %v2031 = vadd.f32 0.0, %v2030
      %v2032 = vpop.f32.mrb[0].mxu0
      %v2033 = vpop.f32.mrb[0].mxu0
      %v2034 = vadd.f32 0.0, %v2033
      %v2035 = vpop.f32.mrb[0].mxu0
      %2036 = vmatprep.mubr.bf16.mxu0 0
      %2037 = vmatmul.mubr.bf16.gmra.mrb[0].mxu0 %v1894
      %v2038 = vpop.f32.mrb[0].mxu0
      %v2039 = vadd.f32 0.0, %v2038
      %v2040 = vpop.f32.mrb[0].mxu0
      %v2041 = vpop.f32.mrb[0].mxu0
      %v2042 = vadd.f32 0.0, %v2041
      %v2043 = vpop.f32.mrb[0].mxu0
      %2044 = vmatprep.mubr.bf16.mxu0 0
      %2045 = vmatmul.mubr.bf16.gmra.mrb[0].mxu0 %v1897
      %v2046 = vpop.f32.mrb[0].mxu0
      %v2047 = vadd.f32 0.0, %v2046
      %v2048 = vpop.f32.mrb[0].mxu0
      %v2049 = vpop.f32.mrb[0].mxu0
      %v2050 = vadd.f32 0.0, %v2049
      %v2051 = vpop.f32.mrb[0].mxu0
      %2052 = vmatprep.mubr.bf16.mxu0 0
      %2053 = vmatmul.mubr.bf16.gmra.mrb[0].mxu0 %v1900
      %v2054 = vpop.f32.mrb[0].mxu0
      %v2055 = vadd.f32 0.0, %v2054
      %v2056 = vpop.f32.mrb[0].mxu0
      %v2057 = vpop.f32.mrb[0].mxu0
      %v2058 = vadd.f32 0.0, %v2057
      %v2059 = vpop.f32.mrb[0].mxu0
      %2060 = vmatprep.mubr.bf16.mxu0 0
      %2061 = vmatmul.mubr.bf16.gmra.mrb[0].mxu0 %v1903
      %v2062 = vpop.f32.mrb[0].mxu0
      %v2063 = vadd.f32 0.0, %v2062
      %v2064 = vpop.f32.mrb[0].mxu0
      %v2065 = vpop.f32.mrb[0].mxu0
      %v2066 = vadd.f32 0.0, %v2065
      %v2067 = vpop.f32.mrb[0].mxu0
      %2068 = vdwg.mxu0
      %v2069 = vadd.f32 %v1775, %v1943
      %v2070 = vadd.f32 %v1776, %v1946
      %v2071 = vadd.f32 %v1777, %v1951
      %v2072 = vadd.f32 %v1778, %v1954
      %v2073 = vadd.f32 %v1779, %v1959
      %v2074 = vadd.f32 %v1780, %v1962
      %v2075 = vadd.f32 %v1781, %v1967
      %v2076 = vadd.f32 %v1782, %v1970
      %v2077 = vadd.f32 %v1783, %v1975
      %v2078 = vadd.f32 %v1784, %v1978
      %v2079 = vadd.f32 %v1785, %v1983
      %v2080 = vadd.f32 %v1786, %v1986
      %v2081 = vadd.f32 %v1787, %v1991
      %v2082 = vadd.f32 %v1788, %v1994
      %v2083 = vadd.f32 %v1789, %v1999
      %v2084 = vadd.f32 %v1790, %v2002
      %v2085 = vadd.f32 %v1791, %v2007
      %v2086 = vadd.f32 %v1792, %v2010
      %v2087 = vadd.f32 %v1793, %v2015
      %v2088 = vadd.f32 %v1794, %v2018
      %v2089 = vadd.f32 %v1795, %v2023
      %v2090 = vadd.f32 %v1796, %v2026
      %v2091 = vadd.f32 %v1797, %v2031
      %v2092 = vadd.f32 %v1798, %v2034
      %v2093 = vadd.f32 %v1799, %v2039
      %v2094 = vadd.f32 %v1800, %v2042
      %v2095 = vadd.f32 %v1801, %v2047
      %v2096 = vadd.f32 %v1802, %v2050
      %v2097 = vadd.f32 %v1803, %v2055
      %v2098 = vadd.f32 %v1804, %v2058
      %v2099 = vadd.f32 %v1805, %v2063
      %v2100 = vadd.f32 %v1806, %v2066
      %s2101 = scalar_lea.vmem [#allocation2], 48
      %v2102 = vld [vmem:[%s2101] sm:$0xff]
      %v2103 = vld [vmem:[%s2101 + $0x8] sm:$0xff]
      %v2104 = vld [vmem:[%s2101 + $0x18] sm:$0xff]
      %v2105 = vld [vmem:[%s2101 + $0x20] sm:$0xff]
      %v2106 = vld [vmem:[%s2101 + $0x30] sm:$0xff]
      %v2107 = vld [vmem:[%s2101 + $0x38] sm:$0xff]
      %v2108 = vld [vmem:[%s2101 + $0x48] sm:$0xff]
      %v2109 = vld [vmem:[%s2101 + $0x50] sm:$0xff]
      %v2110 = vld [vmem:[%s2101 + $0x60] sm:$0xff]
      %v2111 = vld [vmem:[%s2101 + $0x68] sm:$0xff]
      %v2112 = vld [vmem:[%s2101 + $0x78] sm:$0xff]
      %v2113 = vld [vmem:[%s2101 + $0x80] sm:$0xff]
      %v2114 = vld [vmem:[%s2101 + $0x90] sm:$0xff]
      %v2115 = vld [vmem:[%s2101 + $0x98] sm:$0xff]
      %v2116 = vld [vmem:[%s2101 + $0xa8] sm:$0xff]
      %v2117 = vld [vmem:[%s2101 + $0xb0] sm:$0xff]
      %v2118 = vld [vmem:[%s2101 + $0xc0] sm:$0xff]
      %v2119 = vld [vmem:[%s2101 + $0xc8] sm:$0xff]
      %v2120 = vld [vmem:[%s2101 + $0xd8] sm:$0xff]
      %v2121 = vld [vmem:[%s2101 + $0xe0] sm:$0xff]
      %v2122 = vld [vmem:[%s2101 + $0xf0] sm:$0xff]
      %v2123 = vld [vmem:[%s2101 + $0xf8] sm:$0xff]
      %v2124 = vld [vmem:[%s2101 + $0x108] sm:$0xff]
      %v2125 = vld [vmem:[%s2101 + $0x110] sm:$0xff]
      %v2126 = vld [vmem:[%s2101 + $0x120] sm:$0xff]
      %v2127 = vld [vmem:[%s2101 + $0x128] sm:$0xff]
      %v2128 = vld [vmem:[%s2101 + $0x138] sm:$0xff]
      %v2129 = vld [vmem:[%s2101 + $0x140] sm:$0xff]
      %v2130 = vld [vmem:[%s2101 + $0x150] sm:$0xff]
      %v2131 = vld [vmem:[%s2101 + $0x158] sm:$0xff]
      %v2132 = vld [vmem:[%s2101 + $0x168] sm:$0xff]
      %v2133 = vld [vmem:[%s2101 + $0x170] sm:$0xff]
      %v2134 = vpack.c.bf16 %v2103, %v2102
      %v2135 = vpack.c.bf16 %v2105, %v2104
      %v2136 = vpack.c.bf16 %v2107, %v2106
      %v2137 = vpack.c.bf16 %v2109, %v2108
      %v2138 = vpack.c.bf16 %v2111, %v2110
      %v2139 = vpack.c.bf16 %v2113, %v2112
      %v2140 = vpack.c.bf16 %v2115, %v2114
      %v2141 = vpack.c.bf16 %v2117, %v2116
      %v2142 = vpack.c.bf16 %v2119, %v2118
      %v2143 = vpack.c.bf16 %v2121, %v2120
      %v2144 = vpack.c.bf16 %v2123, %v2122
      %v2145 = vpack.c.bf16 %v2125, %v2124
      %v2146 = vpack.c.bf16 %v2127, %v2126
      %v2147 = vpack.c.bf16 %v2129, %v2128
      %v2148 = vpack.c.bf16 %v2131, %v2130
      %v2149 = vpack.c.bf16 %v2133, %v2132
      %s2150 = scalar_lea.vmem %s1, 24
      %v2151 = vld [vmem:[%s2150] sm:$0xf]
      %v2153 = vsel %vm226, %v2134, 0
      %v2156 = vsel %vm226, %v2135, 0
      %v2159 = vsel %vm226, %v2136, 0
      %v2162 = vsel %vm226, %v2137, 0
      %v2165 = vsel %vm226, %v2138, 0
      %v2168 = vsel %vm226, %v2139, 0
      %v2171 = vsel %vm226, %v2140, 0
      %v2174 = vsel %vm226, %v2141, 0
      %v2177 = vsel %vm226, %v2142, 0
      %v2180 = vsel %vm226, %v2143, 0
      %v2183 = vsel %vm226, %v2144, 0
      %v2186 = vsel %vm226, %v2145, 0
      %v2189 = vsel %vm226, %v2146, 0
      %v2192 = vsel %vm226, %v2147, 0
      %v2195 = vsel %vm226, %v2148, 0
      %v2198 = vsel %vm226, %v2149, 0
      %v2201 = vsel %vm548, %v2151, 0
      %2203 = vmatprep.subr.bf16.mxu0 0
      %2204 = vmatpush1.bf16.msra.mxu0 %v2201
      %2205 = vmatprep.subr.bf16.mxu0 0
      %2206 = vmatpush1.bf16.msra.mxu0 0
      %2207 = vmatprep.subr.bf16.mxu0 0
      %2208 = vmatpush1.bf16.msra.mxu0 0
      %2209 = vmatprep.subr.bf16.mxu0 0
      %2210 = vmatpush1.bf16.msra.mxu0 0
      %2211 = vmatprep.subr.bf16.mxu0 0
      %2212 = vmatpush1.bf16.msra.mxu0 0
      %2213 = vmatprep.subr.bf16.mxu0 0
      %2214 = vmatpush1.bf16.msra.mxu0 0
      %2215 = vmatprep.subr.bf16.mxu0 0
      %2216 = vmatpush1.bf16.msra.mxu0 0
      %2217 = vmatprep.subr.bf16.mxu0 0
      %2218 = vmatpush1.bf16.msra.mxu0 0
      %2219 = vmatprep.subr.bf16.mxu0 0
      %2220 = vmatpush1.bf16.msra.mxu0 0
      %2221 = vmatprep.subr.bf16.mxu0 0
      %2222 = vmatpush1.bf16.msra.mxu0 0
      %2223 = vmatprep.subr.bf16.mxu0 0
      %2224 = vmatpush1.bf16.msra.mxu0 0
      %2225 = vmatprep.subr.bf16.mxu0 0
      %2226 = vmatpush1.bf16.msra.mxu0 0
      %2227 = vmatprep.subr.bf16.mxu0 0
      %2228 = vmatpush1.bf16.msra.mxu0 0
      %2229 = vmatprep.subr.bf16.mxu0 0
      %2230 = vmatpush1.bf16.msra.mxu0 0
      %2231 = vmatprep.subr.bf16.mxu0 0
      %2232 = vmatpush1.bf16.msra.mxu0 0
      %2233 = vmatprep.subr.bf16.mxu0 0
      %2234 = vmatpush1.bf16.msra.mxu0 0
      %2235 = vmatprep.mubr.bf16.mxu0 0
      %2236 = vmatmul.mubr.bf16.gmra.mrb[0].mxu0 %v2153
      %v2237 = vpop.f32.mrb[0].mxu0
      %v2238 = vadd.f32 0.0, %v2237
      %v2239 = vpop.f32.mrb[0].mxu0
      %v2240 = vpop.f32.mrb[0].mxu0
      %v2241 = vadd.f32 0.0, %v2240
      %v2242 = vpop.f32.mrb[0].mxu0
      %2243 = vmatprep.mubr.bf16.mxu0 0
      %2244 = vmatmul.mubr.bf16.gmra.mrb[0].mxu0 %v2156
      %v2245 = vpop.f32.mrb[0].mxu0
      %v2246 = vadd.f32 0.0, %v2245
      %v2247 = vpop.f32.mrb[0].mxu0
      %v2248 = vpop.f32.mrb[0].mxu0
      %v2249 = vadd.f32 0.0, %v2248
      %v2250 = vpop.f32.mrb[0].mxu0
      %2251 = vmatprep.mubr.bf16.mxu0 0
      %2252 = vmatmul.mubr.bf16.gmra.mrb[0].mxu0 %v2159
      %v2253 = vpop.f32.mrb[0].mxu0
      %v2254 = vadd.f32 0.0, %v2253
      %v2255 = vpop.f32.mrb[0].mxu0
      %v2256 = vpop.f32.mrb[0].mxu0
      %v2257 = vadd.f32 0.0, %v2256
      %v2258 = vpop.f32.mrb[0].mxu0
      %2259 = vmatprep.mubr.bf16.mxu0 0
      %2260 = vmatmul.mubr.bf16.gmra.mrb[0].mxu0 %v2162
      %v2261 = vpop.f32.mrb[0].mxu0
      %v2262 = vadd.f32 0.0, %v2261
      %v2263 = vpop.f32.mrb[0].mxu0
      %v2264 = vpop.f32.mrb[0].mxu0
      %v2265 = vadd.f32 0.0, %v2264
      %v2266 = vpop.f32.mrb[0].mxu0
      %2267 = vmatprep.mubr.bf16.mxu0 0
      %2268 = vmatmul.mubr.bf16.gmra.mrb[0].mxu0 %v2165
      %v2269 = vpop.f32.mrb[0].mxu0
      %v2270 = vadd.f32 0.0, %v2269
      %v2271 = vpop.f32.mrb[0].mxu0
      %v2272 = vpop.f32.mrb[0].mxu0
      %v2273 = vadd.f32 0.0, %v2272
      %v2274 = vpop.f32.mrb[0].mxu0
      %2275 = vmatprep.mubr.bf16.mxu0 0
      %2276 = vmatmul.mubr.bf16.gmra.mrb[0].mxu0 %v2168
      %v2277 = vpop.f32.mrb[0].mxu0
      %v2278 = vadd.f32 0.0, %v2277
      %v2279 = vpop.f32.mrb[0].mxu0
      %v2280 = vpop.f32.mrb[0].mxu0
      %v2281 = vadd.f32 0.0, %v2280
      %v2282 = vpop.f32.mrb[0].mxu0
      %2283 = vmatprep.mubr.bf16.mxu0 0
      %2284 = vmatmul.mubr.bf16.gmra.mrb[0].mxu0 %v2171
      %v2285 = vpop.f32.mrb[0].mxu0
      %v2286 = vadd.f32 0.0, %v2285
      %v2287 = vpop.f32.mrb[0].mxu0
      %v2288 = vpop.f32.mrb[0].mxu0
      %v2289 = vadd.f32 0.0, %v2288
      %v2290 = vpop.f32.mrb[0].mxu0
      %2291 = vmatprep.mubr.bf16.mxu0 0
      %2292 = vmatmul.mubr.bf16.gmra.mrb[0].mxu0 %v2174
      %v2293 = vpop.f32.mrb[0].mxu0
      %v2294 = vadd.f32 0.0, %v2293
      %v2295 = vpop.f32.mrb[0].mxu0
      %v2296 = vpop.f32.mrb[0].mxu0
      %v2297 = vadd.f32 0.0, %v2296
      %v2298 = vpop.f32.mrb[0].mxu0
      %2299 = vmatprep.mubr.bf16.mxu0 0
      %2300 = vmatmul.mubr.bf16.gmra.mrb[0].mxu0 %v2177
      %v2301 = vpop.f32.mrb[0].mxu0
      %v2302 = vadd.f32 0.0, %v2301
      %v2303 = vpop.f32.mrb[0].mxu0
      %v2304 = vpop.f32.mrb[0].mxu0
      %v2305 = vadd.f32 0.0, %v2304
      %v2306 = vpop.f32.mrb[0].mxu0
      %2307 = vmatprep.mubr.bf16.mxu0 0
      %2308 = vmatmul.mubr.bf16.gmra.mrb[0].mxu0 %v2180
      %v2309 = vpop.f32.mrb[0].mxu0
      %v2310 = vadd.f32 0.0, %v2309
      %v2311 = vpop.f32.mrb[0].mxu0
      %v2312 = vpop.f32.mrb[0].mxu0
      %v2313 = vadd.f32 0.0, %v2312
      %v2314 = vpop.f32.mrb[0].mxu0
      %2315 = vmatprep.mubr.bf16.mxu0 0
      %2316 = vmatmul.mubr.bf16.gmra.mrb[0].mxu0 %v2183
      %v2317 = vpop.f32.mrb[0].mxu0
      %v2318 = vadd.f32 0.0, %v2317
      %v2319 = vpop.f32.mrb[0].mxu0
      %v2320 = vpop.f32.mrb[0].mxu0
      %v2321 = vadd.f32 0.0, %v2320
      %v2322 = vpop.f32.mrb[0].mxu0
      %2323 = vmatprep.mubr.bf16.mxu0 0
      %2324 = vmatmul.mubr.bf16.gmra.mrb[0].mxu0 %v2186
      %v2325 = vpop.f32.mrb[0].mxu0
      %v2326 = vadd.f32 0.0, %v2325
      %v2327 = vpop.f32.mrb[0].mxu0
      %v2328 = vpop.f32.mrb[0].mxu0
      %v2329 = vadd.f32 0.0, %v2328
      %v2330 = vpop.f32.mrb[0].mxu0
      %2331 = vmatprep.mubr.bf16.mxu0 0
      %2332 = vmatmul.mubr.bf16.gmra.mrb[0].mxu0 %v2189
      %v2333 = vpop.f32.mrb[0].mxu0
      %v2334 = vadd.f32 0.0, %v2333
      %v2335 = vpop.f32.mrb[0].mxu0
      %v2336 = vpop.f32.mrb[0].mxu0
      %v2337 = vadd.f32 0.0, %v2336
      %v2338 = vpop.f32.mrb[0].mxu0
      %2339 = vmatprep.mubr.bf16.mxu0 0
      %2340 = vmatmul.mubr.bf16.gmra.mrb[0].mxu0 %v2192
      %v2341 = vpop.f32.mrb[0].mxu0
      %v2342 = vadd.f32 0.0, %v2341
      %v2343 = vpop.f32.mrb[0].mxu0
      %v2344 = vpop.f32.mrb[0].mxu0
      %v2345 = vadd.f32 0.0, %v2344
      %v2346 = vpop.f32.mrb[0].mxu0
      %2347 = vmatprep.mubr.bf16.mxu0 0
      %2348 = vmatmul.mubr.bf16.gmra.mrb[0].mxu0 %v2195
      %v2349 = vpop.f32.mrb[0].mxu0
      %v2350 = vadd.f32 0.0, %v2349
      %v2351 = vpop.f32.mrb[0].mxu0
      %v2352 = vpop.f32.mrb[0].mxu0
      %v2353 = vadd.f32 0.0, %v2352
      %v2354 = vpop.f32.mrb[0].mxu0
      %2355 = vmatprep.mubr.bf16.mxu0 0
      %2356 = vmatmul.mubr.bf16.gmra.mrb[0].mxu0 %v2198
      %v2357 = vpop.f32.mrb[0].mxu0
      %v2358 = vadd.f32 0.0, %v2357
      %v2359 = vpop.f32.mrb[0].mxu0
      %v2360 = vpop.f32.mrb[0].mxu0
      %v2361 = vadd.f32 0.0, %v2360
      %v2362 = vpop.f32.mrb[0].mxu0
      %2363 = vdwg.mxu0
      %v2364 = vadd.f32 %v2069, %v2238
      %v2365 = vadd.f32 %v2070, %v2241
      %v2366 = vadd.f32 %v2071, %v2246
      %v2367 = vadd.f32 %v2072, %v2249
      %v2368 = vadd.f32 %v2073, %v2254
      %v2369 = vadd.f32 %v2074, %v2257
      %v2370 = vadd.f32 %v2075, %v2262
      %v2371 = vadd.f32 %v2076, %v2265
      %v2372 = vadd.f32 %v2077, %v2270
      %v2373 = vadd.f32 %v2078, %v2273
      %v2374 = vadd.f32 %v2079, %v2278
      %v2375 = vadd.f32 %v2080, %v2281
      %v2376 = vadd.f32 %v2081, %v2286
      %v2377 = vadd.f32 %v2082, %v2289
      %v2378 = vadd.f32 %v2083, %v2294
      %v2379 = vadd.f32 %v2084, %v2297
      %v2380 = vadd.f32 %v2085, %v2302
      %v2381 = vadd.f32 %v2086, %v2305
      %v2382 = vadd.f32 %v2087, %v2310
      %v2383 = vadd.f32 %v2088, %v2313
      %v2384 = vadd.f32 %v2089, %v2318
      %v2385 = vadd.f32 %v2090, %v2321
      %v2386 = vadd.f32 %v2091, %v2326
      %v2387 = vadd.f32 %v2092, %v2329
      %v2388 = vadd.f32 %v2093, %v2334
      %v2389 = vadd.f32 %v2094, %v2337
      %v2390 = vadd.f32 %v2095, %v2342
      %v2391 = vadd.f32 %v2096, %v2345
      %v2392 = vadd.f32 %v2097, %v2350
      %v2393 = vadd.f32 %v2098, %v2353
      %v2394 = vadd.f32 %v2099, %v2358
      %v2395 = vadd.f32 %v2100, %v2361
      %v2396 = vld [vmem:[%s2101 + $0x1] sm:$0xff]
      %v2397 = vld [vmem:[%s2101 + $0x9] sm:$0xff]
      %v2398 = vld [vmem:[%s2101 + $0x19] sm:$0xff]
      %v2399 = vld [vmem:[%s2101 + $0x21] sm:$0xff]
      %v2400 = vld [vmem:[%s2101 + $0x31] sm:$0xff]
      %v2401 = vld [vmem:[%s2101 + $0x39] sm:$0xff]
      %v2402 = vld [vmem:[%s2101 + $0x49] sm:$0xff]
      %v2403 = vld [vmem:[%s2101 + $0x51] sm:$0xff]
      %v2404 = vld [vmem:[%s2101 + $0x61] sm:$0xff]
      %v2405 = vld [vmem:[%s2101 + $0x69] sm:$0xff]
      %v2406 = vld [vmem:[%s2101 + $0x79] sm:$0xff]
      %v2407 = vld [vmem:[%s2101 + $0x81] sm:$0xff]
      %v2408 = vld [vmem:[%s2101 + $0x91] sm:$0xff]
      %v2409 = vld [vmem:[%s2101 + $0x99] sm:$0xff]
      %v2410 = vld [vmem:[%s2101 + $0xa9] sm:$0xff]
      %v2411 = vld [vmem:[%s2101 + $0xb1] sm:$0xff]
      %v2412 = vld [vmem:[%s2101 + $0xc1] sm:$0xff]
      %v2413 = vld [vmem:[%s2101 + $0xc9] sm:$0xff]
      %v2414 = vld [vmem:[%s2101 + $0xd9] sm:$0xff]
      %v2415 = vld [vmem:[%s2101 + $0xe1] sm:$0xff]
      %v2416 = vld [vmem:[%s2101 + $0xf1] sm:$0xff]
      %v2417 = vld [vmem:[%s2101 + $0xf9] sm:$0xff]
      %v2418 = vld [vmem:[%s2101 + $0x109] sm:$0xff]
      %v2419 = vld [vmem:[%s2101 + $0x111] sm:$0xff]
      %v2420 = vld [vmem:[%s2101 + $0x121] sm:$0xff]
      %v2421 = vld [vmem:[%s2101 + $0x129] sm:$0xff]
      %v2422 = vld [vmem:[%s2101 + $0x139] sm:$0xff]
      %v2423 = vld [vmem:[%s2101 + $0x141] sm:$0xff]
      %v2424 = vld [vmem:[%s2101 + $0x151] sm:$0xff]
      %v2425 = vld [vmem:[%s2101 + $0x159] sm:$0xff]
      %v2426 = vld [vmem:[%s2101 + $0x169] sm:$0xff]
      %v2427 = vld [vmem:[%s2101 + $0x171] sm:$0xff]
      %v2428 = vpack.c.bf16 %v2397, %v2396
      %v2429 = vpack.c.bf16 %v2399, %v2398
      %v2430 = vpack.c.bf16 %v2401, %v2400
      %v2431 = vpack.c.bf16 %v2403, %v2402
      %v2432 = vpack.c.bf16 %v2405, %v2404
      %v2433 = vpack.c.bf16 %v2407, %v2406
      %v2434 = vpack.c.bf16 %v2409, %v2408
      %v2435 = vpack.c.bf16 %v2411, %v2410
      %v2436 = vpack.c.bf16 %v2413, %v2412
      %v2437 = vpack.c.bf16 %v2415, %v2414
      %v2438 = vpack.c.bf16 %v2417, %v2416
      %v2439 = vpack.c.bf16 %v2419, %v2418
      %v2440 = vpack.c.bf16 %v2421, %v2420
      %v2441 = vpack.c.bf16 %v2423, %v2422
      %v2442 = vpack.c.bf16 %v2425, %v2424
      %v2443 = vpack.c.bf16 %v2427, %v2426
      %s2444 = scalar_lea.vmem %s1, 28
      %v2445 = vld [vmem:[%s2444] sm:$0xf]
      %v2447 = vsel %vm226, %v2428, 0
      %v2450 = vsel %vm226, %v2429, 0
      %v2453 = vsel %vm226, %v2430, 0
      %v2456 = vsel %vm226, %v2431, 0
      %v2459 = vsel %vm226, %v2432, 0
      %v2462 = vsel %vm226, %v2433, 0
      %v2465 = vsel %vm226, %v2434, 0
      %v2468 = vsel %vm226, %v2435, 0
      %v2471 = vsel %vm226, %v2436, 0
      %v2474 = vsel %vm226, %v2437, 0
      %v2477 = vsel %vm226, %v2438, 0
      %v2480 = vsel %vm226, %v2439, 0
      %v2483 = vsel %vm226, %v2440, 0
      %v2486 = vsel %vm226, %v2441, 0
      %v2489 = vsel %vm226, %v2442, 0
      %v2492 = vsel %vm226, %v2443, 0
      %v2495 = vsel %vm548, %v2445, 0
      %2497 = vmatprep.subr.bf16.mxu0 0
      %2498 = vmatpush1.bf16.msra.mxu0 %v2495
      %2499 = vmatprep.subr.bf16.mxu0 0
      %2500 = vmatpush1.bf16.msra.mxu0 0
      %2501 = vmatprep.subr.bf16.mxu0 0
      %2502 = vmatpush1.bf16.msra.mxu0 0
      %2503 = vmatprep.subr.bf16.mxu0 0
      %2504 = vmatpush1.bf16.msra.mxu0 0
      %2505 = vmatprep.subr.bf16.mxu0 0
      %2506 = vmatpush1.bf16.msra.mxu0 0
      %2507 = vmatprep.subr.bf16.mxu0 0
      %2508 = vmatpush1.bf16.msra.mxu0 0
      %2509 = vmatprep.subr.bf16.mxu0 0
      %2510 = vmatpush1.bf16.msra.mxu0 0
      %2511 = vmatprep.subr.bf16.mxu0 0
      %2512 = vmatpush1.bf16.msra.mxu0 0
      %2513 = vmatprep.subr.bf16.mxu0 0
      %2514 = vmatpush1.bf16.msra.mxu0 0
      %2515 = vmatprep.subr.bf16.mxu0 0
      %2516 = vmatpush1.bf16.msra.mxu0 0
      %2517 = vmatprep.subr.bf16.mxu0 0
      %2518 = vmatpush1.bf16.msra.mxu0 0
      %2519 = vmatprep.subr.bf16.mxu0 0
      %2520 = vmatpush1.bf16.msra.mxu0 0
      %2521 = vmatprep.subr.bf16.mxu0 0
      %2522 = vmatpush1.bf16.msra.mxu0 0
      %2523 = vmatprep.subr.bf16.mxu0 0
      %2524 = vmatpush1.bf16.msra.mxu0 0
      %2525 = vmatprep.subr.bf16.mxu0 0
      %2526 = vmatpush1.bf16.msra.mxu0 0
      %2527 = vmatprep.subr.bf16.mxu0 0
      %2528 = vmatpush1.bf16.msra.mxu0 0
      %2529 = vmatprep.mubr.bf16.mxu0 0
      %2530 = vmatmul.mubr.bf16.gmra.mrb[0].mxu0 %v2447
      %v2531 = vpop.f32.mrb[0].mxu0
      %v2532 = vadd.f32 0.0, %v2531
      %v2533 = vpop.f32.mrb[0].mxu0
      %v2534 = vpop.f32.mrb[0].mxu0
      %v2535 = vadd.f32 0.0, %v2534
      %v2536 = vpop.f32.mrb[0].mxu0
      %2537 = vmatprep.mubr.bf16.mxu0 0
      %2538 = vmatmul.mubr.bf16.gmra.mrb[0].mxu0 %v2450
      %v2539 = vpop.f32.mrb[0].mxu0
      %v2540 = vadd.f32 0.0, %v2539
      %v2541 = vpop.f32.mrb[0].mxu0
      %v2542 = vpop.f32.mrb[0].mxu0
      %v2543 = vadd.f32 0.0, %v2542
      %v2544 = vpop.f32.mrb[0].mxu0
      %2545 = vmatprep.mubr.bf16.mxu0 0
      %2546 = vmatmul.mubr.bf16.gmra.mrb[0].mxu0 %v2453
      %v2547 = vpop.f32.mrb[0].mxu0
      %v2548 = vadd.f32 0.0, %v2547
      %v2549 = vpop.f32.mrb[0].mxu0
      %v2550 = vpop.f32.mrb[0].mxu0
      %v2551 = vadd.f32 0.0, %v2550
      %v2552 = vpop.f32.mrb[0].mxu0
      %2553 = vmatprep.mubr.bf16.mxu0 0
      %2554 = vmatmul.mubr.bf16.gmra.mrb[0].mxu0 %v2456
      %v2555 = vpop.f32.mrb[0].mxu0
      %v2556 = vadd.f32 0.0, %v2555
      %v2557 = vpop.f32.mrb[0].mxu0
      %v2558 = vpop.f32.mrb[0].mxu0
      %v2559 = vadd.f32 0.0, %v2558
      %v2560 = vpop.f32.mrb[0].mxu0
      %2561 = vmatprep.mubr.bf16.mxu0 0
      %2562 = vmatmul.mubr.bf16.gmra.mrb[0].mxu0 %v2459
      %v2563 = vpop.f32.mrb[0].mxu0
      %v2564 = vadd.f32 0.0, %v2563
      %v2565 = vpop.f32.mrb[0].mxu0
      %v2566 = vpop.f32.mrb[0].mxu0
      %v2567 = vadd.f32 0.0, %v2566
      %v2568 = vpop.f32.mrb[0].mxu0
      %2569 = vmatprep.mubr.bf16.mxu0 0
      %2570 = vmatmul.mubr.bf16.gmra.mrb[0].mxu0 %v2462
      %v2571 = vpop.f32.mrb[0].mxu0
      %v2572 = vadd.f32 0.0, %v2571
      %v2573 = vpop.f32.mrb[0].mxu0
      %v2574 = vpop.f32.mrb[0].mxu0
      %v2575 = vadd.f32 0.0, %v2574
      %v2576 = vpop.f32.mrb[0].mxu0
      %2577 = vmatprep.mubr.bf16.mxu0 0
      %2578 = vmatmul.mubr.bf16.gmra.mrb[0].mxu0 %v2465
      %v2579 = vpop.f32.mrb[0].mxu0
      %v2580 = vadd.f32 0.0, %v2579
      %v2581 = vpop.f32.mrb[0].mxu0
      %v2582 = vpop.f32.mrb[0].mxu0
      %v2583 = vadd.f32 0.0, %v2582
      %v2584 = vpop.f32.mrb[0].mxu0
      %2585 = vmatprep.mubr.bf16.mxu0 0
      %2586 = vmatmul.mubr.bf16.gmra.mrb[0].mxu0 %v2468
      %v2587 = vpop.f32.mrb[0].mxu0
      %v2588 = vadd.f32 0.0, %v2587
      %v2589 = vpop.f32.mrb[0].mxu0
      %v2590 = vpop.f32.mrb[0].mxu0
      %v2591 = vadd.f32 0.0, %v2590
      %v2592 = vpop.f32.mrb[0].mxu0
      %2593 = vmatprep.mubr.bf16.mxu0 0
      %2594 = vmatmul.mubr.bf16.gmra.mrb[0].mxu0 %v2471
      %v2595 = vpop.f32.mrb[0].mxu0
      %v2596 = vadd.f32 0.0, %v2595
      %v2597 = vpop.f32.mrb[0].mxu0
      %v2598 = vpop.f32.mrb[0].mxu0
      %v2599 = vadd.f32 0.0, %v2598
      %v2600 = vpop.f32.mrb[0].mxu0
      %2601 = vmatprep.mubr.bf16.mxu0 0
      %2602 = vmatmul.mubr.bf16.gmra.mrb[0].mxu0 %v2474
      %v2603 = vpop.f32.mrb[0].mxu0
      %v2604 = vadd.f32 0.0, %v2603
      %v2605 = vpop.f32.mrb[0].mxu0
      %v2606 = vpop.f32.mrb[0].mxu0
      %v2607 = vadd.f32 0.0, %v2606
      %v2608 = vpop.f32.mrb[0].mxu0
      %2609 = vmatprep.mubr.bf16.mxu0 0
      %2610 = vmatmul.mubr.bf16.gmra.mrb[0].mxu0 %v2477
      %v2611 = vpop.f32.mrb[0].mxu0
      %v2612 = vadd.f32 0.0, %v2611
      %v2613 = vpop.f32.mrb[0].mxu0
      %v2614 = vpop.f32.mrb[0].mxu0
      %v2615 = vadd.f32 0.0, %v2614
      %v2616 = vpop.f32.mrb[0].mxu0
      %2617 = vmatprep.mubr.bf16.mxu0 0
      %2618 = vmatmul.mubr.bf16.gmra.mrb[0].mxu0 %v2480
      %v2619 = vpop.f32.mrb[0].mxu0
      %v2620 = vadd.f32 0.0, %v2619
      %v2621 = vpop.f32.mrb[0].mxu0
      %v2622 = vpop.f32.mrb[0].mxu0
      %v2623 = vadd.f32 0.0, %v2622
      %v2624 = vpop.f32.mrb[0].mxu0
      %2625 = vmatprep.mubr.bf16.mxu0 0
      %2626 = vmatmul.mubr.bf16.gmra.mrb[0].mxu0 %v2483
      %v2627 = vpop.f32.mrb[0].mxu0
      %v2628 = vadd.f32 0.0, %v2627
      %v2629 = vpop.f32.mrb[0].mxu0
      %v2630 = vpop.f32.mrb[0].mxu0
      %v2631 = vadd.f32 0.0, %v2630
      %v2632 = vpop.f32.mrb[0].mxu0
      %2633 = vmatprep.mubr.bf16.mxu0 0
      %2634 = vmatmul.mubr.bf16.gmra.mrb[0].mxu0 %v2486
      %v2635 = vpop.f32.mrb[0].mxu0
      %v2636 = vadd.f32 0.0, %v2635
      %v2637 = vpop.f32.mrb[0].mxu0
      %v2638 = vpop.f32.mrb[0].mxu0
      %v2639 = vadd.f32 0.0, %v2638
      %v2640 = vpop.f32.mrb[0].mxu0
      %2641 = vmatprep.mubr.bf16.mxu0 0
      %2642 = vmatmul.mubr.bf16.gmra.mrb[0].mxu0 %v2489
      %v2643 = vpop.f32.mrb[0].mxu0
      %v2644 = vadd.f32 0.0, %v2643
      %v2645 = vpop.f32.mrb[0].mxu0
      %v2646 = vpop.f32.mrb[0].mxu0
      %v2647 = vadd.f32 0.0, %v2646
      %v2648 = vpop.f32.mrb[0].mxu0
      %2649 = vmatprep.mubr.bf16.mxu0 0
      %2650 = vmatmul.mubr.bf16.gmra.mrb[0].mxu0 %v2492
      %v2651 = vpop.f32.mrb[0].mxu0
      %v2652 = vadd.f32 0.0, %v2651
      %v2653 = vpop.f32.mrb[0].mxu0
      %v2654 = vpop.f32.mrb[0].mxu0
      %v2655 = vadd.f32 0.0, %v2654
      %v2656 = vpop.f32.mrb[0].mxu0
      %2657 = vdwg.mxu0
      %v2658 = vadd.f32 %v2364, %v2532
      %v2659 = vadd.f32 %v2365, %v2535
      %v2660 = vadd.f32 %v2366, %v2540
      %v2661 = vadd.f32 %v2367, %v2543
      %v2662 = vadd.f32 %v2368, %v2548
      %v2663 = vadd.f32 %v2369, %v2551
      %v2664 = vadd.f32 %v2370, %v2556
      %v2665 = vadd.f32 %v2371, %v2559
      %v2666 = vadd.f32 %v2372, %v2564
      %v2667 = vadd.f32 %v2373, %v2567
      %v2668 = vadd.f32 %v2374, %v2572
      %v2669 = vadd.f32 %v2375, %v2575
      %v2670 = vadd.f32 %v2376, %v2580
      %v2671 = vadd.f32 %v2377, %v2583
      %v2672 = vadd.f32 %v2378, %v2588
      %v2673 = vadd.f32 %v2379, %v2591
      %v2674 = vadd.f32 %v2380, %v2596
      %v2675 = vadd.f32 %v2381, %v2599
      %v2676 = vadd.f32 %v2382, %v2604
      %v2677 = vadd.f32 %v2383, %v2607
      %v2678 = vadd.f32 %v2384, %v2612
      %v2679 = vadd.f32 %v2385, %v2615
      %v2680 = vadd.f32 %v2386, %v2620
      %v2681 = vadd.f32 %v2387, %v2623
      %v2682 = vadd.f32 %v2388, %v2628
      %v2683 = vadd.f32 %v2389, %v2631
      %v2684 = vadd.f32 %v2390, %v2636
      %v2685 = vadd.f32 %v2391, %v2639
      %v2686 = vadd.f32 %v2392, %v2644
      %v2687 = vadd.f32 %v2393, %v2647
      %v2688 = vadd.f32 %v2394, %v2652
      %v2689 = vadd.f32 %v2395, %v2655
      %v2690 = vld [vmem:[%s2101 + $0x2] sm:$0xff]
      %v2691 = vld [vmem:[%s2101 + $0xa] sm:$0xff]
      %v2692 = vld [vmem:[%s2101 + $0x1a] sm:$0xff]
      %v2693 = vld [vmem:[%s2101 + $0x22] sm:$0xff]
      %v2694 = vld [vmem:[%s2101 + $0x32] sm:$0xff]
      %v2695 = vld [vmem:[%s2101 + $0x3a] sm:$0xff]
      %v2696 = vld [vmem:[%s2101 + $0x4a] sm:$0xff]
      %v2697 = vld [vmem:[%s2101 + $0x52] sm:$0xff]
      %v2698 = vld [vmem:[%s2101 + $0x62] sm:$0xff]
      %v2699 = vld [vmem:[%s2101 + $0x6a] sm:$0xff]
      %v2700 = vld [vmem:[%s2101 + $0x7a] sm:$0xff]
      %v2701 = vld [vmem:[%s2101 + $0x82] sm:$0xff]
      %v2702 = vld [vmem:[%s2101 + $0x92] sm:$0xff]
      %v2703 = vld [vmem:[%s2101 + $0x9a] sm:$0xff]
      %v2704 = vld [vmem:[%s2101 + $0xaa] sm:$0xff]
      %v2705 = vld [vmem:[%s2101 + $0xb2] sm:$0xff]
      %v2706 = vld [vmem:[%s2101 + $0xc2] sm:$0xff]
      %v2707 = vld [vmem:[%s2101 + $0xca] sm:$0xff]
      %v2708 = vld [vmem:[%s2101 + $0xda] sm:$0xff]
      %v2709 = vld [vmem:[%s2101 + $0xe2] sm:$0xff]
      %v2710 = vld [vmem:[%s2101 + $0xf2] sm:$0xff]
      %v2711 = vld [vmem:[%s2101 + $0xfa] sm:$0xff]
      %v2712 = vld [vmem:[%s2101 + $0x10a] sm:$0xff]
      %v2713 = vld [vmem:[%s2101 + $0x112] sm:$0xff]
      %v2714 = vld [vmem:[%s2101 + $0x122] sm:$0xff]
      %v2715 = vld [vmem:[%s2101 + $0x12a] sm:$0xff]
      %v2716 = vld [vmem:[%s2101 + $0x13a] sm:$0xff]
      %v2717 = vld [vmem:[%s2101 + $0x142] sm:$0xff]
      %v2718 = vld [vmem:[%s2101 + $0x152] sm:$0xff]
      %v2719 = vld [vmem:[%s2101 + $0x15a] sm:$0xff]
      %v2720 = vld [vmem:[%s2101 + $0x16a] sm:$0xff]
      %v2721 = vld [vmem:[%s2101 + $0x172] sm:$0xff]
      %v2722 = vpack.c.bf16 %v2691, %v2690
      %v2723 = vpack.c.bf16 %v2693, %v2692
      %v2724 = vpack.c.bf16 %v2695, %v2694
      %v2725 = vpack.c.bf16 %v2697, %v2696
      %v2726 = vpack.c.bf16 %v2699, %v2698
      %v2727 = vpack.c.bf16 %v2701, %v2700
      %v2728 = vpack.c.bf16 %v2703, %v2702
      %v2729 = vpack.c.bf16 %v2705, %v2704
      %v2730 = vpack.c.bf16 %v2707, %v2706
      %v2731 = vpack.c.bf16 %v2709, %v2708
      %v2732 = vpack.c.bf16 %v2711, %v2710
      %v2733 = vpack.c.bf16 %v2713, %v2712
      %v2734 = vpack.c.bf16 %v2715, %v2714
      %v2735 = vpack.c.bf16 %v2717, %v2716
      %v2736 = vpack.c.bf16 %v2719, %v2718
      %v2737 = vpack.c.bf16 %v2721, %v2720
      %s2738 = scalar_lea.vmem %s1, 32
      %v2739 = vld [vmem:[%s2738] sm:$0xf]
      %v2741 = vsel %vm226, %v2722, 0
      %v2744 = vsel %vm226, %v2723, 0
      %v2747 = vsel %vm226, %v2724, 0
      %v2750 = vsel %vm226, %v2725, 0
      %v2753 = vsel %vm226, %v2726, 0
      %v2756 = vsel %vm226, %v2727, 0
      %v2759 = vsel %vm226, %v2728, 0
      %v2762 = vsel %vm226, %v2729, 0
      %v2765 = vsel %vm226, %v2730, 0
      %v2768 = vsel %vm226, %v2731, 0
      %v2771 = vsel %vm226, %v2732, 0
      %v2774 = vsel %vm226, %v2733, 0
      %v2777 = vsel %vm226, %v2734, 0
      %v2780 = vsel %vm226, %v2735, 0
      %v2783 = vsel %vm226, %v2736, 0
      %v2786 = vsel %vm226, %v2737, 0
      %v2789 = vsel %vm548, %v2739, 0
      %2791 = vmatprep.subr.bf16.mxu0 0
      %2792 = vmatpush1.bf16.msra.mxu0 %v2789
      %2793 = vmatprep.subr.bf16.mxu0 0
      %2794 = vmatpush1.bf16.msra.mxu0 0
      %2795 = vmatprep.subr.bf16.mxu0 0
      %2796 = vmatpush1.bf16.msra.mxu0 0
      %2797 = vmatprep.subr.bf16.mxu0 0
      %2798 = vmatpush1.bf16.msra.mxu0 0
      %2799 = vmatprep.subr.bf16.mxu0 0
      %2800 = vmatpush1.bf16.msra.mxu0 0
      %2801 = vmatprep.subr.bf16.mxu0 0
      %2802 = vmatpush1.bf16.msra.mxu0 0
      %2803 = vmatprep.subr.bf16.mxu0 0
      %2804 = vmatpush1.bf16.msra.mxu0 0
      %2805 = vmatprep.subr.bf16.mxu0 0
      %2806 = vmatpush1.bf16.msra.mxu0 0
      %2807 = vmatprep.subr.bf16.mxu0 0
      %2808 = vmatpush1.bf16.msra.mxu0 0
      %2809 = vmatprep.subr.bf16.mxu0 0
      %2810 = vmatpush1.bf16.msra.mxu0 0
      %2811 = vmatprep.subr.bf16.mxu0 0
      %2812 = vmatpush1.bf16.msra.mxu0 0
      %2813 = vmatprep.subr.bf16.mxu0 0
      %2814 = vmatpush1.bf16.msra.mxu0 0
      %2815 = vmatprep.subr.bf16.mxu0 0
      %2816 = vmatpush1.bf16.msra.mxu0 0
      %2817 = vmatprep.subr.bf16.mxu0 0
      %2818 = vmatpush1.bf16.msra.mxu0 0
      %2819 = vmatprep.subr.bf16.mxu0 0
      %2820 = vmatpush1.bf16.msra.mxu0 0
      %2821 = vmatprep.subr.bf16.mxu0 0
      %2822 = vmatpush1.bf16.msra.mxu0 0
      %2823 = vmatprep.mubr.bf16.mxu0 0
      %2824 = vmatmul.mubr.bf16.gmra.mrb[0].mxu0 %v2741
      %v2825 = vpop.f32.mrb[0].mxu0
      %v2826 = vadd.f32 0.0, %v2825
      %v2827 = vpop.f32.mrb[0].mxu0
      %v2828 = vpop.f32.mrb[0].mxu0
      %v2829 = vadd.f32 0.0, %v2828
      %v2830 = vpop.f32.mrb[0].mxu0
      %2831 = vmatprep.mubr.bf16.mxu0 0
      %2832 = vmatmul.mubr.bf16.gmra.mrb[0].mxu0 %v2744
      %v2833 = vpop.f32.mrb[0].mxu0
      %v2834 = vadd.f32 0.0, %v2833
      %v2835 = vpop.f32.mrb[0].mxu0
      %v2836 = vpop.f32.mrb[0].mxu0
      %v2837 = vadd.f32 0.0, %v2836
      %v2838 = vpop.f32.mrb[0].mxu0
      %2839 = vmatprep.mubr.bf16.mxu0 0
      %2840 = vmatmul.mubr.bf16.gmra.mrb[0].mxu0 %v2747
      %v2841 = vpop.f32.mrb[0].mxu0
      %v2842 = vadd.f32 0.0, %v2841
      %v2843 = vpop.f32.mrb[0].mxu0
      %v2844 = vpop.f32.mrb[0].mxu0
      %v2845 = vadd.f32 0.0, %v2844
      %v2846 = vpop.f32.mrb[0].mxu0
      %2847 = vmatprep.mubr.bf16.mxu0 0
      %2848 = vmatmul.mubr.bf16.gmra.mrb[0].mxu0 %v2750
      %v2849 = vpop.f32.mrb[0].mxu0
      %v2850 = vadd.f32 0.0, %v2849
      %v2851 = vpop.f32.mrb[0].mxu0
      %v2852 = vpop.f32.mrb[0].mxu0
      %v2853 = vadd.f32 0.0, %v2852
      %v2854 = vpop.f32.mrb[0].mxu0
      %2855 = vmatprep.mubr.bf16.mxu0 0
      %2856 = vmatmul.mubr.bf16.gmra.mrb[0].mxu0 %v2753
      %v2857 = vpop.f32.mrb[0].mxu0
      %v2858 = vadd.f32 0.0, %v2857
      %v2859 = vpop.f32.mrb[0].mxu0
      %v2860 = vpop.f32.mrb[0].mxu0
      %v2861 = vadd.f32 0.0, %v2860
      %v2862 = vpop.f32.mrb[0].mxu0
      %2863 = vmatprep.mubr.bf16.mxu0 0
      %2864 = vmatmul.mubr.bf16.gmra.mrb[0].mxu0 %v2756
      %v2865 = vpop.f32.mrb[0].mxu0
      %v2866 = vadd.f32 0.0, %v2865
      %v2867 = vpop.f32.mrb[0].mxu0
      %v2868 = vpop.f32.mrb[0].mxu0
      %v2869 = vadd.f32 0.0, %v2868
      %v2870 = vpop.f32.mrb[0].mxu0
      %2871 = vmatprep.mubr.bf16.mxu0 0
      %2872 = vmatmul.mubr.bf16.gmra.mrb[0].mxu0 %v2759
      %v2873 = vpop.f32.mrb[0].mxu0
      %v2874 = vadd.f32 0.0, %v2873
      %v2875 = vpop.f32.mrb[0].mxu0
      %v2876 = vpop.f32.mrb[0].mxu0
      %v2877 = vadd.f32 0.0, %v2876
      %v2878 = vpop.f32.mrb[0].mxu0
      %2879 = vmatprep.mubr.bf16.mxu0 0
      %2880 = vmatmul.mubr.bf16.gmra.mrb[0].mxu0 %v2762
      %v2881 = vpop.f32.mrb[0].mxu0
      %v2882 = vadd.f32 0.0, %v2881
      %v2883 = vpop.f32.mrb[0].mxu0
      %v2884 = vpop.f32.mrb[0].mxu0
      %v2885 = vadd.f32 0.0, %v2884
      %v2886 = vpop.f32.mrb[0].mxu0
      %2887 = vmatprep.mubr.bf16.mxu0 0
      %2888 = vmatmul.mubr.bf16.gmra.mrb[0].mxu0 %v2765
      %v2889 = vpop.f32.mrb[0].mxu0
      %v2890 = vadd.f32 0.0, %v2889
      %v2891 = vpop.f32.mrb[0].mxu0
      %v2892 = vpop.f32.mrb[0].mxu0
      %v2893 = vadd.f32 0.0, %v2892
      %v2894 = vpop.f32.mrb[0].mxu0
      %2895 = vmatprep.mubr.bf16.mxu0 0
      %2896 = vmatmul.mubr.bf16.gmra.mrb[0].mxu0 %v2768
      %v2897 = vpop.f32.mrb[0].mxu0
      %v2898 = vadd.f32 0.0, %v2897
      %v2899 = vpop.f32.mrb[0].mxu0
      %v2900 = vpop.f32.mrb[0].mxu0
      %v2901 = vadd.f32 0.0, %v2900
      %v2902 = vpop.f32.mrb[0].mxu0
      %2903 = vmatprep.mubr.bf16.mxu0 0
      %2904 = vmatmul.mubr.bf16.gmra.mrb[0].mxu0 %v2771
      %v2905 = vpop.f32.mrb[0].mxu0
      %v2906 = vadd.f32 0.0, %v2905
      %v2907 = vpop.f32.mrb[0].mxu0
      %v2908 = vpop.f32.mrb[0].mxu0
      %v2909 = vadd.f32 0.0, %v2908
      %v2910 = vpop.f32.mrb[0].mxu0
      %2911 = vmatprep.mubr.bf16.mxu0 0
      %2912 = vmatmul.mubr.bf16.gmra.mrb[0].mxu0 %v2774
      %v2913 = vpop.f32.mrb[0].mxu0
      %v2914 = vadd.f32 0.0, %v2913
      %v2915 = vpop.f32.mrb[0].mxu0
      %v2916 = vpop.f32.mrb[0].mxu0
      %v2917 = vadd.f32 0.0, %v2916
      %v2918 = vpop.f32.mrb[0].mxu0
      %2919 = vmatprep.mubr.bf16.mxu0 0
      %2920 = vmatmul.mubr.bf16.gmra.mrb[0].mxu0 %v2777
      %v2921 = vpop.f32.mrb[0].mxu0
      %v2922 = vadd.f32 0.0, %v2921
      %v2923 = vpop.f32.mrb[0].mxu0
      %v2924 = vpop.f32.mrb[0].mxu0
      %v2925 = vadd.f32 0.0, %v2924
      %v2926 = vpop.f32.mrb[0].mxu0
      %2927 = vmatprep.mubr.bf16.mxu0 0
      %2928 = vmatmul.mubr.bf16.gmra.mrb[0].mxu0 %v2780
      %v2929 = vpop.f32.mrb[0].mxu0
      %v2930 = vadd.f32 0.0, %v2929
      %v2931 = vpop.f32.mrb[0].mxu0
      %v2932 = vpop.f32.mrb[0].mxu0
      %v2933 = vadd.f32 0.0, %v2932
      %v2934 = vpop.f32.mrb[0].mxu0
      %2935 = vmatprep.mubr.bf16.mxu0 0
      %2936 = vmatmul.mubr.bf16.gmra.mrb[0].mxu0 %v2783
      %v2937 = vpop.f32.mrb[0].mxu0
      %v2938 = vadd.f32 0.0, %v2937
      %v2939 = vpop.f32.mrb[0].mxu0
      %v2940 = vpop.f32.mrb[0].mxu0
      %v2941 = vadd.f32 0.0, %v2940
      %v2942 = vpop.f32.mrb[0].mxu0
      %2943 = vmatprep.mubr.bf16.mxu0 0
      %2944 = vmatmul.mubr.bf16.gmra.mrb[0].mxu0 %v2786
      %v2945 = vpop.f32.mrb[0].mxu0
      %v2946 = vadd.f32 0.0, %v2945
      %v2947 = vpop.f32.mrb[0].mxu0
      %v2948 = vpop.f32.mrb[0].mxu0
      %v2949 = vadd.f32 0.0, %v2948
      %v2950 = vpop.f32.mrb[0].mxu0
      %2951 = vdwg.mxu0
      %v2952 = vadd.f32 %v2658, %v2826
      %v2953 = vadd.f32 %v2659, %v2829
      %v2954 = vadd.f32 %v2660, %v2834
      %v2955 = vadd.f32 %v2661, %v2837
      %v2956 = vadd.f32 %v2662, %v2842
      %v2957 = vadd.f32 %v2663, %v2845
      %v2958 = vadd.f32 %v2664, %v2850
      %v2959 = vadd.f32 %v2665, %v2853
      %v2960 = vadd.f32 %v2666, %v2858
      %v2961 = vadd.f32 %v2667, %v2861
      %v2962 = vadd.f32 %v2668, %v2866
      %v2963 = vadd.f32 %v2669, %v2869
      %v2964 = vadd.f32 %v2670, %v2874
      %v2965 = vadd.f32 %v2671, %v2877
      %v2966 = vadd.f32 %v2672, %v2882
      %v2967 = vadd.f32 %v2673, %v2885
      %v2968 = vadd.f32 %v2674, %v2890
      %v2969 = vadd.f32 %v2675, %v2893
      %v2970 = vadd.f32 %v2676, %v2898
      %v2971 = vadd.f32 %v2677, %v2901
      %v2972 = vadd.f32 %v2678, %v2906
      %v2973 = vadd.f32 %v2679, %v2909
      %v2974 = vadd.f32 %v2680, %v2914
      %v2975 = vadd.f32 %v2681, %v2917
      %v2976 = vadd.f32 %v2682, %v2922
      %v2977 = vadd.f32 %v2683, %v2925
      %v2978 = vadd.f32 %v2684, %v2930
      %v2979 = vadd.f32 %v2685, %v2933
      %v2980 = vadd.f32 %v2686, %v2938
      %v2981 = vadd.f32 %v2687, %v2941
      %v2982 = vadd.f32 %v2688, %v2946
      %v2983 = vadd.f32 %v2689, %v2949
      %v2984 = vld [vmem:[%s2] sm:$0x1]
      %v2986 = vlaneseq
      %v2987 = vshrl.u32 %v2986, 7
      %v2988 = vsub.s32 0, %v2987
      %v2989 = vrot.slane %v2984, %v2988
      %v2991 = vadd.f32 %v2952, %v2989
      %v2992 = vadd.f32 %v2953, %v2989
      %v2993 = vadd.f32 %v2954, %v2989
      %v2994 = vadd.f32 %v2955, %v2989
      %v2995 = vadd.f32 %v2956, %v2989
      %v2996 = vadd.f32 %v2957, %v2989
      %v2997 = vadd.f32 %v2958, %v2989
      %v2998 = vadd.f32 %v2959, %v2989
      %v2999 = vadd.f32 %v2960, %v2989
      %v3000 = vadd.f32 %v2961, %v2989
      %v3001 = vadd.f32 %v2962, %v2989
      %v3002 = vadd.f32 %v2963, %v2989
      %v3003 = vadd.f32 %v2964, %v2989
      %v3004 = vadd.f32 %v2965, %v2989
      %v3005 = vadd.f32 %v2966, %v2989
      %v3006 = vadd.f32 %v2967, %v2989
      %v3007 = vadd.f32 %v2968, %v2989
      %v3008 = vadd.f32 %v2969, %v2989
      %v3009 = vadd.f32 %v2970, %v2989
      %v3010 = vadd.f32 %v2971, %v2989
      %v3011 = vadd.f32 %v2972, %v2989
      %v3012 = vadd.f32 %v2973, %v2989
      %v3013 = vadd.f32 %v2974, %v2989
      %v3014 = vadd.f32 %v2975, %v2989
      %v3015 = vadd.f32 %v2976, %v2989
      %v3016 = vadd.f32 %v2977, %v2989
      %v3017 = vadd.f32 %v2978, %v2989
      %v3018 = vadd.f32 %v2979, %v2989
      %v3019 = vadd.f32 %v2980, %v2989
      %v3020 = vadd.f32 %v2981, %v2989
      %v3021 = vadd.f32 %v2982, %v2989
      %v3022 = vadd.f32 %v2983, %v2989
      %v3023 = vmax.f32 %v2991, 0.0
      %v3024 = vmax.f32 %v2992, 0.0
      %v3025 = vmax.f32 %v2993, 0.0
      %v3026 = vmax.f32 %v2994, 0.0
      %v3027 = vmax.f32 %v2995, 0.0
      %v3028 = vmax.f32 %v2996, 0.0
      %v3029 = vmax.f32 %v2997, 0.0
      %v3030 = vmax.f32 %v2998, 0.0
      %v3031 = vmax.f32 %v2999, 0.0
      %v3032 = vmax.f32 %v3000, 0.0
      %v3033 = vmax.f32 %v3001, 0.0
      %v3034 = vmax.f32 %v3002, 0.0
      %v3035 = vmax.f32 %v3003, 0.0
      %v3036 = vmax.f32 %v3004, 0.0
      %v3037 = vmax.f32 %v3005, 0.0
      %v3038 = vmax.f32 %v3006, 0.0
      %v3039 = vmax.f32 %v3007, 0.0
      %v3040 = vmax.f32 %v3008, 0.0
      %v3041 = vmax.f32 %v3009, 0.0
      %v3042 = vmax.f32 %v3010, 0.0
      %v3043 = vmax.f32 %v3011, 0.0
      %v3044 = vmax.f32 %v3012, 0.0
      %v3045 = vmax.f32 %v3013, 0.0
      %v3046 = vmax.f32 %v3014, 0.0
      %v3047 = vmax.f32 %v3015, 0.0
      %v3048 = vmax.f32 %v3016, 0.0
      %v3049 = vmax.f32 %v3017, 0.0
      %v3050 = vmax.f32 %v3018, 0.0
      %v3051 = vmax.f32 %v3019, 0.0
      %v3052 = vmax.f32 %v3020, 0.0
      %v3053 = vmax.f32 %v3021, 0.0
      %v3054 = vmax.f32 %v3022, 0.0
      %s3055 = scalar_lea.vmem [#allocation3], 24
      %3056 = vst.msk [vmem:[%s3055 + $0x1] sm:$0xff] %vm226, %v3023
      %3057 = vst.msk [vmem:[%s3055 + $0x9] sm:$0xff] %vm226, %v3024
      %3058 = vst.msk [vmem:[%s3055 + $0x19] sm:$0xff] %vm226, %v3025
      %3059 = vst.msk [vmem:[%s3055 + $0x21] sm:$0xff] %vm226, %v3026
      %3060 = vst.msk [vmem:[%s3055 + $0x31] sm:$0xff] %vm226, %v3027
      %3061 = vst.msk [vmem:[%s3055 + $0x39] sm:$0xff] %vm226, %v3028
      %3062 = vst.msk [vmem:[%s3055 + $0x49] sm:$0xff] %vm226, %v3029
      %3063 = vst.msk [vmem:[%s3055 + $0x51] sm:$0xff] %vm226, %v3030
      %3064 = vst.msk [vmem:[%s3055 + $0x61] sm:$0xff] %vm226, %v3031
      %3065 = vst.msk [vmem:[%s3055 + $0x69] sm:$0xff] %vm226, %v3032
      %3066 = vst.msk [vmem:[%s3055 + $0x79] sm:$0xff] %vm226, %v3033
      %3067 = vst.msk [vmem:[%s3055 + $0x81] sm:$0xff] %vm226, %v3034
      %3068 = vst.msk [vmem:[%s3055 + $0x91] sm:$0xff] %vm226, %v3035
      %3069 = vst.msk [vmem:[%s3055 + $0x99] sm:$0xff] %vm226, %v3036
      %3070 = vst.msk [vmem:[%s3055 + $0xa9] sm:$0xff] %vm226, %v3037
      %3071 = vst.msk [vmem:[%s3055 + $0xb1] sm:$0xff] %vm226, %v3038
      %3072 = vst.msk [vmem:[%s3055 + $0xc1] sm:$0xff] %vm226, %v3039
      %3073 = vst.msk [vmem:[%s3055 + $0xc9] sm:$0xff] %vm226, %v3040
      %3074 = vst.msk [vmem:[%s3055 + $0xd9] sm:$0xff] %vm226, %v3041
      %3075 = vst.msk [vmem:[%s3055 + $0xe1] sm:$0xff] %vm226, %v3042
      %3076 = vst.msk [vmem:[%s3055 + $0xf1] sm:$0xff] %vm226, %v3043
      %3077 = vst.msk [vmem:[%s3055 + $0xf9] sm:$0xff] %vm226, %v3044
      %3078 = vst.msk [vmem:[%s3055 + $0x109] sm:$0xff] %vm226, %v3045
      %3079 = vst.msk [vmem:[%s3055 + $0x111] sm:$0xff] %vm226, %v3046
      %3080 = vst.msk [vmem:[%s3055 + $0x121] sm:$0xff] %vm226, %v3047
      %3081 = vst.msk [vmem:[%s3055 + $0x129] sm:$0xff] %vm226, %v3048
      %3082 = vst.msk [vmem:[%s3055 + $0x139] sm:$0xff] %vm226, %v3049
      %3083 = vst.msk [vmem:[%s3055 + $0x141] sm:$0xff] %vm226, %v3050
      %3084 = vst.msk [vmem:[%s3055 + $0x151] sm:$0xff] %vm226, %v3051
      %3085 = vst.msk [vmem:[%s3055 + $0x159] sm:$0xff] %vm226, %v3052
      %3086 = vst.msk [vmem:[%s3055 + $0x169] sm:$0xff] %vm226, %v3053
      %3087 = vst.msk [vmem:[%s3055 + $0x171] sm:$0xff] %vm226, %v3054
      %v3088 = vld [vmem:[#allocation3] sm:$0xff]
      %v3089 = vld [vmem:[#allocation3 + $0x8] sm:$0xff]
      %v3090 = vld [vmem:[#allocation3 + $0x18] sm:$0xff]
      %v3091 = vld [vmem:[#allocation3 + $0x20] sm:$0xff]
      %v3092 = vld [vmem:[#allocation3 + $0x30] sm:$0xff]
      %v3093 = vld [vmem:[#allocation3 + $0x38] sm:$0xff]
      %v3094 = vld [vmem:[#allocation3 + $0x48] sm:$0xff]
      %v3095 = vld [vmem:[#allocation3 + $0x50] sm:$0xff]
      %v3096 = vld [vmem:[#allocation3 + $0x60] sm:$0xff]
      %v3097 = vld [vmem:[#allocation3 + $0x68] sm:$0xff]
      %v3098 = vld [vmem:[#allocation3 + $0x78] sm:$0xff]
      %v3099 = vld [vmem:[#allocation3 + $0x80] sm:$0xff]
      %v3100 = vld [vmem:[#allocation3 + $0x90] sm:$0xff]
      %v3101 = vld [vmem:[#allocation3 + $0x98] sm:$0xff]
      %v3102 = vld [vmem:[#allocation3 + $0xa8] sm:$0xff]
      %v3103 = vld [vmem:[#allocation3 + $0xb0] sm:$0xff]
      %v3104 = vld [vmem:[#allocation3 + $0xc0] sm:$0xff]
      %v3105 = vld [vmem:[#allocation3 + $0xc8] sm:$0xff]
      %v3106 = vld [vmem:[#allocation3 + $0xd8] sm:$0xff]
      %v3107 = vld [vmem:[#allocation3 + $0xe0] sm:$0xff]
      %v3108 = vld [vmem:[#allocation3 + $0xf0] sm:$0xff]
      %v3109 = vld [vmem:[#allocation3 + $0xf8] sm:$0xff]
      %v3110 = vld [vmem:[#allocation3 + $0x108] sm:$0xff]
      %v3111 = vld [vmem:[#allocation3 + $0x110] sm:$0xff]
      %v3112 = vld [vmem:[#allocation3 + $0x120] sm:$0xff]
      %v3113 = vld [vmem:[#allocation3 + $0x128] sm:$0xff]
      %v3114 = vld [vmem:[#allocation3 + $0x138] sm:$0xff]
      %v3115 = vld [vmem:[#allocation3 + $0x140] sm:$0xff]
      %v3116 = vld [vmem:[#allocation3 + $0x150] sm:$0xff]
      %v3117 = vld [vmem:[#allocation3 + $0x158] sm:$0xff]
      %v3118 = vld [vmem:[#allocation3 + $0x168] sm:$0xff]
      %v3119 = vld [vmem:[#allocation3 + $0x170] sm:$0xff]
      %v3120 = vpack.c.bf16 %v3089, %v3088
      %v3121 = vpack.c.bf16 %v3091, %v3090
      %v3122 = vpack.c.bf16 %v3093, %v3092
      %v3123 = vpack.c.bf16 %v3095, %v3094
      %v3124 = vpack.c.bf16 %v3097, %v3096
      %v3125 = vpack.c.bf16 %v3099, %v3098
      %v3126 = vpack.c.bf16 %v3101, %v3100
      %v3127 = vpack.c.bf16 %v3103, %v3102
      %v3128 = vpack.c.bf16 %v3105, %v3104
      %v3129 = vpack.c.bf16 %v3107, %v3106
      %v3130 = vpack.c.bf16 %v3109, %v3108
      %v3131 = vpack.c.bf16 %v3111, %v3110
      %v3132 = vpack.c.bf16 %v3113, %v3112
      %v3133 = vpack.c.bf16 %v3115, %v3114
      %v3134 = vpack.c.bf16 %v3117, %v3116
      %v3135 = vpack.c.bf16 %v3119, %v3118
      %v3136 = vld [vmem:[%s3] sm:$0xf]
      %v3137 = vld [vmem:[#allocation3 + $0x1] sm:$0xff]
      %v3138 = vld [vmem:[#allocation3 + $0x9] sm:$0xff]
      %v3139 = vld [vmem:[#allocation3 + $0x19] sm:$0xff]
      %v3140 = vld [vmem:[#allocation3 + $0x21] sm:$0xff]
      %v3141 = vld [vmem:[#allocation3 + $0x31] sm:$0xff]
      %v3142 = vld [vmem:[#allocation3 + $0x39] sm:$0xff]
      %v3143 = vld [vmem:[#allocation3 + $0x49] sm:$0xff]
      %v3144 = vld [vmem:[#allocation3 + $0x51] sm:$0xff]
      %v3145 = vld [vmem:[#allocation3 + $0x61] sm:$0xff]
      %v3146 = vld [vmem:[#allocation3 + $0x69] sm:$0xff]
      %v3147 = vld [vmem:[#allocation3 + $0x79] sm:$0xff]
      %v3148 = vld [vmem:[#allocation3 + $0x81] sm:$0xff]
      %v3149 = vld [vmem:[#allocation3 + $0x91] sm:$0xff]
      %v3150 = vld [vmem:[#allocation3 + $0x99] sm:$0xff]
      %v3151 = vld [vmem:[#allocation3 + $0xa9] sm:$0xff]
      %v3152 = vld [vmem:[#allocation3 + $0xb1] sm:$0xff]
      %v3153 = vld [vmem:[#allocation3 + $0xc1] sm:$0xff]
      %v3154 = vld [vmem:[#allocation3 + $0xc9] sm:$0xff]
      %v3155 = vld [vmem:[#allocation3 + $0xd9] sm:$0xff]
      %v3156 = vld [vmem:[#allocation3 + $0xe1] sm:$0xff]
      %v3157 = vld [vmem:[#allocation3 + $0xf1] sm:$0xff]
      %v3158 = vld [vmem:[#allocation3 + $0xf9] sm:$0xff]
      %v3159 = vld [vmem:[#allocation3 + $0x109] sm:$0xff]
      %v3160 = vld [vmem:[#allocation3 + $0x111] sm:$0xff]
      %v3161 = vld [vmem:[#allocation3 + $0x121] sm:$0xff]
      %v3162 = vld [vmem:[#allocation3 + $0x129] sm:$0xff]
      %v3163 = vld [vmem:[#allocation3 + $0x139] sm:$0xff]
      %v3164 = vld [vmem:[#allocation3 + $0x141] sm:$0xff]
      %v3165 = vld [vmem:[#allocation3 + $0x151] sm:$0xff]
      %v3166 = vld [vmem:[#allocation3 + $0x159] sm:$0xff]
      %v3167 = vld [vmem:[#allocation3 + $0x169] sm:$0xff]
      %v3168 = vld [vmem:[#allocation3 + $0x171] sm:$0xff]
      %v3169 = vpack.c.bf16 %v3138, %v3137
      %v3170 = vpack.c.bf16 %v3140, %v3139
      %v3171 = vpack.c.bf16 %v3142, %v3141
      %v3172 = vpack.c.bf16 %v3144, %v3143
      %v3173 = vpack.c.bf16 %v3146, %v3145
      %v3174 = vpack.c.bf16 %v3148, %v3147
      %v3175 = vpack.c.bf16 %v3150, %v3149
      %v3176 = vpack.c.bf16 %v3152, %v3151
      %v3177 = vpack.c.bf16 %v3154, %v3153
      %v3178 = vpack.c.bf16 %v3156, %v3155
      %v3179 = vpack.c.bf16 %v3158, %v3157
      %v3180 = vpack.c.bf16 %v3160, %v3159
      %v3181 = vpack.c.bf16 %v3162, %v3161
      %v3182 = vpack.c.bf16 %v3164, %v3163
      %v3183 = vpack.c.bf16 %v3166, %v3165
      %v3184 = vpack.c.bf16 %v3168, %v3167
      %s3185 = scalar_lea.vmem %s3, 4
      %v3186 = vld [vmem:[%s3185] sm:$0xf]
      %v3188 = vsel %vm226, %v3169, 0
      %v3191 = vsel %vm226, %v3170, 0
      %v3194 = vsel %vm226, %v3171, 0
      %v3197 = vsel %vm226, %v3172, 0
      %v3200 = vsel %vm226, %v3173, 0
      %v3203 = vsel %vm226, %v3174, 0
      %v3206 = vsel %vm226, %v3175, 0
      %v3209 = vsel %vm226, %v3176, 0
      %v3212 = vsel %vm226, %v3177, 0
      %v3215 = vsel %vm226, %v3178, 0
      %v3218 = vsel %vm226, %v3179, 0
      %v3221 = vsel %vm226, %v3180, 0
      %v3224 = vsel %vm226, %v3181, 0
      %v3227 = vsel %vm226, %v3182, 0
      %v3230 = vsel %vm226, %v3183, 0
      %v3233 = vsel %vm226, %v3184, 0
      %v3236 = vsel %vm548, %v3186, 0
      %3238 = vmatprep.subr.bf16.mxu0 0
      %3239 = vmatpush1.bf16.msra.mxu0 %v3236
      %3240 = vmatprep.subr.bf16.mxu0 0
      %3241 = vmatpush1.bf16.msra.mxu0 0
      %3242 = vmatprep.subr.bf16.mxu0 0
      %3243 = vmatpush1.bf16.msra.mxu0 0
      %3244 = vmatprep.subr.bf16.mxu0 0
      %3245 = vmatpush1.bf16.msra.mxu0 0
      %3246 = vmatprep.subr.bf16.mxu0 0
      %3247 = vmatpush1.bf16.msra.mxu0 0
      %3248 = vmatprep.subr.bf16.mxu0 0
      %3249 = vmatpush1.bf16.msra.mxu0 0
      %3250 = vmatprep.subr.bf16.mxu0 0
      %3251 = vmatpush1.bf16.msra.mxu0 0
      %3252 = vmatprep.subr.bf16.mxu0 0
      %3253 = vmatpush1.bf16.msra.mxu0 0
      %3254 = vmatprep.subr.bf16.mxu0 0
      %3255 = vmatpush1.bf16.msra.mxu0 0
      %3256 = vmatprep.subr.bf16.mxu0 0
      %3257 = vmatpush1.bf16.msra.mxu0 0
      %3258 = vmatprep.subr.bf16.mxu0 0
      %3259 = vmatpush1.bf16.msra.mxu0 0
      %3260 = vmatprep.subr.bf16.mxu0 0
      %3261 = vmatpush1.bf16.msra.mxu0 0
      %3262 = vmatprep.subr.bf16.mxu0 0
      %3263 = vmatpush1.bf16.msra.mxu0 0
      %3264 = vmatprep.subr.bf16.mxu0 0
      %3265 = vmatpush1.bf16.msra.mxu0 0
      %3266 = vmatprep.subr.bf16.mxu0 0
      %3267 = vmatpush1.bf16.msra.mxu0 0
      %3268 = vmatprep.subr.bf16.mxu0 0
      %3269 = vmatpush1.bf16.msra.mxu0 0
      %3270 = vmatprep.mubr.bf16.mxu0 0
      %3271 = vmatmul.mubr.bf16.gmra.mrb[0].mxu0 %v3188
      %v3272 = vpop.f32.mrb[0].mxu0
      %v3273 = vadd.f32 0.0, %v3272
      %v3274 = vpop.f32.mrb[0].mxu0
      %v3275 = vpop.f32.mrb[0].mxu0
      %v3276 = vadd.f32 0.0, %v3275
      %v3277 = vpop.f32.mrb[0].mxu0
      %3278 = vmatprep.mubr.bf16.mxu0 0
      %3279 = vmatmul.mubr.bf16.gmra.mrb[0].mxu0 %v3191
      %v3280 = vpop.f32.mrb[0].mxu0
      %v3281 = vadd.f32 0.0, %v3280
      %v3282 = vpop.f32.mrb[0].mxu0
      %v3283 = vpop.f32.mrb[0].mxu0
      %v3284 = vadd.f32 0.0, %v3283
      %v3285 = vpop.f32.mrb[0].mxu0
      %3286 = vmatprep.mubr.bf16.mxu0 0
      %3287 = vmatmul.mubr.bf16.gmra.mrb[0].mxu0 %v3194
      %v3288 = vpop.f32.mrb[0].mxu0
      %v3289 = vadd.f32 0.0, %v3288
      %v3290 = vpop.f32.mrb[0].mxu0
      %v3291 = vpop.f32.mrb[0].mxu0
      %v3292 = vadd.f32 0.0, %v3291
      %v3293 = vpop.f32.mrb[0].mxu0
      %3294 = vmatprep.mubr.bf16.mxu0 0
      %3295 = vmatmul.mubr.bf16.gmra.mrb[0].mxu0 %v3197
      %v3296 = vpop.f32.mrb[0].mxu0
      %v3297 = vadd.f32 0.0, %v3296
      %v3298 = vpop.f32.mrb[0].mxu0
      %v3299 = vpop.f32.mrb[0].mxu0
      %v3300 = vadd.f32 0.0, %v3299
      %v3301 = vpop.f32.mrb[0].mxu0
      %3302 = vmatprep.mubr.bf16.mxu0 0
      %3303 = vmatmul.mubr.bf16.gmra.mrb[0].mxu0 %v3200
      %v3304 = vpop.f32.mrb[0].mxu0
      %v3305 = vadd.f32 0.0, %v3304
      %v3306 = vpop.f32.mrb[0].mxu0
      %v3307 = vpop.f32.mrb[0].mxu0
      %v3308 = vadd.f32 0.0, %v3307
      %v3309 = vpop.f32.mrb[0].mxu0
      %3310 = vmatprep.mubr.bf16.mxu0 0
      %3311 = vmatmul.mubr.bf16.gmra.mrb[0].mxu0 %v3203
      %v3312 = vpop.f32.mrb[0].mxu0
      %v3313 = vadd.f32 0.0, %v3312
      %v3314 = vpop.f32.mrb[0].mxu0
      %v3315 = vpop.f32.mrb[0].mxu0
      %v3316 = vadd.f32 0.0, %v3315
      %v3317 = vpop.f32.mrb[0].mxu0
      %3318 = vmatprep.mubr.bf16.mxu0 0
      %3319 = vmatmul.mubr.bf16.gmra.mrb[0].mxu0 %v3206
      %v3320 = vpop.f32.mrb[0].mxu0
      %v3321 = vadd.f32 0.0, %v3320
      %v3322 = vpop.f32.mrb[0].mxu0
      %v3323 = vpop.f32.mrb[0].mxu0
      %v3324 = vadd.f32 0.0, %v3323
      %v3325 = vpop.f32.mrb[0].mxu0
      %3326 = vmatprep.mubr.bf16.mxu0 0
      %3327 = vmatmul.mubr.bf16.gmra.mrb[0].mxu0 %v3209
      %v3328 = vpop.f32.mrb[0].mxu0
      %v3329 = vadd.f32 0.0, %v3328
      %v3330 = vpop.f32.mrb[0].mxu0
      %v3331 = vpop.f32.mrb[0].mxu0
      %v3332 = vadd.f32 0.0, %v3331
      %v3333 = vpop.f32.mrb[0].mxu0
      %3334 = vmatprep.mubr.bf16.mxu0 0
      %3335 = vmatmul.mubr.bf16.gmra.mrb[0].mxu0 %v3212
      %v3336 = vpop.f32.mrb[0].mxu0
      %v3337 = vadd.f32 0.0, %v3336
      %v3338 = vpop.f32.mrb[0].mxu0
      %v3339 = vpop.f32.mrb[0].mxu0
      %v3340 = vadd.f32 0.0, %v3339
      %v3341 = vpop.f32.mrb[0].mxu0
      %3342 = vmatprep.mubr.bf16.mxu0 0
      %3343 = vmatmul.mubr.bf16.gmra.mrb[0].mxu0 %v3215
      %v3344 = vpop.f32.mrb[0].mxu0
      %v3345 = vadd.f32 0.0, %v3344
      %v3346 = vpop.f32.mrb[0].mxu0
      %v3347 = vpop.f32.mrb[0].mxu0
      %v3348 = vadd.f32 0.0, %v3347
      %v3349 = vpop.f32.mrb[0].mxu0
      %3350 = vmatprep.mubr.bf16.mxu0 0
      %3351 = vmatmul.mubr.bf16.gmra.mrb[0].mxu0 %v3218
      %v3352 = vpop.f32.mrb[0].mxu0
      %v3353 = vadd.f32 0.0, %v3352
      %v3354 = vpop.f32.mrb[0].mxu0
      %v3355 = vpop.f32.mrb[0].mxu0
      %v3356 = vadd.f32 0.0, %v3355
      %v3357 = vpop.f32.mrb[0].mxu0
      %3358 = vmatprep.mubr.bf16.mxu0 0
      %3359 = vmatmul.mubr.bf16.gmra.mrb[0].mxu0 %v3221
      %v3360 = vpop.f32.mrb[0].mxu0
      %v3361 = vadd.f32 0.0, %v3360
      %v3362 = vpop.f32.mrb[0].mxu0
      %v3363 = vpop.f32.mrb[0].mxu0
      %v3364 = vadd.f32 0.0, %v3363
      %v3365 = vpop.f32.mrb[0].mxu0
      %3366 = vmatprep.mubr.bf16.mxu0 0
      %3367 = vmatmul.mubr.bf16.gmra.mrb[0].mxu0 %v3224
      %v3368 = vpop.f32.mrb[0].mxu0
      %v3369 = vadd.f32 0.0, %v3368
      %v3370 = vpop.f32.mrb[0].mxu0
      %v3371 = vpop.f32.mrb[0].mxu0
      %v3372 = vadd.f32 0.0, %v3371
      %v3373 = vpop.f32.mrb[0].mxu0
      %3374 = vmatprep.mubr.bf16.mxu0 0
      %3375 = vmatmul.mubr.bf16.gmra.mrb[0].mxu0 %v3227
      %v3376 = vpop.f32.mrb[0].mxu0
      %v3377 = vadd.f32 0.0, %v3376
      %v3378 = vpop.f32.mrb[0].mxu0
      %v3379 = vpop.f32.mrb[0].mxu0
      %v3380 = vadd.f32 0.0, %v3379
      %v3381 = vpop.f32.mrb[0].mxu0
      %3382 = vmatprep.mubr.bf16.mxu0 0
      %3383 = vmatmul.mubr.bf16.gmra.mrb[0].mxu0 %v3230
      %v3384 = vpop.f32.mrb[0].mxu0
      %v3385 = vadd.f32 0.0, %v3384
      %v3386 = vpop.f32.mrb[0].mxu0
      %v3387 = vpop.f32.mrb[0].mxu0
      %v3388 = vadd.f32 0.0, %v3387
      %v3389 = vpop.f32.mrb[0].mxu0
      %3390 = vmatprep.mubr.bf16.mxu0 0
      %3391 = vmatmul.mubr.bf16.gmra.mrb[0].mxu0 %v3233
      %v3392 = vpop.f32.mrb[0].mxu0
      %v3393 = vadd.f32 0.0, %v3392
      %v3394 = vpop.f32.mrb[0].mxu0
      %v3395 = vpop.f32.mrb[0].mxu0
      %v3396 = vadd.f32 0.0, %v3395
      %v3397 = vpop.f32.mrb[0].mxu0
      %3398 = vdwg.mxu0
      %v3400 = vsel %vm226, %v3120, 0
      %v3403 = vsel %vm226, %v3121, 0
      %v3406 = vsel %vm226, %v3122, 0
      %v3409 = vsel %vm226, %v3123, 0
      %v3412 = vsel %vm226, %v3124, 0
      %v3415 = vsel %vm226, %v3125, 0
      %v3418 = vsel %vm226, %v3126, 0
      %v3421 = vsel %vm226, %v3127, 0
      %v3424 = vsel %vm226, %v3128, 0
      %v3427 = vsel %vm226, %v3129, 0
      %v3430 = vsel %vm226, %v3130, 0
      %v3433 = vsel %vm226, %v3131, 0
      %v3436 = vsel %vm226, %v3132, 0
      %v3439 = vsel %vm226, %v3133, 0
      %v3442 = vsel %vm226, %v3134, 0
      %v3445 = vsel %vm226, %v3135, 0
      %v3448 = vsel %vm548, %v3136, 0
      %3450 = vmatprep.subr.bf16.mxu0 0
      %3451 = vmatpush1.bf16.msra.mxu0 %v3448
      %3452 = vmatprep.subr.bf16.mxu0 0
      %3453 = vmatpush1.bf16.msra.mxu0 0
      %3454 = vmatprep.subr.bf16.mxu0 0
      %3455 = vmatpush1.bf16.msra.mxu0 0
      %3456 = vmatprep.subr.bf16.mxu0 0
      %3457 = vmatpush1.bf16.msra.mxu0 0
      %3458 = vmatprep.subr.bf16.mxu0 0
      %3459 = vmatpush1.bf16.msra.mxu0 0
      %3460 = vmatprep.subr.bf16.mxu0 0
      %3461 = vmatpush1.bf16.msra.mxu0 0
      %3462 = vmatprep.subr.bf16.mxu0 0
      %3463 = vmatpush1.bf16.msra.mxu0 0
      %3464 = vmatprep.subr.bf16.mxu0 0
      %3465 = vmatpush1.bf16.msra.mxu0 0
      %3466 = vmatprep.subr.bf16.mxu0 0
      %3467 = vmatpush1.bf16.msra.mxu0 0
      %3468 = vmatprep.subr.bf16.mxu0 0
      %3469 = vmatpush1.bf16.msra.mxu0 0
      %3470 = vmatprep.subr.bf16.mxu0 0
      %3471 = vmatpush1.bf16.msra.mxu0 0
      %3472 = vmatprep.subr.bf16.mxu0 0
      %3473 = vmatpush1.bf16.msra.mxu0 0
      %3474 = vmatprep.subr.bf16.mxu0 0
      %3475 = vmatpush1.bf16.msra.mxu0 0
      %3476 = vmatprep.subr.bf16.mxu0 0
      %3477 = vmatpush1.bf16.msra.mxu0 0
      %3478 = vmatprep.subr.bf16.mxu0 0
      %3479 = vmatpush1.bf16.msra.mxu0 0
      %3480 = vmatprep.subr.bf16.mxu0 0
      %3481 = vmatpush1.bf16.msra.mxu0 0
      %3482 = vmatprep.mubr.bf16.mxu0 0
      %3483 = vmatmul.mubr.bf16.gmra.mrb[0].mxu0 %v3400
      %v3484 = vpop.f32.mrb[0].mxu0
      %v3485 = vadd.f32 %v3273, %v3484
      %v3486 = vpop.f32.mrb[0].mxu0
      %v3487 = vpop.f32.mrb[0].mxu0
      %v3488 = vadd.f32 %v3276, %v3487
      %v3489 = vpop.f32.mrb[0].mxu0
      %3490 = vmatprep.mubr.bf16.mxu0 0
      %3491 = vmatmul.mubr.bf16.gmra.mrb[0].mxu0 %v3403
      %v3492 = vpop.f32.mrb[0].mxu0
      %v3493 = vadd.f32 %v3281, %v3492
      %v3494 = vpop.f32.mrb[0].mxu0
      %v3495 = vpop.f32.mrb[0].mxu0
      %v3496 = vadd.f32 %v3284, %v3495
      %v3497 = vpop.f32.mrb[0].mxu0
      %3498 = vmatprep.mubr.bf16.mxu0 0
      %3499 = vmatmul.mubr.bf16.gmra.mrb[0].mxu0 %v3406
      %v3500 = vpop.f32.mrb[0].mxu0
      %v3501 = vadd.f32 %v3289, %v3500
      %v3502 = vpop.f32.mrb[0].mxu0
      %v3503 = vpop.f32.mrb[0].mxu0
      %v3504 = vadd.f32 %v3292, %v3503
      %v3505 = vpop.f32.mrb[0].mxu0
      %3506 = vmatprep.mubr.bf16.mxu0 0
      %3507 = vmatmul.mubr.bf16.gmra.mrb[0].mxu0 %v3409
      %v3508 = vpop.f32.mrb[0].mxu0
      %v3509 = vadd.f32 %v3297, %v3508
      %v3510 = vpop.f32.mrb[0].mxu0
      %v3511 = vpop.f32.mrb[0].mxu0
      %v3512 = vadd.f32 %v3300, %v3511
      %v3513 = vpop.f32.mrb[0].mxu0
      %3514 = vmatprep.mubr.bf16.mxu0 0
      %3515 = vmatmul.mubr.bf16.gmra.mrb[0].mxu0 %v3412
      %v3516 = vpop.f32.mrb[0].mxu0
      %v3517 = vadd.f32 %v3305, %v3516
      %v3518 = vpop.f32.mrb[0].mxu0
      %v3519 = vpop.f32.mrb[0].mxu0
      %v3520 = vadd.f32 %v3308, %v3519
      %v3521 = vpop.f32.mrb[0].mxu0
      %3522 = vmatprep.mubr.bf16.mxu0 0
      %3523 = vmatmul.mubr.bf16.gmra.mrb[0].mxu0 %v3415
      %v3524 = vpop.f32.mrb[0].mxu0
      %v3525 = vadd.f32 %v3313, %v3524
      %v3526 = vpop.f32.mrb[0].mxu0
      %v3527 = vpop.f32.mrb[0].mxu0
      %v3528 = vadd.f32 %v3316, %v3527
      %v3529 = vpop.f32.mrb[0].mxu0
      %3530 = vmatprep.mubr.bf16.mxu0 0
      %3531 = vmatmul.mubr.bf16.gmra.mrb[0].mxu0 %v3418
      %v3532 = vpop.f32.mrb[0].mxu0
      %v3533 = vadd.f32 %v3321, %v3532
      %v3534 = vpop.f32.mrb[0].mxu0
      %v3535 = vpop.f32.mrb[0].mxu0
      %v3536 = vadd.f32 %v3324, %v3535
      %v3537 = vpop.f32.mrb[0].mxu0
      %3538 = vmatprep.mubr.bf16.mxu0 0
      %3539 = vmatmul.mubr.bf16.gmra.mrb[0].mxu0 %v3421
      %v3540 = vpop.f32.mrb[0].mxu0
      %v3541 = vadd.f32 %v3329, %v3540
      %v3542 = vpop.f32.mrb[0].mxu0
      %v3543 = vpop.f32.mrb[0].mxu0
      %v3544 = vadd.f32 %v3332, %v3543
      %v3545 = vpop.f32.mrb[0].mxu0
      %3546 = vmatprep.mubr.bf16.mxu0 0
      %3547 = vmatmul.mubr.bf16.gmra.mrb[0].mxu0 %v3424
      %v3548 = vpop.f32.mrb[0].mxu0
      %v3549 = vadd.f32 %v3337, %v3548
      %v3550 = vpop.f32.mrb[0].mxu0
      %v3551 = vpop.f32.mrb[0].mxu0
      %v3552 = vadd.f32 %v3340, %v3551
      %v3553 = vpop.f32.mrb[0].mxu0
      %3554 = vmatprep.mubr.bf16.mxu0 0
      %3555 = vmatmul.mubr.bf16.gmra.mrb[0].mxu0 %v3427
      %v3556 = vpop.f32.mrb[0].mxu0
      %v3557 = vadd.f32 %v3345, %v3556
      %v3558 = vpop.f32.mrb[0].mxu0
      %v3559 = vpop.f32.mrb[0].mxu0
      %v3560 = vadd.f32 %v3348, %v3559
      %v3561 = vpop.f32.mrb[0].mxu0
      %3562 = vmatprep.mubr.bf16.mxu0 0
      %3563 = vmatmul.mubr.bf16.gmra.mrb[0].mxu0 %v3430
      %v3564 = vpop.f32.mrb[0].mxu0
      %v3565 = vadd.f32 %v3353, %v3564
      %v3566 = vpop.f32.mrb[0].mxu0
      %v3567 = vpop.f32.mrb[0].mxu0
      %v3568 = vadd.f32 %v3356, %v3567
      %v3569 = vpop.f32.mrb[0].mxu0
      %3570 = vmatprep.mubr.bf16.mxu0 0
      %3571 = vmatmul.mubr.bf16.gmra.mrb[0].mxu0 %v3433
      %v3572 = vpop.f32.mrb[0].mxu0
      %v3573 = vadd.f32 %v3361, %v3572
      %v3574 = vpop.f32.mrb[0].mxu0
      %v3575 = vpop.f32.mrb[0].mxu0
      %v3576 = vadd.f32 %v3364, %v3575
      %v3577 = vpop.f32.mrb[0].mxu0
      %3578 = vmatprep.mubr.bf16.mxu0 0
      %3579 = vmatmul.mubr.bf16.gmra.mrb[0].mxu0 %v3436
      %v3580 = vpop.f32.mrb[0].mxu0
      %v3581 = vadd.f32 %v3369, %v3580
      %v3582 = vpop.f32.mrb[0].mxu0
      %v3583 = vpop.f32.mrb[0].mxu0
      %v3584 = vadd.f32 %v3372, %v3583
      %v3585 = vpop.f32.mrb[0].mxu0
      %3586 = vmatprep.mubr.bf16.mxu0 0
      %3587 = vmatmul.mubr.bf16.gmra.mrb[0].mxu0 %v3439
      %v3588 = vpop.f32.mrb[0].mxu0
      %v3589 = vadd.f32 %v3377, %v3588
      %v3590 = vpop.f32.mrb[0].mxu0
      %v3591 = vpop.f32.mrb[0].mxu0
      %v3592 = vadd.f32 %v3380, %v3591
      %v3593 = vpop.f32.mrb[0].mxu0
      %3594 = vmatprep.mubr.bf16.mxu0 0
      %3595 = vmatmul.mubr.bf16.gmra.mrb[0].mxu0 %v3442
      %v3596 = vpop.f32.mrb[0].mxu0
      %v3597 = vadd.f32 %v3385, %v3596
      %v3598 = vpop.f32.mrb[0].mxu0
      %v3599 = vpop.f32.mrb[0].mxu0
      %v3600 = vadd.f32 %v3388, %v3599
      %v3601 = vpop.f32.mrb[0].mxu0
      %3602 = vmatprep.mubr.bf16.mxu0 0
      %3603 = vmatmul.mubr.bf16.gmra.mrb[0].mxu0 %v3445
      %v3604 = vpop.f32.mrb[0].mxu0
      %v3605 = vadd.f32 %v3393, %v3604
      %v3606 = vpop.f32.mrb[0].mxu0
      %v3607 = vpop.f32.mrb[0].mxu0
      %v3608 = vadd.f32 %v3396, %v3607
      %v3609 = vpop.f32.mrb[0].mxu0
      %3610 = vdwg.mxu0
      %v3611 = vld [vmem:[#allocation3 + $0x2] sm:$0xff]
      %v3612 = vld [vmem:[#allocation3 + $0xa] sm:$0xff]
      %v3613 = vld [vmem:[#allocation3 + $0x1a] sm:$0xff]
      %v3614 = vld [vmem:[#allocation3 + $0x22] sm:$0xff]
      %v3615 = vld [vmem:[#allocation3 + $0x32] sm:$0xff]
      %v3616 = vld [vmem:[#allocation3 + $0x3a] sm:$0xff]
      %v3617 = vld [vmem:[#allocation3 + $0x4a] sm:$0xff]
      %v3618 = vld [vmem:[#allocation3 + $0x52] sm:$0xff]
      %v3619 = vld [vmem:[#allocation3 + $0x62] sm:$0xff]
      %v3620 = vld [vmem:[#allocation3 + $0x6a] sm:$0xff]
      %v3621 = vld [vmem:[#allocation3 + $0x7a] sm:$0xff]
      %v3622 = vld [vmem:[#allocation3 + $0x82] sm:$0xff]
      %v3623 = vld [vmem:[#allocation3 + $0x92] sm:$0xff]
      %v3624 = vld [vmem:[#allocation3 + $0x9a] sm:$0xff]
      %v3625 = vld [vmem:[#allocation3 + $0xaa] sm:$0xff]
      %v3626 = vld [vmem:[#allocation3 + $0xb2] sm:$0xff]
      %v3627 = vld [vmem:[#allocation3 + $0xc2] sm:$0xff]
      %v3628 = vld [vmem:[#allocation3 + $0xca] sm:$0xff]
      %v3629 = vld [vmem:[#allocation3 + $0xda] sm:$0xff]
      %v3630 = vld [vmem:[#allocation3 + $0xe2] sm:$0xff]
      %v3631 = vld [vmem:[#allocation3 + $0xf2] sm:$0xff]
      %v3632 = vld [vmem:[#allocation3 + $0xfa] sm:$0xff]
      %v3633 = vld [vmem:[#allocation3 + $0x10a] sm:$0xff]
      %v3634 = vld [vmem:[#allocation3 + $0x112] sm:$0xff]
      %v3635 = vld [vmem:[#allocation3 + $0x122] sm:$0xff]
      %v3636 = vld [vmem:[#allocation3 + $0x12a] sm:$0xff]
      %v3637 = vld [vmem:[#allocation3 + $0x13a] sm:$0xff]
      %v3638 = vld [vmem:[#allocation3 + $0x142] sm:$0xff]
      %v3639 = vld [vmem:[#allocation3 + $0x152] sm:$0xff]
      %v3640 = vld [vmem:[#allocation3 + $0x15a] sm:$0xff]
      %v3641 = vld [vmem:[#allocation3 + $0x16a] sm:$0xff]
      %v3642 = vld [vmem:[#allocation3 + $0x172] sm:$0xff]
      %v3643 = vpack.c.bf16 %v3612, %v3611
      %v3644 = vpack.c.bf16 %v3614, %v3613
      %v3645 = vpack.c.bf16 %v3616, %v3615
      %v3646 = vpack.c.bf16 %v3618, %v3617
      %v3647 = vpack.c.bf16 %v3620, %v3619
      %v3648 = vpack.c.bf16 %v3622, %v3621
      %v3649 = vpack.c.bf16 %v3624, %v3623
      %v3650 = vpack.c.bf16 %v3626, %v3625
      %v3651 = vpack.c.bf16 %v3628, %v3627
      %v3652 = vpack.c.bf16 %v3630, %v3629
      %v3653 = vpack.c.bf16 %v3632, %v3631
      %v3654 = vpack.c.bf16 %v3634, %v3633
      %v3655 = vpack.c.bf16 %v3636, %v3635
      %v3656 = vpack.c.bf16 %v3638, %v3637
      %v3657 = vpack.c.bf16 %v3640, %v3639
      %v3658 = vpack.c.bf16 %v3642, %v3641
      %s3659 = scalar_lea.vmem %s3, 8
      %v3660 = vld [vmem:[%s3659] sm:$0xf]
      %v3662 = vsel %vm226, %v3643, 0
      %v3665 = vsel %vm226, %v3644, 0
      %v3668 = vsel %vm226, %v3645, 0
      %v3671 = vsel %vm226, %v3646, 0
      %v3674 = vsel %vm226, %v3647, 0
      %v3677 = vsel %vm226, %v3648, 0
      %v3680 = vsel %vm226, %v3649, 0
      %v3683 = vsel %vm226, %v3650, 0
      %v3686 = vsel %vm226, %v3651, 0
      %v3689 = vsel %vm226, %v3652, 0
      %v3692 = vsel %vm226, %v3653, 0
      %v3695 = vsel %vm226, %v3654, 0
      %v3698 = vsel %vm226, %v3655, 0
      %v3701 = vsel %vm226, %v3656, 0
      %v3704 = vsel %vm226, %v3657, 0
      %v3707 = vsel %vm226, %v3658, 0
      %v3710 = vsel %vm548, %v3660, 0
      %3712 = vmatprep.subr.bf16.mxu0 0
      %3713 = vmatpush1.bf16.msra.mxu0 %v3710
      %3714 = vmatprep.subr.bf16.mxu0 0
      %3715 = vmatpush1.bf16.msra.mxu0 0
      %3716 = vmatprep.subr.bf16.mxu0 0
      %3717 = vmatpush1.bf16.msra.mxu0 0
      %3718 = vmatprep.subr.bf16.mxu0 0
      %3719 = vmatpush1.bf16.msra.mxu0 0
      %3720 = vmatprep.subr.bf16.mxu0 0
      %3721 = vmatpush1.bf16.msra.mxu0 0
      %3722 = vmatprep.subr.bf16.mxu0 0
      %3723 = vmatpush1.bf16.msra.mxu0 0
      %3724 = vmatprep.subr.bf16.mxu0 0
      %3725 = vmatpush1.bf16.msra.mxu0 0
      %3726 = vmatprep.subr.bf16.mxu0 0
      %3727 = vmatpush1.bf16.msra.mxu0 0
      %3728 = vmatprep.subr.bf16.mxu0 0
      %3729 = vmatpush1.bf16.msra.mxu0 0
      %3730 = vmatprep.subr.bf16.mxu0 0
      %3731 = vmatpush1.bf16.msra.mxu0 0
      %3732 = vmatprep.subr.bf16.mxu0 0
      %3733 = vmatpush1.bf16.msra.mxu0 0
      %3734 = vmatprep.subr.bf16.mxu0 0
      %3735 = vmatpush1.bf16.msra.mxu0 0
      %3736 = vmatprep.subr.bf16.mxu0 0
      %3737 = vmatpush1.bf16.msra.mxu0 0
      %3738 = vmatprep.subr.bf16.mxu0 0
      %3739 = vmatpush1.bf16.msra.mxu0 0
      %3740 = vmatprep.subr.bf16.mxu0 0
      %3741 = vmatpush1.bf16.msra.mxu0 0
      %3742 = vmatprep.subr.bf16.mxu0 0
      %3743 = vmatpush1.bf16.msra.mxu0 0
      %3744 = vmatprep.mubr.bf16.mxu0 0
      %3745 = vmatmul.mubr.bf16.gmra.mrb[0].mxu0 %v3662
      %v3746 = vpop.f32.mrb[0].mxu0
      %v3747 = vadd.f32 0.0, %v3746
      %v3748 = vpop.f32.mrb[0].mxu0
      %v3749 = vpop.f32.mrb[0].mxu0
      %v3750 = vadd.f32 0.0, %v3749
      %v3751 = vpop.f32.mrb[0].mxu0
      %3752 = vmatprep.mubr.bf16.mxu0 0
      %3753 = vmatmul.mubr.bf16.gmra.mrb[0].mxu0 %v3665
      %v3754 = vpop.f32.mrb[0].mxu0
      %v3755 = vadd.f32 0.0, %v3754
      %v3756 = vpop.f32.mrb[0].mxu0
      %v3757 = vpop.f32.mrb[0].mxu0
      %v3758 = vadd.f32 0.0, %v3757
      %v3759 = vpop.f32.mrb[0].mxu0
      %3760 = vmatprep.mubr.bf16.mxu0 0
      %3761 = vmatmul.mubr.bf16.gmra.mrb[0].mxu0 %v3668
      %v3762 = vpop.f32.mrb[0].mxu0
      %v3763 = vadd.f32 0.0, %v3762
      %v3764 = vpop.f32.mrb[0].mxu0
      %v3765 = vpop.f32.mrb[0].mxu0
      %v3766 = vadd.f32 0.0, %v3765
      %v3767 = vpop.f32.mrb[0].mxu0
      %3768 = vmatprep.mubr.bf16.mxu0 0
      %3769 = vmatmul.mubr.bf16.gmra.mrb[0].mxu0 %v3671
      %v3770 = vpop.f32.mrb[0].mxu0
      %v3771 = vadd.f32 0.0, %v3770
      %v3772 = vpop.f32.mrb[0].mxu0
      %v3773 = vpop.f32.mrb[0].mxu0
      %v3774 = vadd.f32 0.0, %v3773
      %v3775 = vpop.f32.mrb[0].mxu0
      %3776 = vmatprep.mubr.bf16.mxu0 0
      %3777 = vmatmul.mubr.bf16.gmra.mrb[0].mxu0 %v3674
      %v3778 = vpop.f32.mrb[0].mxu0
      %v3779 = vadd.f32 0.0, %v3778
      %v3780 = vpop.f32.mrb[0].mxu0
      %v3781 = vpop.f32.mrb[0].mxu0
      %v3782 = vadd.f32 0.0, %v3781
      %v3783 = vpop.f32.mrb[0].mxu0
      %3784 = vmatprep.mubr.bf16.mxu0 0
      %3785 = vmatmul.mubr.bf16.gmra.mrb[0].mxu0 %v3677
      %v3786 = vpop.f32.mrb[0].mxu0
      %v3787 = vadd.f32 0.0, %v3786
      %v3788 = vpop.f32.mrb[0].mxu0
      %v3789 = vpop.f32.mrb[0].mxu0
      %v3790 = vadd.f32 0.0, %v3789
      %v3791 = vpop.f32.mrb[0].mxu0
      %3792 = vmatprep.mubr.bf16.mxu0 0
      %3793 = vmatmul.mubr.bf16.gmra.mrb[0].mxu0 %v3680
      %v3794 = vpop.f32.mrb[0].mxu0
      %v3795 = vadd.f32 0.0, %v3794
      %v3796 = vpop.f32.mrb[0].mxu0
      %v3797 = vpop.f32.mrb[0].mxu0
      %v3798 = vadd.f32 0.0, %v3797
      %v3799 = vpop.f32.mrb[0].mxu0
      %3800 = vmatprep.mubr.bf16.mxu0 0
      %3801 = vmatmul.mubr.bf16.gmra.mrb[0].mxu0 %v3683
      %v3802 = vpop.f32.mrb[0].mxu0
      %v3803 = vadd.f32 0.0, %v3802
      %v3804 = vpop.f32.mrb[0].mxu0
      %v3805 = vpop.f32.mrb[0].mxu0
      %v3806 = vadd.f32 0.0, %v3805
      %v3807 = vpop.f32.mrb[0].mxu0
      %3808 = vmatprep.mubr.bf16.mxu0 0
      %3809 = vmatmul.mubr.bf16.gmra.mrb[0].mxu0 %v3686
      %v3810 = vpop.f32.mrb[0].mxu0
      %v3811 = vadd.f32 0.0, %v3810
      %v3812 = vpop.f32.mrb[0].mxu0
      %v3813 = vpop.f32.mrb[0].mxu0
      %v3814 = vadd.f32 0.0, %v3813
      %v3815 = vpop.f32.mrb[0].mxu0
      %3816 = vmatprep.mubr.bf16.mxu0 0
      %3817 = vmatmul.mubr.bf16.gmra.mrb[0].mxu0 %v3689
      %v3818 = vpop.f32.mrb[0].mxu0
      %v3819 = vadd.f32 0.0, %v3818
      %v3820 = vpop.f32.mrb[0].mxu0
      %v3821 = vpop.f32.mrb[0].mxu0
      %v3822 = vadd.f32 0.0, %v3821
      %v3823 = vpop.f32.mrb[0].mxu0
      %3824 = vmatprep.mubr.bf16.mxu0 0
      %3825 = vmatmul.mubr.bf16.gmra.mrb[0].mxu0 %v3692
      %v3826 = vpop.f32.mrb[0].mxu0
      %v3827 = vadd.f32 0.0, %v3826
      %v3828 = vpop.f32.mrb[0].mxu0
      %v3829 = vpop.f32.mrb[0].mxu0
      %v3830 = vadd.f32 0.0, %v3829
      %v3831 = vpop.f32.mrb[0].mxu0
      %3832 = vmatprep.mubr.bf16.mxu0 0
      %3833 = vmatmul.mubr.bf16.gmra.mrb[0].mxu0 %v3695
      %v3834 = vpop.f32.mrb[0].mxu0
      %v3835 = vadd.f32 0.0, %v3834
      %v3836 = vpop.f32.mrb[0].mxu0
      %v3837 = vpop.f32.mrb[0].mxu0
      %v3838 = vadd.f32 0.0, %v3837
      %v3839 = vpop.f32.mrb[0].mxu0
      %3840 = vmatprep.mubr.bf16.mxu0 0
      %3841 = vmatmul.mubr.bf16.gmra.mrb[0].mxu0 %v3698
      %v3842 = vpop.f32.mrb[0].mxu0
      %v3843 = vadd.f32 0.0, %v3842
      %v3844 = vpop.f32.mrb[0].mxu0
      %v3845 = vpop.f32.mrb[0].mxu0
      %v3846 = vadd.f32 0.0, %v3845
      %v3847 = vpop.f32.mrb[0].mxu0
      %3848 = vmatprep.mubr.bf16.mxu0 0
      %3849 = vmatmul.mubr.bf16.gmra.mrb[0].mxu0 %v3701
      %v3850 = vpop.f32.mrb[0].mxu0
      %v3851 = vadd.f32 0.0, %v3850
      %v3852 = vpop.f32.mrb[0].mxu0
      %v3853 = vpop.f32.mrb[0].mxu0
      %v3854 = vadd.f32 0.0, %v3853
      %v3855 = vpop.f32.mrb[0].mxu0
      %3856 = vmatprep.mubr.bf16.mxu0 0
      %3857 = vmatmul.mubr.bf16.gmra.mrb[0].mxu0 %v3704
      %v3858 = vpop.f32.mrb[0].mxu0
      %v3859 = vadd.f32 0.0, %v3858
      %v3860 = vpop.f32.mrb[0].mxu0
      %v3861 = vpop.f32.mrb[0].mxu0
      %v3862 = vadd.f32 0.0, %v3861
      %v3863 = vpop.f32.mrb[0].mxu0
      %3864 = vmatprep.mubr.bf16.mxu0 0
      %3865 = vmatmul.mubr.bf16.gmra.mrb[0].mxu0 %v3707
      %v3866 = vpop.f32.mrb[0].mxu0
      %v3867 = vadd.f32 0.0, %v3866
      %v3868 = vpop.f32.mrb[0].mxu0
      %v3869 = vpop.f32.mrb[0].mxu0
      %v3870 = vadd.f32 0.0, %v3869
      %v3871 = vpop.f32.mrb[0].mxu0
      %3872 = vdwg.mxu0
      %v3873 = vadd.f32 %v3485, %v3747
      %v3874 = vadd.f32 %v3488, %v3750
      %v3875 = vadd.f32 %v3493, %v3755
      %v3876 = vadd.f32 %v3496, %v3758
      %v3877 = vadd.f32 %v3501, %v3763
      %v3878 = vadd.f32 %v3504, %v3766
      %v3879 = vadd.f32 %v3509, %v3771
      %v3880 = vadd.f32 %v3512, %v3774
      %v3881 = vadd.f32 %v3517, %v3779
      %v3882 = vadd.f32 %v3520, %v3782
      %v3883 = vadd.f32 %v3525, %v3787
      %v3884 = vadd.f32 %v3528, %v3790
      %v3885 = vadd.f32 %v3533, %v3795
      %v3886 = vadd.f32 %v3536, %v3798
      %v3887 = vadd.f32 %v3541, %v3803
      %v3888 = vadd.f32 %v3544, %v3806
      %v3889 = vadd.f32 %v3549, %v3811
      %v3890 = vadd.f32 %v3552, %v3814
      %v3891 = vadd.f32 %v3557, %v3819
      %v3892 = vadd.f32 %v3560, %v3822
      %v3893 = vadd.f32 %v3565, %v3827
      %v3894 = vadd.f32 %v3568, %v3830
      %v3895 = vadd.f32 %v3573, %v3835
      %v3896 = vadd.f32 %v3576, %v3838
      %v3897 = vadd.f32 %v3581, %v3843
      %v3898 = vadd.f32 %v3584, %v3846
      %v3899 = vadd.f32 %v3589, %v3851
      %v3900 = vadd.f32 %v3592, %v3854
      %v3901 = vadd.f32 %v3597, %v3859
      %v3902 = vadd.f32 %v3600, %v3862
      %v3903 = vadd.f32 %v3605, %v3867
      %v3904 = vadd.f32 %v3608, %v3870
      %v3905 = vld [vmem:[%s3055] sm:$0xff]
      %v3906 = vld [vmem:[%s3055 + $0x8] sm:$0xff]
      %v3907 = vld [vmem:[%s3055 + $0x18] sm:$0xff]
      %v3908 = vld [vmem:[%s3055 + $0x20] sm:$0xff]
      %v3909 = vld [vmem:[%s3055 + $0x30] sm:$0xff]
      %v3910 = vld [vmem:[%s3055 + $0x38] sm:$0xff]
      %v3911 = vld [vmem:[%s3055 + $0x48] sm:$0xff]
      %v3912 = vld [vmem:[%s3055 + $0x50] sm:$0xff]
      %v3913 = vld [vmem:[%s3055 + $0x60] sm:$0xff]
      %v3914 = vld [vmem:[%s3055 + $0x68] sm:$0xff]
      %v3915 = vld [vmem:[%s3055 + $0x78] sm:$0xff]
      %v3916 = vld [vmem:[%s3055 + $0x80] sm:$0xff]
      %v3917 = vld [vmem:[%s3055 + $0x90] sm:$0xff]
      %v3918 = vld [vmem:[%s3055 + $0x98] sm:$0xff]
      %v3919 = vld [vmem:[%s3055 + $0xa8] sm:$0xff]
      %v3920 = vld [vmem:[%s3055 + $0xb0] sm:$0xff]
      %v3921 = vld [vmem:[%s3055 + $0xc0] sm:$0xff]
      %v3922 = vld [vmem:[%s3055 + $0xc8] sm:$0xff]
      %v3923 = vld [vmem:[%s3055 + $0xd8] sm:$0xff]
      %v3924 = vld [vmem:[%s3055 + $0xe0] sm:$0xff]
      %v3925 = vld [vmem:[%s3055 + $0xf0] sm:$0xff]
      %v3926 = vld [vmem:[%s3055 + $0xf8] sm:$0xff]
      %v3927 = vld [vmem:[%s3055 + $0x108] sm:$0xff]
      %v3928 = vld [vmem:[%s3055 + $0x110] sm:$0xff]
      %v3929 = vld [vmem:[%s3055 + $0x120] sm:$0xff]
      %v3930 = vld [vmem:[%s3055 + $0x128] sm:$0xff]
      %v3931 = vld [vmem:[%s3055 + $0x138] sm:$0xff]
      %v3932 = vld [vmem:[%s3055 + $0x140] sm:$0xff]
      %v3933 = vld [vmem:[%s3055 + $0x150] sm:$0xff]
      %v3934 = vld [vmem:[%s3055 + $0x158] sm:$0xff]
      %v3935 = vld [vmem:[%s3055 + $0x168] sm:$0xff]
      %v3936 = vld [vmem:[%s3055 + $0x170] sm:$0xff]
      %v3937 = vpack.c.bf16 %v3906, %v3905
      %v3938 = vpack.c.bf16 %v3908, %v3907
      %v3939 = vpack.c.bf16 %v3910, %v3909
      %v3940 = vpack.c.bf16 %v3912, %v3911
      %v3941 = vpack.c.bf16 %v3914, %v3913
      %v3942 = vpack.c.bf16 %v3916, %v3915
      %v3943 = vpack.c.bf16 %v3918, %v3917
      %v3944 = vpack.c.bf16 %v3920, %v3919
      %v3945 = vpack.c.bf16 %v3922, %v3921
      %v3946 = vpack.c.bf16 %v3924, %v3923
      %v3947 = vpack.c.bf16 %v3926, %v3925
      %v3948 = vpack.c.bf16 %v3928, %v3927
      %v3949 = vpack.c.bf16 %v3930, %v3929
      %v3950 = vpack.c.bf16 %v3932, %v3931
      %v3951 = vpack.c.bf16 %v3934, %v3933
      %v3952 = vpack.c.bf16 %v3936, %v3935
      %s3953 = scalar_lea.vmem %s3, 12
      %v3954 = vld [vmem:[%s3953] sm:$0xf]
      %v3956 = vsel %vm226, %v3937, 0
      %v3959 = vsel %vm226, %v3938, 0
      %v3962 = vsel %vm226, %v3939, 0
      %v3965 = vsel %vm226, %v3940, 0
      %v3968 = vsel %vm226, %v3941, 0
      %v3971 = vsel %vm226, %v3942, 0
      %v3974 = vsel %vm226, %v3943, 0
      %v3977 = vsel %vm226, %v3944, 0
      %v3980 = vsel %vm226, %v3945, 0
      %v3983 = vsel %vm226, %v3946, 0
      %v3986 = vsel %vm226, %v3947, 0
      %v3989 = vsel %vm226, %v3948, 0
      %v3992 = vsel %vm226, %v3949, 0
      %v3995 = vsel %vm226, %v3950, 0
      %v3998 = vsel %vm226, %v3951, 0
      %v4001 = vsel %vm226, %v3952, 0
      %v4004 = vsel %vm548, %v3954, 0
      %4006 = vmatprep.subr.bf16.mxu0 0
      %4007 = vmatpush1.bf16.msra.mxu0 %v4004
      %4008 = vmatprep.subr.bf16.mxu0 0
      %4009 = vmatpush1.bf16.msra.mxu0 0
      %4010 = vmatprep.subr.bf16.mxu0 0
      %4011 = vmatpush1.bf16.msra.mxu0 0
      %4012 = vmatprep.subr.bf16.mxu0 0
      %4013 = vmatpush1.bf16.msra.mxu0 0
      %4014 = vmatprep.subr.bf16.mxu0 0
      %4015 = vmatpush1.bf16.msra.mxu0 0
      %4016 = vmatprep.subr.bf16.mxu0 0
      %4017 = vmatpush1.bf16.msra.mxu0 0
      %4018 = vmatprep.subr.bf16.mxu0 0
      %4019 = vmatpush1.bf16.msra.mxu0 0
      %4020 = vmatprep.subr.bf16.mxu0 0
      %4021 = vmatpush1.bf16.msra.mxu0 0
      %4022 = vmatprep.subr.bf16.mxu0 0
      %4023 = vmatpush1.bf16.msra.mxu0 0
      %4024 = vmatprep.subr.bf16.mxu0 0
      %4025 = vmatpush1.bf16.msra.mxu0 0
      %4026 = vmatprep.subr.bf16.mxu0 0
      %4027 = vmatpush1.bf16.msra.mxu0 0
      %4028 = vmatprep.subr.bf16.mxu0 0
      %4029 = vmatpush1.bf16.msra.mxu0 0
      %4030 = vmatprep.subr.bf16.mxu0 0
      %4031 = vmatpush1.bf16.msra.mxu0 0
      %4032 = vmatprep.subr.bf16.mxu0 0
      %4033 = vmatpush1.bf16.msra.mxu0 0
      %4034 = vmatprep.subr.bf16.mxu0 0
      %4035 = vmatpush1.bf16.msra.mxu0 0
      %4036 = vmatprep.subr.bf16.mxu0 0
      %4037 = vmatpush1.bf16.msra.mxu0 0
      %4038 = vmatprep.mubr.bf16.mxu0 0
      %4039 = vmatmul.mubr.bf16.gmra.mrb[0].mxu0 %v3956
      %v4040 = vpop.f32.mrb[0].mxu0
      %v4041 = vadd.f32 0.0, %v4040
      %v4042 = vpop.f32.mrb[0].mxu0
      %v4043 = vpop.f32.mrb[0].mxu0
      %v4044 = vadd.f32 0.0, %v4043
      %v4045 = vpop.f32.mrb[0].mxu0
      %4046 = vmatprep.mubr.bf16.mxu0 0
      %4047 = vmatmul.mubr.bf16.gmra.mrb[0].mxu0 %v3959
      %v4048 = vpop.f32.mrb[0].mxu0
      %v4049 = vadd.f32 0.0, %v4048
      %v4050 = vpop.f32.mrb[0].mxu0
      %v4051 = vpop.f32.mrb[0].mxu0
      %v4052 = vadd.f32 0.0, %v4051
      %v4053 = vpop.f32.mrb[0].mxu0
      %4054 = vmatprep.mubr.bf16.mxu0 0
      %4055 = vmatmul.mubr.bf16.gmra.mrb[0].mxu0 %v3962
      %v4056 = vpop.f32.mrb[0].mxu0
      %v4057 = vadd.f32 0.0, %v4056
      %v4058 = vpop.f32.mrb[0].mxu0
      %v4059 = vpop.f32.mrb[0].mxu0
      %v4060 = vadd.f32 0.0, %v4059
      %v4061 = vpop.f32.mrb[0].mxu0
      %4062 = vmatprep.mubr.bf16.mxu0 0
      %4063 = vmatmul.mubr.bf16.gmra.mrb[0].mxu0 %v3965
      %v4064 = vpop.f32.mrb[0].mxu0
      %v4065 = vadd.f32 0.0, %v4064
      %v4066 = vpop.f32.mrb[0].mxu0
      %v4067 = vpop.f32.mrb[0].mxu0
      %v4068 = vadd.f32 0.0, %v4067
      %v4069 = vpop.f32.mrb[0].mxu0
      %4070 = vmatprep.mubr.bf16.mxu0 0
      %4071 = vmatmul.mubr.bf16.gmra.mrb[0].mxu0 %v3968
      %v4072 = vpop.f32.mrb[0].mxu0
      %v4073 = vadd.f32 0.0, %v4072
      %v4074 = vpop.f32.mrb[0].mxu0
      %v4075 = vpop.f32.mrb[0].mxu0
      %v4076 = vadd.f32 0.0, %v4075
      %v4077 = vpop.f32.mrb[0].mxu0
      %4078 = vmatprep.mubr.bf16.mxu0 0
      %4079 = vmatmul.mubr.bf16.gmra.mrb[0].mxu0 %v3971
      %v4080 = vpop.f32.mrb[0].mxu0
      %v4081 = vadd.f32 0.0, %v4080
      %v4082 = vpop.f32.mrb[0].mxu0
      %v4083 = vpop.f32.mrb[0].mxu0
      %v4084 = vadd.f32 0.0, %v4083
      %v4085 = vpop.f32.mrb[0].mxu0
      %4086 = vmatprep.mubr.bf16.mxu0 0
      %4087 = vmatmul.mubr.bf16.gmra.mrb[0].mxu0 %v3974
      %v4088 = vpop.f32.mrb[0].mxu0
      %v4089 = vadd.f32 0.0, %v4088
      %v4090 = vpop.f32.mrb[0].mxu0
      %v4091 = vpop.f32.mrb[0].mxu0
      %v4092 = vadd.f32 0.0, %v4091
      %v4093 = vpop.f32.mrb[0].mxu0
      %4094 = vmatprep.mubr.bf16.mxu0 0
      %4095 = vmatmul.mubr.bf16.gmra.mrb[0].mxu0 %v3977
      %v4096 = vpop.f32.mrb[0].mxu0
      %v4097 = vadd.f32 0.0, %v4096
      %v4098 = vpop.f32.mrb[0].mxu0
      %v4099 = vpop.f32.mrb[0].mxu0
      %v4100 = vadd.f32 0.0, %v4099
      %v4101 = vpop.f32.mrb[0].mxu0
      %4102 = vmatprep.mubr.bf16.mxu0 0
      %4103 = vmatmul.mubr.bf16.gmra.mrb[0].mxu0 %v3980
      %v4104 = vpop.f32.mrb[0].mxu0
      %v4105 = vadd.f32 0.0, %v4104
      %v4106 = vpop.f32.mrb[0].mxu0
      %v4107 = vpop.f32.mrb[0].mxu0
      %v4108 = vadd.f32 0.0, %v4107
      %v4109 = vpop.f32.mrb[0].mxu0
      %4110 = vmatprep.mubr.bf16.mxu0 0
      %4111 = vmatmul.mubr.bf16.gmra.mrb[0].mxu0 %v3983
      %v4112 = vpop.f32.mrb[0].mxu0
      %v4113 = vadd.f32 0.0, %v4112
      %v4114 = vpop.f32.mrb[0].mxu0
      %v4115 = vpop.f32.mrb[0].mxu0
      %v4116 = vadd.f32 0.0, %v4115
      %v4117 = vpop.f32.mrb[0].mxu0
      %4118 = vmatprep.mubr.bf16.mxu0 0
      %4119 = vmatmul.mubr.bf16.gmra.mrb[0].mxu0 %v3986
      %v4120 = vpop.f32.mrb[0].mxu0
      %v4121 = vadd.f32 0.0, %v4120
      %v4122 = vpop.f32.mrb[0].mxu0
      %v4123 = vpop.f32.mrb[0].mxu0
      %v4124 = vadd.f32 0.0, %v4123
      %v4125 = vpop.f32.mrb[0].mxu0
      %4126 = vmatprep.mubr.bf16.mxu0 0
      %4127 = vmatmul.mubr.bf16.gmra.mrb[0].mxu0 %v3989
      %v4128 = vpop.f32.mrb[0].mxu0
      %v4129 = vadd.f32 0.0, %v4128
      %v4130 = vpop.f32.mrb[0].mxu0
      %v4131 = vpop.f32.mrb[0].mxu0
      %v4132 = vadd.f32 0.0, %v4131
      %v4133 = vpop.f32.mrb[0].mxu0
      %4134 = vmatprep.mubr.bf16.mxu0 0
      %4135 = vmatmul.mubr.bf16.gmra.mrb[0].mxu0 %v3992
      %v4136 = vpop.f32.mrb[0].mxu0
      %v4137 = vadd.f32 0.0, %v4136
      %v4138 = vpop.f32.mrb[0].mxu0
      %v4139 = vpop.f32.mrb[0].mxu0
      %v4140 = vadd.f32 0.0, %v4139
      %v4141 = vpop.f32.mrb[0].mxu0
      %4142 = vmatprep.mubr.bf16.mxu0 0
      %4143 = vmatmul.mubr.bf16.gmra.mrb[0].mxu0 %v3995
      %v4144 = vpop.f32.mrb[0].mxu0
      %v4145 = vadd.f32 0.0, %v4144
      %v4146 = vpop.f32.mrb[0].mxu0
      %v4147 = vpop.f32.mrb[0].mxu0
      %v4148 = vadd.f32 0.0, %v4147
      %v4149 = vpop.f32.mrb[0].mxu0
      %4150 = vmatprep.mubr.bf16.mxu0 0
      %4151 = vmatmul.mubr.bf16.gmra.mrb[0].mxu0 %v3998
      %v4152 = vpop.f32.mrb[0].mxu0
      %v4153 = vadd.f32 0.0, %v4152
      %v4154 = vpop.f32.mrb[0].mxu0
      %v4155 = vpop.f32.mrb[0].mxu0
      %v4156 = vadd.f32 0.0, %v4155
      %v4157 = vpop.f32.mrb[0].mxu0
      %4158 = vmatprep.mubr.bf16.mxu0 0
      %4159 = vmatmul.mubr.bf16.gmra.mrb[0].mxu0 %v4001
      %v4160 = vpop.f32.mrb[0].mxu0
      %v4161 = vadd.f32 0.0, %v4160
      %v4162 = vpop.f32.mrb[0].mxu0
      %v4163 = vpop.f32.mrb[0].mxu0
      %v4164 = vadd.f32 0.0, %v4163
      %v4165 = vpop.f32.mrb[0].mxu0
      %4166 = vdwg.mxu0
      %v4167 = vadd.f32 %v3873, %v4041
      %v4168 = vadd.f32 %v3874, %v4044
      %v4169 = vadd.f32 %v3875, %v4049
      %v4170 = vadd.f32 %v3876, %v4052
      %v4171 = vadd.f32 %v3877, %v4057
      %v4172 = vadd.f32 %v3878, %v4060
      %v4173 = vadd.f32 %v3879, %v4065
      %v4174 = vadd.f32 %v3880, %v4068
      %v4175 = vadd.f32 %v3881, %v4073
      %v4176 = vadd.f32 %v3882, %v4076
      %v4177 = vadd.f32 %v3883, %v4081
      %v4178 = vadd.f32 %v3884, %v4084
      %v4179 = vadd.f32 %v3885, %v4089
      %v4180 = vadd.f32 %v3886, %v4092
      %v4181 = vadd.f32 %v3887, %v4097
      %v4182 = vadd.f32 %v3888, %v4100
      %v4183 = vadd.f32 %v3889, %v4105
      %v4184 = vadd.f32 %v3890, %v4108
      %v4185 = vadd.f32 %v3891, %v4113
      %v4186 = vadd.f32 %v3892, %v4116
      %v4187 = vadd.f32 %v3893, %v4121
      %v4188 = vadd.f32 %v3894, %v4124
      %v4189 = vadd.f32 %v3895, %v4129
      %v4190 = vadd.f32 %v3896, %v4132
      %v4191 = vadd.f32 %v3897, %v4137
      %v4192 = vadd.f32 %v3898, %v4140
      %v4193 = vadd.f32 %v3899, %v4145
      %v4194 = vadd.f32 %v3900, %v4148
      %v4195 = vadd.f32 %v3901, %v4153
      %v4196 = vadd.f32 %v3902, %v4156
      %v4197 = vadd.f32 %v3903, %v4161
      %v4198 = vadd.f32 %v3904, %v4164
      %v4199 = vld [vmem:[%s3055 + $0x1] sm:$0xff]
      %v4200 = vld [vmem:[%s3055 + $0x9] sm:$0xff]
      %v4201 = vld [vmem:[%s3055 + $0x19] sm:$0xff]
      %v4202 = vld [vmem:[%s3055 + $0x21] sm:$0xff]
      %v4203 = vld [vmem:[%s3055 + $0x31] sm:$0xff]
      %v4204 = vld [vmem:[%s3055 + $0x39] sm:$0xff]
      %v4205 = vld [vmem:[%s3055 + $0x49] sm:$0xff]
      %v4206 = vld [vmem:[%s3055 + $0x51] sm:$0xff]
      %v4207 = vld [vmem:[%s3055 + $0x61] sm:$0xff]
      %v4208 = vld [vmem:[%s3055 + $0x69] sm:$0xff]
      %v4209 = vld [vmem:[%s3055 + $0x79] sm:$0xff]
      %v4210 = vld [vmem:[%s3055 + $0x81] sm:$0xff]
      %v4211 = vld [vmem:[%s3055 + $0x91] sm:$0xff]
      %v4212 = vld [vmem:[%s3055 + $0x99] sm:$0xff]
      %v4213 = vld [vmem:[%s3055 + $0xa9] sm:$0xff]
      %v4214 = vld [vmem:[%s3055 + $0xb1] sm:$0xff]
      %v4215 = vld [vmem:[%s3055 + $0xc1] sm:$0xff]
      %v4216 = vld [vmem:[%s3055 + $0xc9] sm:$0xff]
      %v4217 = vld [vmem:[%s3055 + $0xd9] sm:$0xff]
      %v4218 = vld [vmem:[%s3055 + $0xe1] sm:$0xff]
      %v4219 = vld [vmem:[%s3055 + $0xf1] sm:$0xff]
      %v4220 = vld [vmem:[%s3055 + $0xf9] sm:$0xff]
      %v4221 = vld [vmem:[%s3055 + $0x109] sm:$0xff]
      %v4222 = vld [vmem:[%s3055 + $0x111] sm:$0xff]
      %v4223 = vld [vmem:[%s3055 + $0x121] sm:$0xff]
      %v4224 = vld [vmem:[%s3055 + $0x129] sm:$0xff]
      %v4225 = vld [vmem:[%s3055 + $0x139] sm:$0xff]
      %v4226 = vld [vmem:[%s3055 + $0x141] sm:$0xff]
      %v4227 = vld [vmem:[%s3055 + $0x151] sm:$0xff]
      %v4228 = vld [vmem:[%s3055 + $0x159] sm:$0xff]
      %v4229 = vld [vmem:[%s3055 + $0x169] sm:$0xff]
      %v4230 = vld [vmem:[%s3055 + $0x171] sm:$0xff]
      %v4231 = vpack.c.bf16 %v4200, %v4199
      %v4232 = vpack.c.bf16 %v4202, %v4201
      %v4233 = vpack.c.bf16 %v4204, %v4203
      %v4234 = vpack.c.bf16 %v4206, %v4205
      %v4235 = vpack.c.bf16 %v4208, %v4207
      %v4236 = vpack.c.bf16 %v4210, %v4209
      %v4237 = vpack.c.bf16 %v4212, %v4211
      %v4238 = vpack.c.bf16 %v4214, %v4213
      %v4239 = vpack.c.bf16 %v4216, %v4215
      %v4240 = vpack.c.bf16 %v4218, %v4217
      %v4241 = vpack.c.bf16 %v4220, %v4219
      %v4242 = vpack.c.bf16 %v4222, %v4221
      %v4243 = vpack.c.bf16 %v4224, %v4223
      %v4244 = vpack.c.bf16 %v4226, %v4225
      %v4245 = vpack.c.bf16 %v4228, %v4227
      %v4246 = vpack.c.bf16 %v4230, %v4229
      %s4247 = scalar_lea.vmem %s3, 16
      %v4248 = vld [vmem:[%s4247] sm:$0xf]
      %v4250 = vsel %vm226, %v4231, 0
      %v4253 = vsel %vm226, %v4232, 0
      %v4256 = vsel %vm226, %v4233, 0
      %v4259 = vsel %vm226, %v4234, 0
      %v4262 = vsel %vm226, %v4235, 0
      %v4265 = vsel %vm226, %v4236, 0
      %v4268 = vsel %vm226, %v4237, 0
      %v4271 = vsel %vm226, %v4238, 0
      %v4274 = vsel %vm226, %v4239, 0
      %v4277 = vsel %vm226, %v4240, 0
      %v4280 = vsel %vm226, %v4241, 0
      %v4283 = vsel %vm226, %v4242, 0
      %v4286 = vsel %vm226, %v4243, 0
      %v4289 = vsel %vm226, %v4244, 0
      %v4292 = vsel %vm226, %v4245, 0
      %v4295 = vsel %vm226, %v4246, 0
      %v4298 = vsel %vm548, %v4248, 0
      %4300 = vmatprep.subr.bf16.mxu0 0
      %4301 = vmatpush1.bf16.msra.mxu0 %v4298
      %4302 = vmatprep.subr.bf16.mxu0 0
      %4303 = vmatpush1.bf16.msra.mxu0 0
      %4304 = vmatprep.subr.bf16.mxu0 0
      %4305 = vmatpush1.bf16.msra.mxu0 0
      %4306 = vmatprep.subr.bf16.mxu0 0
      %4307 = vmatpush1.bf16.msra.mxu0 0
      %4308 = vmatprep.subr.bf16.mxu0 0
      %4309 = vmatpush1.bf16.msra.mxu0 0
      %4310 = vmatprep.subr.bf16.mxu0 0
      %4311 = vmatpush1.bf16.msra.mxu0 0
      %4312 = vmatprep.subr.bf16.mxu0 0
      %4313 = vmatpush1.bf16.msra.mxu0 0
      %4314 = vmatprep.subr.bf16.mxu0 0
      %4315 = vmatpush1.bf16.msra.mxu0 0
      %4316 = vmatprep.subr.bf16.mxu0 0
      %4317 = vmatpush1.bf16.msra.mxu0 0
      %4318 = vmatprep.subr.bf16.mxu0 0
      %4319 = vmatpush1.bf16.msra.mxu0 0
      %4320 = vmatprep.subr.bf16.mxu0 0
      %4321 = vmatpush1.bf16.msra.mxu0 0
      %4322 = vmatprep.subr.bf16.mxu0 0
      %4323 = vmatpush1.bf16.msra.mxu0 0
      %4324 = vmatprep.subr.bf16.mxu0 0
      %4325 = vmatpush1.bf16.msra.mxu0 0
      %4326 = vmatprep.subr.bf16.mxu0 0
      %4327 = vmatpush1.bf16.msra.mxu0 0
      %4328 = vmatprep.subr.bf16.mxu0 0
      %4329 = vmatpush1.bf16.msra.mxu0 0
      %4330 = vmatprep.subr.bf16.mxu0 0
      %4331 = vmatpush1.bf16.msra.mxu0 0
      %4332 = vmatprep.mubr.bf16.mxu0 0
      %4333 = vmatmul.mubr.bf16.gmra.mrb[0].mxu0 %v4250
      %v4334 = vpop.f32.mrb[0].mxu0
      %v4335 = vadd.f32 0.0, %v4334
      %v4336 = vpop.f32.mrb[0].mxu0
      %v4337 = vpop.f32.mrb[0].mxu0
      %v4338 = vadd.f32 0.0, %v4337
      %v4339 = vpop.f32.mrb[0].mxu0
      %4340 = vmatprep.mubr.bf16.mxu0 0
      %4341 = vmatmul.mubr.bf16.gmra.mrb[0].mxu0 %v4253
      %v4342 = vpop.f32.mrb[0].mxu0
      %v4343 = vadd.f32 0.0, %v4342
      %v4344 = vpop.f32.mrb[0].mxu0
      %v4345 = vpop.f32.mrb[0].mxu0
      %v4346 = vadd.f32 0.0, %v4345
      %v4347 = vpop.f32.mrb[0].mxu0
      %4348 = vmatprep.mubr.bf16.mxu0 0
      %4349 = vmatmul.mubr.bf16.gmra.mrb[0].mxu0 %v4256
      %v4350 = vpop.f32.mrb[0].mxu0
      %v4351 = vadd.f32 0.0, %v4350
      %v4352 = vpop.f32.mrb[0].mxu0
      %v4353 = vpop.f32.mrb[0].mxu0
      %v4354 = vadd.f32 0.0, %v4353
      %v4355 = vpop.f32.mrb[0].mxu0
      %4356 = vmatprep.mubr.bf16.mxu0 0
      %4357 = vmatmul.mubr.bf16.gmra.mrb[0].mxu0 %v4259
      %v4358 = vpop.f32.mrb[0].mxu0
      %v4359 = vadd.f32 0.0, %v4358
      %v4360 = vpop.f32.mrb[0].mxu0
      %v4361 = vpop.f32.mrb[0].mxu0
      %v4362 = vadd.f32 0.0, %v4361
      %v4363 = vpop.f32.mrb[0].mxu0
      %4364 = vmatprep.mubr.bf16.mxu0 0
      %4365 = vmatmul.mubr.bf16.gmra.mrb[0].mxu0 %v4262
      %v4366 = vpop.f32.mrb[0].mxu0
      %v4367 = vadd.f32 0.0, %v4366
      %v4368 = vpop.f32.mrb[0].mxu0
      %v4369 = vpop.f32.mrb[0].mxu0
      %v4370 = vadd.f32 0.0, %v4369
      %v4371 = vpop.f32.mrb[0].mxu0
      %4372 = vmatprep.mubr.bf16.mxu0 0
      %4373 = vmatmul.mubr.bf16.gmra.mrb[0].mxu0 %v4265
      %v4374 = vpop.f32.mrb[0].mxu0
      %v4375 = vadd.f32 0.0, %v4374
      %v4376 = vpop.f32.mrb[0].mxu0
      %v4377 = vpop.f32.mrb[0].mxu0
      %v4378 = vadd.f32 0.0, %v4377
      %v4379 = vpop.f32.mrb[0].mxu0
      %4380 = vmatprep.mubr.bf16.mxu0 0
      %4381 = vmatmul.mubr.bf16.gmra.mrb[0].mxu0 %v4268
      %v4382 = vpop.f32.mrb[0].mxu0
      %v4383 = vadd.f32 0.0, %v4382
      %v4384 = vpop.f32.mrb[0].mxu0
      %v4385 = vpop.f32.mrb[0].mxu0
      %v4386 = vadd.f32 0.0, %v4385
      %v4387 = vpop.f32.mrb[0].mxu0
      %4388 = vmatprep.mubr.bf16.mxu0 0
      %4389 = vmatmul.mubr.bf16.gmra.mrb[0].mxu0 %v4271
      %v4390 = vpop.f32.mrb[0].mxu0
      %v4391 = vadd.f32 0.0, %v4390
      %v4392 = vpop.f32.mrb[0].mxu0
      %v4393 = vpop.f32.mrb[0].mxu0
      %v4394 = vadd.f32 0.0, %v4393
      %v4395 = vpop.f32.mrb[0].mxu0
      %4396 = vmatprep.mubr.bf16.mxu0 0
      %4397 = vmatmul.mubr.bf16.gmra.mrb[0].mxu0 %v4274
      %v4398 = vpop.f32.mrb[0].mxu0
      %v4399 = vadd.f32 0.0, %v4398
      %v4400 = vpop.f32.mrb[0].mxu0
      %v4401 = vpop.f32.mrb[0].mxu0
      %v4402 = vadd.f32 0.0, %v4401
      %v4403 = vpop.f32.mrb[0].mxu0
      %4404 = vmatprep.mubr.bf16.mxu0 0
      %4405 = vmatmul.mubr.bf16.gmra.mrb[0].mxu0 %v4277
      %v4406 = vpop.f32.mrb[0].mxu0
      %v4407 = vadd.f32 0.0, %v4406
      %v4408 = vpop.f32.mrb[0].mxu0
      %v4409 = vpop.f32.mrb[0].mxu0
      %v4410 = vadd.f32 0.0, %v4409
      %v4411 = vpop.f32.mrb[0].mxu0
      %4412 = vmatprep.mubr.bf16.mxu0 0
      %4413 = vmatmul.mubr.bf16.gmra.mrb[0].mxu0 %v4280
      %v4414 = vpop.f32.mrb[0].mxu0
      %v4415 = vadd.f32 0.0, %v4414
      %v4416 = vpop.f32.mrb[0].mxu0
      %v4417 = vpop.f32.mrb[0].mxu0
      %v4418 = vadd.f32 0.0, %v4417
      %v4419 = vpop.f32.mrb[0].mxu0
      %4420 = vmatprep.mubr.bf16.mxu0 0
      %4421 = vmatmul.mubr.bf16.gmra.mrb[0].mxu0 %v4283
      %v4422 = vpop.f32.mrb[0].mxu0
      %v4423 = vadd.f32 0.0, %v4422
      %v4424 = vpop.f32.mrb[0].mxu0
      %v4425 = vpop.f32.mrb[0].mxu0
      %v4426 = vadd.f32 0.0, %v4425
      %v4427 = vpop.f32.mrb[0].mxu0
      %4428 = vmatprep.mubr.bf16.mxu0 0
      %4429 = vmatmul.mubr.bf16.gmra.mrb[0].mxu0 %v4286
      %v4430 = vpop.f32.mrb[0].mxu0
      %v4431 = vadd.f32 0.0, %v4430
      %v4432 = vpop.f32.mrb[0].mxu0
      %v4433 = vpop.f32.mrb[0].mxu0
      %v4434 = vadd.f32 0.0, %v4433
      %v4435 = vpop.f32.mrb[0].mxu0
      %4436 = vmatprep.mubr.bf16.mxu0 0
      %4437 = vmatmul.mubr.bf16.gmra.mrb[0].mxu0 %v4289
      %v4438 = vpop.f32.mrb[0].mxu0
      %v4439 = vadd.f32 0.0, %v4438
      %v4440 = vpop.f32.mrb[0].mxu0
      %v4441 = vpop.f32.mrb[0].mxu0
      %v4442 = vadd.f32 0.0, %v4441
      %v4443 = vpop.f32.mrb[0].mxu0
      %4444 = vmatprep.mubr.bf16.mxu0 0
      %4445 = vmatmul.mubr.bf16.gmra.mrb[0].mxu0 %v4292
      %v4446 = vpop.f32.mrb[0].mxu0
      %v4447 = vadd.f32 0.0, %v4446
      %v4448 = vpop.f32.mrb[0].mxu0
      %v4449 = vpop.f32.mrb[0].mxu0
      %v4450 = vadd.f32 0.0, %v4449
      %v4451 = vpop.f32.mrb[0].mxu0
      %4452 = vmatprep.mubr.bf16.mxu0 0
      %4453 = vmatmul.mubr.bf16.gmra.mrb[0].mxu0 %v4295
      %v4454 = vpop.f32.mrb[0].mxu0
      %v4455 = vadd.f32 0.0, %v4454
      %v4456 = vpop.f32.mrb[0].mxu0
      %v4457 = vpop.f32.mrb[0].mxu0
      %v4458 = vadd.f32 0.0, %v4457
      %v4459 = vpop.f32.mrb[0].mxu0
      %4460 = vdwg.mxu0
      %v4461 = vadd.f32 %v4167, %v4335
      %v4462 = vadd.f32 %v4168, %v4338
      %v4463 = vadd.f32 %v4169, %v4343
      %v4464 = vadd.f32 %v4170, %v4346
      %v4465 = vadd.f32 %v4171, %v4351
      %v4466 = vadd.f32 %v4172, %v4354
      %v4467 = vadd.f32 %v4173, %v4359
      %v4468 = vadd.f32 %v4174, %v4362
      %v4469 = vadd.f32 %v4175, %v4367
      %v4470 = vadd.f32 %v4176, %v4370
      %v4471 = vadd.f32 %v4177, %v4375
      %v4472 = vadd.f32 %v4178, %v4378
      %v4473 = vadd.f32 %v4179, %v4383
      %v4474 = vadd.f32 %v4180, %v4386
      %v4475 = vadd.f32 %v4181, %v4391
      %v4476 = vadd.f32 %v4182, %v4394
      %v4477 = vadd.f32 %v4183, %v4399
      %v4478 = vadd.f32 %v4184, %v4402
      %v4479 = vadd.f32 %v4185, %v4407
      %v4480 = vadd.f32 %v4186, %v4410
      %v4481 = vadd.f32 %v4187, %v4415
      %v4482 = vadd.f32 %v4188, %v4418
      %v4483 = vadd.f32 %v4189, %v4423
      %v4484 = vadd.f32 %v4190, %v4426
      %v4485 = vadd.f32 %v4191, %v4431
      %v4486 = vadd.f32 %v4192, %v4434
      %v4487 = vadd.f32 %v4193, %v4439
      %v4488 = vadd.f32 %v4194, %v4442
      %v4489 = vadd.f32 %v4195, %v4447
      %v4490 = vadd.f32 %v4196, %v4450
      %v4491 = vadd.f32 %v4197, %v4455
      %v4492 = vadd.f32 %v4198, %v4458
      %v4493 = vld [vmem:[%s3055 + $0x2] sm:$0xff]
      %v4494 = vld [vmem:[%s3055 + $0xa] sm:$0xff]
      %v4495 = vld [vmem:[%s3055 + $0x1a] sm:$0xff]
      %v4496 = vld [vmem:[%s3055 + $0x22] sm:$0xff]
      %v4497 = vld [vmem:[%s3055 + $0x32] sm:$0xff]
      %v4498 = vld [vmem:[%s3055 + $0x3a] sm:$0xff]
      %v4499 = vld [vmem:[%s3055 + $0x4a] sm:$0xff]
      %v4500 = vld [vmem:[%s3055 + $0x52] sm:$0xff]
      %v4501 = vld [vmem:[%s3055 + $0x62] sm:$0xff]
      %v4502 = vld [vmem:[%s3055 + $0x6a] sm:$0xff]
      %v4503 = vld [vmem:[%s3055 + $0x7a] sm:$0xff]
      %v4504 = vld [vmem:[%s3055 + $0x82] sm:$0xff]
      %v4505 = vld [vmem:[%s3055 + $0x92] sm:$0xff]
      %v4506 = vld [vmem:[%s3055 + $0x9a] sm:$0xff]
      %v4507 = vld [vmem:[%s3055 + $0xaa] sm:$0xff]
      %v4508 = vld [vmem:[%s3055 + $0xb2] sm:$0xff]
      %v4509 = vld [vmem:[%s3055 + $0xc2] sm:$0xff]
      %v4510 = vld [vmem:[%s3055 + $0xca] sm:$0xff]
      %v4511 = vld [vmem:[%s3055 + $0xda] sm:$0xff]
      %v4512 = vld [vmem:[%s3055 + $0xe2] sm:$0xff]
      %v4513 = vld [vmem:[%s3055 + $0xf2] sm:$0xff]
      %v4514 = vld [vmem:[%s3055 + $0xfa] sm:$0xff]
      %v4515 = vld [vmem:[%s3055 + $0x10a] sm:$0xff]
      %v4516 = vld [vmem:[%s3055 + $0x112] sm:$0xff]
      %v4517 = vld [vmem:[%s3055 + $0x122] sm:$0xff]
      %v4518 = vld [vmem:[%s3055 + $0x12a] sm:$0xff]
      %v4519 = vld [vmem:[%s3055 + $0x13a] sm:$0xff]
      %v4520 = vld [vmem:[%s3055 + $0x142] sm:$0xff]
      %v4521 = vld [vmem:[%s3055 + $0x152] sm:$0xff]
      %v4522 = vld [vmem:[%s3055 + $0x15a] sm:$0xff]
      %v4523 = vld [vmem:[%s3055 + $0x16a] sm:$0xff]
      %v4524 = vld [vmem:[%s3055 + $0x172] sm:$0xff]
      %v4525 = vpack.c.bf16 %v4494, %v4493
      %v4526 = vpack.c.bf16 %v4496, %v4495
      %v4527 = vpack.c.bf16 %v4498, %v4497
      %v4528 = vpack.c.bf16 %v4500, %v4499
      %v4529 = vpack.c.bf16 %v4502, %v4501
      %v4530 = vpack.c.bf16 %v4504, %v4503
      %v4531 = vpack.c.bf16 %v4506, %v4505
      %v4532 = vpack.c.bf16 %v4508, %v4507
      %v4533 = vpack.c.bf16 %v4510, %v4509
      %v4534 = vpack.c.bf16 %v4512, %v4511
      %v4535 = vpack.c.bf16 %v4514, %v4513
      %v4536 = vpack.c.bf16 %v4516, %v4515
      %v4537 = vpack.c.bf16 %v4518, %v4517
      %v4538 = vpack.c.bf16 %v4520, %v4519
      %v4539 = vpack.c.bf16 %v4522, %v4521
      %v4540 = vpack.c.bf16 %v4524, %v4523
      %s4541 = scalar_lea.vmem %s3, 20
      %v4542 = vld [vmem:[%s4541] sm:$0xf]
      %v4544 = vsel %vm226, %v4525, 0
      %v4547 = vsel %vm226, %v4526, 0
      %v4550 = vsel %vm226, %v4527, 0
      %v4553 = vsel %vm226, %v4528, 0
      %v4556 = vsel %vm226, %v4529, 0
      %v4559 = vsel %vm226, %v4530, 0
      %v4562 = vsel %vm226, %v4531, 0
      %v4565 = vsel %vm226, %v4532, 0
      %v4568 = vsel %vm226, %v4533, 0
      %v4571 = vsel %vm226, %v4534, 0
      %v4574 = vsel %vm226, %v4535, 0
      %v4577 = vsel %vm226, %v4536, 0
      %v4580 = vsel %vm226, %v4537, 0
      %v4583 = vsel %vm226, %v4538, 0
      %v4586 = vsel %vm226, %v4539, 0
      %v4589 = vsel %vm226, %v4540, 0
      %v4592 = vsel %vm548, %v4542, 0
      %4594 = vmatprep.subr.bf16.mxu0 0
      %4595 = vmatpush1.bf16.msra.mxu0 %v4592
      %4596 = vmatprep.subr.bf16.mxu0 0
      %4597 = vmatpush1.bf16.msra.mxu0 0
      %4598 = vmatprep.subr.bf16.mxu0 0
      %4599 = vmatpush1.bf16.msra.mxu0 0
      %4600 = vmatprep.subr.bf16.mxu0 0
      %4601 = vmatpush1.bf16.msra.mxu0 0
      %4602 = vmatprep.subr.bf16.mxu0 0
      %4603 = vmatpush1.bf16.msra.mxu0 0
      %4604 = vmatprep.subr.bf16.mxu0 0
      %4605 = vmatpush1.bf16.msra.mxu0 0
      %4606 = vmatprep.subr.bf16.mxu0 0
      %4607 = vmatpush1.bf16.msra.mxu0 0
      %4608 = vmatprep.subr.bf16.mxu0 0
      %4609 = vmatpush1.bf16.msra.mxu0 0
      %4610 = vmatprep.subr.bf16.mxu0 0
      %4611 = vmatpush1.bf16.msra.mxu0 0
      %4612 = vmatprep.subr.bf16.mxu0 0
      %4613 = vmatpush1.bf16.msra.mxu0 0
      %4614 = vmatprep.subr.bf16.mxu0 0
      %4615 = vmatpush1.bf16.msra.mxu0 0
      %4616 = vmatprep.subr.bf16.mxu0 0
      %4617 = vmatpush1.bf16.msra.mxu0 0
      %4618 = vmatprep.subr.bf16.mxu0 0
      %4619 = vmatpush1.bf16.msra.mxu0 0
      %4620 = vmatprep.subr.bf16.mxu0 0
      %4621 = vmatpush1.bf16.msra.mxu0 0
      %4622 = vmatprep.subr.bf16.mxu0 0
      %4623 = vmatpush1.bf16.msra.mxu0 0
      %4624 = vmatprep.subr.bf16.mxu0 0
      %4625 = vmatpush1.bf16.msra.mxu0 0
      %4626 = vmatprep.mubr.bf16.mxu0 0
      %4627 = vmatmul.mubr.bf16.gmra.mrb[0].mxu0 %v4544
      %v4628 = vpop.f32.mrb[0].mxu0
      %v4629 = vadd.f32 0.0, %v4628
      %v4630 = vpop.f32.mrb[0].mxu0
      %v4631 = vpop.f32.mrb[0].mxu0
      %v4632 = vadd.f32 0.0, %v4631
      %v4633 = vpop.f32.mrb[0].mxu0
      %4634 = vmatprep.mubr.bf16.mxu0 0
      %4635 = vmatmul.mubr.bf16.gmra.mrb[0].mxu0 %v4547
      %v4636 = vpop.f32.mrb[0].mxu0
      %v4637 = vadd.f32 0.0, %v4636
      %v4638 = vpop.f32.mrb[0].mxu0
      %v4639 = vpop.f32.mrb[0].mxu0
      %v4640 = vadd.f32 0.0, %v4639
      %v4641 = vpop.f32.mrb[0].mxu0
      %4642 = vmatprep.mubr.bf16.mxu0 0
      %4643 = vmatmul.mubr.bf16.gmra.mrb[0].mxu0 %v4550
      %v4644 = vpop.f32.mrb[0].mxu0
      %v4645 = vadd.f32 0.0, %v4644
      %v4646 = vpop.f32.mrb[0].mxu0
      %v4647 = vpop.f32.mrb[0].mxu0
      %v4648 = vadd.f32 0.0, %v4647
      %v4649 = vpop.f32.mrb[0].mxu0
      %4650 = vmatprep.mubr.bf16.mxu0 0
      %4651 = vmatmul.mubr.bf16.gmra.mrb[0].mxu0 %v4553
      %v4652 = vpop.f32.mrb[0].mxu0
      %v4653 = vadd.f32 0.0, %v4652
      %v4654 = vpop.f32.mrb[0].mxu0
      %v4655 = vpop.f32.mrb[0].mxu0
      %v4656 = vadd.f32 0.0, %v4655
      %v4657 = vpop.f32.mrb[0].mxu0
      %4658 = vmatprep.mubr.bf16.mxu0 0
      %4659 = vmatmul.mubr.bf16.gmra.mrb[0].mxu0 %v4556
      %v4660 = vpop.f32.mrb[0].mxu0
      %v4661 = vadd.f32 0.0, %v4660
      %v4662 = vpop.f32.mrb[0].mxu0
      %v4663 = vpop.f32.mrb[0].mxu0
      %v4664 = vadd.f32 0.0, %v4663
      %v4665 = vpop.f32.mrb[0].mxu0
      %4666 = vmatprep.mubr.bf16.mxu0 0
      %4667 = vmatmul.mubr.bf16.gmra.mrb[0].mxu0 %v4559
      %v4668 = vpop.f32.mrb[0].mxu0
      %v4669 = vadd.f32 0.0, %v4668
      %v4670 = vpop.f32.mrb[0].mxu0
      %v4671 = vpop.f32.mrb[0].mxu0
      %v4672 = vadd.f32 0.0, %v4671
      %v4673 = vpop.f32.mrb[0].mxu0
      %4674 = vmatprep.mubr.bf16.mxu0 0
      %4675 = vmatmul.mubr.bf16.gmra.mrb[0].mxu0 %v4562
      %v4676 = vpop.f32.mrb[0].mxu0
      %v4677 = vadd.f32 0.0, %v4676
      %v4678 = vpop.f32.mrb[0].mxu0
      %v4679 = vpop.f32.mrb[0].mxu0
      %v4680 = vadd.f32 0.0, %v4679
      %v4681 = vpop.f32.mrb[0].mxu0
      %4682 = vmatprep.mubr.bf16.mxu0 0
      %4683 = vmatmul.mubr.bf16.gmra.mrb[0].mxu0 %v4565
      %v4684 = vpop.f32.mrb[0].mxu0
      %v4685 = vadd.f32 0.0, %v4684
      %v4686 = vpop.f32.mrb[0].mxu0
      %v4687 = vpop.f32.mrb[0].mxu0
      %v4688 = vadd.f32 0.0, %v4687
      %v4689 = vpop.f32.mrb[0].mxu0
      %4690 = vmatprep.mubr.bf16.mxu0 0
      %4691 = vmatmul.mubr.bf16.gmra.mrb[0].mxu0 %v4568
      %v4692 = vpop.f32.mrb[0].mxu0
      %v4693 = vadd.f32 0.0, %v4692
      %v4694 = vpop.f32.mrb[0].mxu0
      %v4695 = vpop.f32.mrb[0].mxu0
      %v4696 = vadd.f32 0.0, %v4695
      %v4697 = vpop.f32.mrb[0].mxu0
      %4698 = vmatprep.mubr.bf16.mxu0 0
      %4699 = vmatmul.mubr.bf16.gmra.mrb[0].mxu0 %v4571
      %v4700 = vpop.f32.mrb[0].mxu0
      %v4701 = vadd.f32 0.0, %v4700
      %v4702 = vpop.f32.mrb[0].mxu0
      %v4703 = vpop.f32.mrb[0].mxu0
      %v4704 = vadd.f32 0.0, %v4703
      %v4705 = vpop.f32.mrb[0].mxu0
      %4706 = vmatprep.mubr.bf16.mxu0 0
      %4707 = vmatmul.mubr.bf16.gmra.mrb[0].mxu0 %v4574
      %v4708 = vpop.f32.mrb[0].mxu0
      %v4709 = vadd.f32 0.0, %v4708
      %v4710 = vpop.f32.mrb[0].mxu0
      %v4711 = vpop.f32.mrb[0].mxu0
      %v4712 = vadd.f32 0.0, %v4711
      %v4713 = vpop.f32.mrb[0].mxu0
      %4714 = vmatprep.mubr.bf16.mxu0 0
      %4715 = vmatmul.mubr.bf16.gmra.mrb[0].mxu0 %v4577
      %v4716 = vpop.f32.mrb[0].mxu0
      %v4717 = vadd.f32 0.0, %v4716
      %v4718 = vpop.f32.mrb[0].mxu0
      %v4719 = vpop.f32.mrb[0].mxu0
      %v4720 = vadd.f32 0.0, %v4719
      %v4721 = vpop.f32.mrb[0].mxu0
      %4722 = vmatprep.mubr.bf16.mxu0 0
      %4723 = vmatmul.mubr.bf16.gmra.mrb[0].mxu0 %v4580
      %v4724 = vpop.f32.mrb[0].mxu0
      %v4725 = vadd.f32 0.0, %v4724
      %v4726 = vpop.f32.mrb[0].mxu0
      %v4727 = vpop.f32.mrb[0].mxu0
      %v4728 = vadd.f32 0.0, %v4727
      %v4729 = vpop.f32.mrb[0].mxu0
      %4730 = vmatprep.mubr.bf16.mxu0 0
      %4731 = vmatmul.mubr.bf16.gmra.mrb[0].mxu0 %v4583
      %v4732 = vpop.f32.mrb[0].mxu0
      %v4733 = vadd.f32 0.0, %v4732
      %v4734 = vpop.f32.mrb[0].mxu0
      %v4735 = vpop.f32.mrb[0].mxu0
      %v4736 = vadd.f32 0.0, %v4735
      %v4737 = vpop.f32.mrb[0].mxu0
      %4738 = vmatprep.mubr.bf16.mxu0 0
      %4739 = vmatmul.mubr.bf16.gmra.mrb[0].mxu0 %v4586
      %v4740 = vpop.f32.mrb[0].mxu0
      %v4741 = vadd.f32 0.0, %v4740
      %v4742 = vpop.f32.mrb[0].mxu0
      %v4743 = vpop.f32.mrb[0].mxu0
      %v4744 = vadd.f32 0.0, %v4743
      %v4745 = vpop.f32.mrb[0].mxu0
      %4746 = vmatprep.mubr.bf16.mxu0 0
      %4747 = vmatmul.mubr.bf16.gmra.mrb[0].mxu0 %v4589
      %v4748 = vpop.f32.mrb[0].mxu0
      %v4749 = vadd.f32 0.0, %v4748
      %v4750 = vpop.f32.mrb[0].mxu0
      %v4751 = vpop.f32.mrb[0].mxu0
      %v4752 = vadd.f32 0.0, %v4751
      %v4753 = vpop.f32.mrb[0].mxu0
      %4754 = vdwg.mxu0
      %v4755 = vadd.f32 %v4461, %v4629
      %v4756 = vadd.f32 %v4462, %v4632
      %v4757 = vadd.f32 %v4463, %v4637
      %v4758 = vadd.f32 %v4464, %v4640
      %v4759 = vadd.f32 %v4465, %v4645
      %v4760 = vadd.f32 %v4466, %v4648
      %v4761 = vadd.f32 %v4467, %v4653
      %v4762 = vadd.f32 %v4468, %v4656
      %v4763 = vadd.f32 %v4469, %v4661
      %v4764 = vadd.f32 %v4470, %v4664
      %v4765 = vadd.f32 %v4471, %v4669
      %v4766 = vadd.f32 %v4472, %v4672
      %v4767 = vadd.f32 %v4473, %v4677
      %v4768 = vadd.f32 %v4474, %v4680
      %v4769 = vadd.f32 %v4475, %v4685
      %v4770 = vadd.f32 %v4476, %v4688
      %v4771 = vadd.f32 %v4477, %v4693
      %v4772 = vadd.f32 %v4478, %v4696
      %v4773 = vadd.f32 %v4479, %v4701
      %v4774 = vadd.f32 %v4480, %v4704
      %v4775 = vadd.f32 %v4481, %v4709
      %v4776 = vadd.f32 %v4482, %v4712
      %v4777 = vadd.f32 %v4483, %v4717
      %v4778 = vadd.f32 %v4484, %v4720
      %v4779 = vadd.f32 %v4485, %v4725
      %v4780 = vadd.f32 %v4486, %v4728
      %v4781 = vadd.f32 %v4487, %v4733
      %v4782 = vadd.f32 %v4488, %v4736
      %v4783 = vadd.f32 %v4489, %v4741
      %v4784 = vadd.f32 %v4490, %v4744
      %v4785 = vadd.f32 %v4491, %v4749
      %v4786 = vadd.f32 %v4492, %v4752
      %s4787 = scalar_lea.vmem [#allocation3], 48
      %v4788 = vld [vmem:[%s4787] sm:$0xff]
      %v4789 = vld [vmem:[%s4787 + $0x8] sm:$0xff]
      %v4790 = vld [vmem:[%s4787 + $0x18] sm:$0xff]
      %v4791 = vld [vmem:[%s4787 + $0x20] sm:$0xff]
      %v4792 = vld [vmem:[%s4787 + $0x30] sm:$0xff]
      %v4793 = vld [vmem:[%s4787 + $0x38] sm:$0xff]
      %v4794 = vld [vmem:[%s4787 + $0x48] sm:$0xff]
      %v4795 = vld [vmem:[%s4787 + $0x50] sm:$0xff]
      %v4796 = vld [vmem:[%s4787 + $0x60] sm:$0xff]
      %v4797 = vld [vmem:[%s4787 + $0x68] sm:$0xff]
      %v4798 = vld [vmem:[%s4787 + $0x78] sm:$0xff]
      %v4799 = vld [vmem:[%s4787 + $0x80] sm:$0xff]
      %v4800 = vld [vmem:[%s4787 + $0x90] sm:$0xff]
      %v4801 = vld [vmem:[%s4787 + $0x98] sm:$0xff]
      %v4802 = vld [vmem:[%s4787 + $0xa8] sm:$0xff]
      %v4803 = vld [vmem:[%s4787 + $0xb0] sm:$0xff]
      %v4804 = vld [vmem:[%s4787 + $0xc0] sm:$0xff]
      %v4805 = vld [vmem:[%s4787 + $0xc8] sm:$0xff]
      %v4806 = vld [vmem:[%s4787 + $0xd8] sm:$0xff]
      %v4807 = vld [vmem:[%s4787 + $0xe0] sm:$0xff]
      %v4808 = vld [vmem:[%s4787 + $0xf0] sm:$0xff]
      %v4809 = vld [vmem:[%s4787 + $0xf8] sm:$0xff]
      %v4810 = vld [vmem:[%s4787 + $0x108] sm:$0xff]
      %v4811 = vld [vmem:[%s4787 + $0x110] sm:$0xff]
      %v4812 = vld [vmem:[%s4787 + $0x120] sm:$0xff]
      %v4813 = vld [vmem:[%s4787 + $0x128] sm:$0xff]
      %v4814 = vld [vmem:[%s4787 + $0x138] sm:$0xff]
      %v4815 = vld [vmem:[%s4787 + $0x140] sm:$0xff]
      %v4816 = vld [vmem:[%s4787 + $0x150] sm:$0xff]
      %v4817 = vld [vmem:[%s4787 + $0x158] sm:$0xff]
      %v4818 = vld [vmem:[%s4787 + $0x168] sm:$0xff]
      %v4819 = vld [vmem:[%s4787 + $0x170] sm:$0xff]
      %v4820 = vpack.c.bf16 %v4789, %v4788
      %v4821 = vpack.c.bf16 %v4791, %v4790
      %v4822 = vpack.c.bf16 %v4793, %v4792
      %v4823 = vpack.c.bf16 %v4795, %v4794
      %v4824 = vpack.c.bf16 %v4797, %v4796
      %v4825 = vpack.c.bf16 %v4799, %v4798
      %v4826 = vpack.c.bf16 %v4801, %v4800
      %v4827 = vpack.c.bf16 %v4803, %v4802
      %v4828 = vpack.c.bf16 %v4805, %v4804
      %v4829 = vpack.c.bf16 %v4807, %v4806
      %v4830 = vpack.c.bf16 %v4809, %v4808
      %v4831 = vpack.c.bf16 %v4811, %v4810
      %v4832 = vpack.c.bf16 %v4813, %v4812
      %v4833 = vpack.c.bf16 %v4815, %v4814
      %v4834 = vpack.c.bf16 %v4817, %v4816
      %v4835 = vpack.c.bf16 %v4819, %v4818
      %s4836 = scalar_lea.vmem %s3, 24
      %v4837 = vld [vmem:[%s4836] sm:$0xf]
      %v4839 = vsel %vm226, %v4820, 0
      %v4842 = vsel %vm226, %v4821, 0
      %v4845 = vsel %vm226, %v4822, 0
      %v4848 = vsel %vm226, %v4823, 0
      %v4851 = vsel %vm226, %v4824, 0
      %v4854 = vsel %vm226, %v4825, 0
      %v4857 = vsel %vm226, %v4826, 0
      %v4860 = vsel %vm226, %v4827, 0
      %v4863 = vsel %vm226, %v4828, 0
      %v4866 = vsel %vm226, %v4829, 0
      %v4869 = vsel %vm226, %v4830, 0
      %v4872 = vsel %vm226, %v4831, 0
      %v4875 = vsel %vm226, %v4832, 0
      %v4878 = vsel %vm226, %v4833, 0
      %v4881 = vsel %vm226, %v4834, 0
      %v4884 = vsel %vm226, %v4835, 0
      %v4887 = vsel %vm548, %v4837, 0
      %4889 = vmatprep.subr.bf16.mxu0 0
      %4890 = vmatpush1.bf16.msra.mxu0 %v4887
      %4891 = vmatprep.subr.bf16.mxu0 0
      %4892 = vmatpush1.bf16.msra.mxu0 0
      %4893 = vmatprep.subr.bf16.mxu0 0
      %4894 = vmatpush1.bf16.msra.mxu0 0
      %4895 = vmatprep.subr.bf16.mxu0 0
      %4896 = vmatpush1.bf16.msra.mxu0 0
      %4897 = vmatprep.subr.bf16.mxu0 0
      %4898 = vmatpush1.bf16.msra.mxu0 0
      %4899 = vmatprep.subr.bf16.mxu0 0
      %4900 = vmatpush1.bf16.msra.mxu0 0
      %4901 = vmatprep.subr.bf16.mxu0 0
      %4902 = vmatpush1.bf16.msra.mxu0 0
      %4903 = vmatprep.subr.bf16.mxu0 0
      %4904 = vmatpush1.bf16.msra.mxu0 0
      %4905 = vmatprep.subr.bf16.mxu0 0
      %4906 = vmatpush1.bf16.msra.mxu0 0
      %4907 = vmatprep.subr.bf16.mxu0 0
      %4908 = vmatpush1.bf16.msra.mxu0 0
      %4909 = vmatprep.subr.bf16.mxu0 0
      %4910 = vmatpush1.bf16.msra.mxu0 0
      %4911 = vmatprep.subr.bf16.mxu0 0
      %4912 = vmatpush1.bf16.msra.mxu0 0
      %4913 = vmatprep.subr.bf16.mxu0 0
      %4914 = vmatpush1.bf16.msra.mxu0 0
      %4915 = vmatprep.subr.bf16.mxu0 0
      %4916 = vmatpush1.bf16.msra.mxu0 0
      %4917 = vmatprep.subr.bf16.mxu0 0
      %4918 = vmatpush1.bf16.msra.mxu0 0
      %4919 = vmatprep.subr.bf16.mxu0 0
      %4920 = vmatpush1.bf16.msra.mxu0 0
      %4921 = vmatprep.mubr.bf16.mxu0 0
      %4922 = vmatmul.mubr.bf16.gmra.mrb[0].mxu0 %v4839
      %v4923 = vpop.f32.mrb[0].mxu0
      %v4924 = vadd.f32 0.0, %v4923
      %v4925 = vpop.f32.mrb[0].mxu0
      %v4926 = vpop.f32.mrb[0].mxu0
      %v4927 = vadd.f32 0.0, %v4926
      %v4928 = vpop.f32.mrb[0].mxu0
      %4929 = vmatprep.mubr.bf16.mxu0 0
      %4930 = vmatmul.mubr.bf16.gmra.mrb[0].mxu0 %v4842
      %v4931 = vpop.f32.mrb[0].mxu0
      %v4932 = vadd.f32 0.0, %v4931
      %v4933 = vpop.f32.mrb[0].mxu0
      %v4934 = vpop.f32.mrb[0].mxu0
      %v4935 = vadd.f32 0.0, %v4934
      %v4936 = vpop.f32.mrb[0].mxu0
      %4937 = vmatprep.mubr.bf16.mxu0 0
      %4938 = vmatmul.mubr.bf16.gmra.mrb[0].mxu0 %v4845
      %v4939 = vpop.f32.mrb[0].mxu0
      %v4940 = vadd.f32 0.0, %v4939
      %v4941 = vpop.f32.mrb[0].mxu0
      %v4942 = vpop.f32.mrb[0].mxu0
      %v4943 = vadd.f32 0.0, %v4942
      %v4944 = vpop.f32.mrb[0].mxu0
      %4945 = vmatprep.mubr.bf16.mxu0 0
      %4946 = vmatmul.mubr.bf16.gmra.mrb[0].mxu0 %v4848
      %v4947 = vpop.f32.mrb[0].mxu0
      %v4948 = vadd.f32 0.0, %v4947
      %v4949 = vpop.f32.mrb[0].mxu0
      %v4950 = vpop.f32.mrb[0].mxu0
      %v4951 = vadd.f32 0.0, %v4950
      %v4952 = vpop.f32.mrb[0].mxu0
      %4953 = vmatprep.mubr.bf16.mxu0 0
      %4954 = vmatmul.mubr.bf16.gmra.mrb[0].mxu0 %v4851
      %v4955 = vpop.f32.mrb[0].mxu0
      %v4956 = vadd.f32 0.0, %v4955
      %v4957 = vpop.f32.mrb[0].mxu0
      %v4958 = vpop.f32.mrb[0].mxu0
      %v4959 = vadd.f32 0.0, %v4958
      %v4960 = vpop.f32.mrb[0].mxu0
      %4961 = vmatprep.mubr.bf16.mxu0 0
      %4962 = vmatmul.mubr.bf16.gmra.mrb[0].mxu0 %v4854
      %v4963 = vpop.f32.mrb[0].mxu0
      %v4964 = vadd.f32 0.0, %v4963
      %v4965 = vpop.f32.mrb[0].mxu0
      %v4966 = vpop.f32.mrb[0].mxu0
      %v4967 = vadd.f32 0.0, %v4966
      %v4968 = vpop.f32.mrb[0].mxu0
      %4969 = vmatprep.mubr.bf16.mxu0 0
      %4970 = vmatmul.mubr.bf16.gmra.mrb[0].mxu0 %v4857
      %v4971 = vpop.f32.mrb[0].mxu0
      %v4972 = vadd.f32 0.0, %v4971
      %v4973 = vpop.f32.mrb[0].mxu0
      %v4974 = vpop.f32.mrb[0].mxu0
      %v4975 = vadd.f32 0.0, %v4974
      %v4976 = vpop.f32.mrb[0].mxu0
      %4977 = vmatprep.mubr.bf16.mxu0 0
      %4978 = vmatmul.mubr.bf16.gmra.mrb[0].mxu0 %v4860
      %v4979 = vpop.f32.mrb[0].mxu0
      %v4980 = vadd.f32 0.0, %v4979
      %v4981 = vpop.f32.mrb[0].mxu0
      %v4982 = vpop.f32.mrb[0].mxu0
      %v4983 = vadd.f32 0.0, %v4982
      %v4984 = vpop.f32.mrb[0].mxu0
      %4985 = vmatprep.mubr.bf16.mxu0 0
      %4986 = vmatmul.mubr.bf16.gmra.mrb[0].mxu0 %v4863
      %v4987 = vpop.f32.mrb[0].mxu0
      %v4988 = vadd.f32 0.0, %v4987
      %v4989 = vpop.f32.mrb[0].mxu0
      %v4990 = vpop.f32.mrb[0].mxu0
      %v4991 = vadd.f32 0.0, %v4990
      %v4992 = vpop.f32.mrb[0].mxu0
      %4993 = vmatprep.mubr.bf16.mxu0 0
      %4994 = vmatmul.mubr.bf16.gmra.mrb[0].mxu0 %v4866
      %v4995 = vpop.f32.mrb[0].mxu0
      %v4996 = vadd.f32 0.0, %v4995
      %v4997 = vpop.f32.mrb[0].mxu0
      %v4998 = vpop.f32.mrb[0].mxu0
      %v4999 = vadd.f32 0.0, %v4998
      %v5000 = vpop.f32.mrb[0].mxu0
      %5001 = vmatprep.mubr.bf16.mxu0 0
      %5002 = vmatmul.mubr.bf16.gmra.mrb[0].mxu0 %v4869
      %v5003 = vpop.f32.mrb[0].mxu0
      %v5004 = vadd.f32 0.0, %v5003
      %v5005 = vpop.f32.mrb[0].mxu0
      %v5006 = vpop.f32.mrb[0].mxu0
      %v5007 = vadd.f32 0.0, %v5006
      %v5008 = vpop.f32.mrb[0].mxu0
      %5009 = vmatprep.mubr.bf16.mxu0 0
      %5010 = vmatmul.mubr.bf16.gmra.mrb[0].mxu0 %v4872
      %v5011 = vpop.f32.mrb[0].mxu0
      %v5012 = vadd.f32 0.0, %v5011
      %v5013 = vpop.f32.mrb[0].mxu0
      %v5014 = vpop.f32.mrb[0].mxu0
      %v5015 = vadd.f32 0.0, %v5014
      %v5016 = vpop.f32.mrb[0].mxu0
      %5017 = vmatprep.mubr.bf16.mxu0 0
      %5018 = vmatmul.mubr.bf16.gmra.mrb[0].mxu0 %v4875
      %v5019 = vpop.f32.mrb[0].mxu0
      %v5020 = vadd.f32 0.0, %v5019
      %v5021 = vpop.f32.mrb[0].mxu0
      %v5022 = vpop.f32.mrb[0].mxu0
      %v5023 = vadd.f32 0.0, %v5022
      %v5024 = vpop.f32.mrb[0].mxu0
      %5025 = vmatprep.mubr.bf16.mxu0 0
      %5026 = vmatmul.mubr.bf16.gmra.mrb[0].mxu0 %v4878
      %v5027 = vpop.f32.mrb[0].mxu0
      %v5028 = vadd.f32 0.0, %v5027
      %v5029 = vpop.f32.mrb[0].mxu0
      %v5030 = vpop.f32.mrb[0].mxu0
      %v5031 = vadd.f32 0.0, %v5030
      %v5032 = vpop.f32.mrb[0].mxu0
      %5033 = vmatprep.mubr.bf16.mxu0 0
      %5034 = vmatmul.mubr.bf16.gmra.mrb[0].mxu0 %v4881
      %v5035 = vpop.f32.mrb[0].mxu0
      %v5036 = vadd.f32 0.0, %v5035
      %v5037 = vpop.f32.mrb[0].mxu0
      %v5038 = vpop.f32.mrb[0].mxu0
      %v5039 = vadd.f32 0.0, %v5038
      %v5040 = vpop.f32.mrb[0].mxu0
      %5041 = vmatprep.mubr.bf16.mxu0 0
      %5042 = vmatmul.mubr.bf16.gmra.mrb[0].mxu0 %v4884
      %v5043 = vpop.f32.mrb[0].mxu0
      %v5044 = vadd.f32 0.0, %v5043
      %v5045 = vpop.f32.mrb[0].mxu0
      %v5046 = vpop.f32.mrb[0].mxu0
      %v5047 = vadd.f32 0.0, %v5046
      %v5048 = vpop.f32.mrb[0].mxu0
      %5049 = vdwg.mxu0
      %v5050 = vadd.f32 %v4755, %v4924
      %v5051 = vadd.f32 %v4756, %v4927
      %v5052 = vadd.f32 %v4757, %v4932
      %v5053 = vadd.f32 %v4758, %v4935
      %v5054 = vadd.f32 %v4759, %v4940
      %v5055 = vadd.f32 %v4760, %v4943
      %v5056 = vadd.f32 %v4761, %v4948
      %v5057 = vadd.f32 %v4762, %v4951
      %v5058 = vadd.f32 %v4763, %v4956
      %v5059 = vadd.f32 %v4764, %v4959
      %v5060 = vadd.f32 %v4765, %v4964
      %v5061 = vadd.f32 %v4766, %v4967
      %v5062 = vadd.f32 %v4767, %v4972
      %v5063 = vadd.f32 %v4768, %v4975
      %v5064 = vadd.f32 %v4769, %v4980
      %v5065 = vadd.f32 %v4770, %v4983
      %v5066 = vadd.f32 %v4771, %v4988
      %v5067 = vadd.f32 %v4772, %v4991
      %v5068 = vadd.f32 %v4773, %v4996
      %v5069 = vadd.f32 %v4774, %v4999
      %v5070 = vadd.f32 %v4775, %v5004
      %v5071 = vadd.f32 %v4776, %v5007
      %v5072 = vadd.f32 %v4777, %v5012
      %v5073 = vadd.f32 %v4778, %v5015
      %v5074 = vadd.f32 %v4779, %v5020
      %v5075 = vadd.f32 %v4780, %v5023
      %v5076 = vadd.f32 %v4781, %v5028
      %v5077 = vadd.f32 %v4782, %v5031
      %v5078 = vadd.f32 %v4783, %v5036
      %v5079 = vadd.f32 %v4784, %v5039
      %v5080 = vadd.f32 %v4785, %v5044
      %v5081 = vadd.f32 %v4786, %v5047
      %v5082 = vld [vmem:[%s4787 + $0x1] sm:$0xff]
      %v5083 = vld [vmem:[%s4787 + $0x9] sm:$0xff]
      %v5084 = vld [vmem:[%s4787 + $0x19] sm:$0xff]
      %v5085 = vld [vmem:[%s4787 + $0x21] sm:$0xff]
      %v5086 = vld [vmem:[%s4787 + $0x31] sm:$0xff]
      %v5087 = vld [vmem:[%s4787 + $0x39] sm:$0xff]
      %v5088 = vld [vmem:[%s4787 + $0x49] sm:$0xff]
      %v5089 = vld [vmem:[%s4787 + $0x51] sm:$0xff]
      %v5090 = vld [vmem:[%s4787 + $0x61] sm:$0xff]
      %v5091 = vld [vmem:[%s4787 + $0x69] sm:$0xff]
      %v5092 = vld [vmem:[%s4787 + $0x79] sm:$0xff]
      %v5093 = vld [vmem:[%s4787 + $0x81] sm:$0xff]
      %v5094 = vld [vmem:[%s4787 + $0x91] sm:$0xff]
      %v5095 = vld [vmem:[%s4787 + $0x99] sm:$0xff]
      %v5096 = vld [vmem:[%s4787 + $0xa9] sm:$0xff]
      %v5097 = vld [vmem:[%s4787 + $0xb1] sm:$0xff]
      %v5098 = vld [vmem:[%s4787 + $0xc1] sm:$0xff]
      %v5099 = vld [vmem:[%s4787 + $0xc9] sm:$0xff]
      %v5100 = vld [vmem:[%s4787 + $0xd9] sm:$0xff]
      %v5101 = vld [vmem:[%s4787 + $0xe1] sm:$0xff]
      %v5102 = vld [vmem:[%s4787 + $0xf1] sm:$0xff]
      %v5103 = vld [vmem:[%s4787 + $0xf9] sm:$0xff]
      %v5104 = vld [vmem:[%s4787 + $0x109] sm:$0xff]
      %v5105 = vld [vmem:[%s4787 + $0x111] sm:$0xff]
      %v5106 = vld [vmem:[%s4787 + $0x121] sm:$0xff]
      %v5107 = vld [vmem:[%s4787 + $0x129] sm:$0xff]
      %v5108 = vld [vmem:[%s4787 + $0x139] sm:$0xff]
      %v5109 = vld [vmem:[%s4787 + $0x141] sm:$0xff]
      %v5110 = vld [vmem:[%s4787 + $0x151] sm:$0xff]
      %v5111 = vld [vmem:[%s4787 + $0x159] sm:$0xff]
      %v5112 = vld [vmem:[%s4787 + $0x169] sm:$0xff]
      %v5113 = vld [vmem:[%s4787 + $0x171] sm:$0xff]
      %v5114 = vpack.c.bf16 %v5083, %v5082
      %v5115 = vpack.c.bf16 %v5085, %v5084
      %v5116 = vpack.c.bf16 %v5087, %v5086
      %v5117 = vpack.c.bf16 %v5089, %v5088
      %v5118 = vpack.c.bf16 %v5091, %v5090
      %v5119 = vpack.c.bf16 %v5093, %v5092
      %v5120 = vpack.c.bf16 %v5095, %v5094
      %v5121 = vpack.c.bf16 %v5097, %v5096
      %v5122 = vpack.c.bf16 %v5099, %v5098
      %v5123 = vpack.c.bf16 %v5101, %v5100
      %v5124 = vpack.c.bf16 %v5103, %v5102
      %v5125 = vpack.c.bf16 %v5105, %v5104
      %v5126 = vpack.c.bf16 %v5107, %v5106
      %v5127 = vpack.c.bf16 %v5109, %v5108
      %v5128 = vpack.c.bf16 %v5111, %v5110
      %v5129 = vpack.c.bf16 %v5113, %v5112
      %s5130 = scalar_lea.vmem %s3, 28
      %v5131 = vld [vmem:[%s5130] sm:$0xf]
      %v5133 = vsel %vm226, %v5114, 0
      %v5136 = vsel %vm226, %v5115, 0
      %v5139 = vsel %vm226, %v5116, 0
      %v5142 = vsel %vm226, %v5117, 0
      %v5145 = vsel %vm226, %v5118, 0
      %v5148 = vsel %vm226, %v5119, 0
      %v5151 = vsel %vm226, %v5120, 0
      %v5154 = vsel %vm226, %v5121, 0
      %v5157 = vsel %vm226, %v5122, 0
      %v5160 = vsel %vm226, %v5123, 0
      %v5163 = vsel %vm226, %v5124, 0
      %v5166 = vsel %vm226, %v5125, 0
      %v5169 = vsel %vm226, %v5126, 0
      %v5172 = vsel %vm226, %v5127, 0
      %v5175 = vsel %vm226, %v5128, 0
      %v5178 = vsel %vm226, %v5129, 0
      %v5181 = vsel %vm548, %v5131, 0
      %5183 = vmatprep.subr.bf16.mxu0 0
      %5184 = vmatpush1.bf16.msra.mxu0 %v5181
      %5185 = vmatprep.subr.bf16.mxu0 0
      %5186 = vmatpush1.bf16.msra.mxu0 0
      %5187 = vmatprep.subr.bf16.mxu0 0
      %5188 = vmatpush1.bf16.msra.mxu0 0
      %5189 = vmatprep.subr.bf16.mxu0 0
      %5190 = vmatpush1.bf16.msra.mxu0 0
      %5191 = vmatprep.subr.bf16.mxu0 0
      %5192 = vmatpush1.bf16.msra.mxu0 0
      %5193 = vmatprep.subr.bf16.mxu0 0
      %5194 = vmatpush1.bf16.msra.mxu0 0
      %5195 = vmatprep.subr.bf16.mxu0 0
      %5196 = vmatpush1.bf16.msra.mxu0 0
      %5197 = vmatprep.subr.bf16.mxu0 0
      %5198 = vmatpush1.bf16.msra.mxu0 0
      %5199 = vmatprep.subr.bf16.mxu0 0
      %5200 = vmatpush1.bf16.msra.mxu0 0
      %5201 = vmatprep.subr.bf16.mxu0 0
      %5202 = vmatpush1.bf16.msra.mxu0 0
      %5203 = vmatprep.subr.bf16.mxu0 0
      %5204 = vmatpush1.bf16.msra.mxu0 0
      %5205 = vmatprep.subr.bf16.mxu0 0
      %5206 = vmatpush1.bf16.msra.mxu0 0
      %5207 = vmatprep.subr.bf16.mxu0 0
      %5208 = vmatpush1.bf16.msra.mxu0 0
      %5209 = vmatprep.subr.bf16.mxu0 0
      %5210 = vmatpush1.bf16.msra.mxu0 0
      %5211 = vmatprep.subr.bf16.mxu0 0
      %5212 = vmatpush1.bf16.msra.mxu0 0
      %5213 = vmatprep.subr.bf16.mxu0 0
      %5214 = vmatpush1.bf16.msra.mxu0 0
      %5215 = vmatprep.mubr.bf16.mxu0 0
      %5216 = vmatmul.mubr.bf16.gmra.mrb[0].mxu0 %v5133
      %v5217 = vpop.f32.mrb[0].mxu0
      %v5218 = vadd.f32 0.0, %v5217
      %v5219 = vpop.f32.mrb[0].mxu0
      %v5220 = vpop.f32.mrb[0].mxu0
      %v5221 = vadd.f32 0.0, %v5220
      %v5222 = vpop.f32.mrb[0].mxu0
      %5223 = vmatprep.mubr.bf16.mxu0 0
      %5224 = vmatmul.mubr.bf16.gmra.mrb[0].mxu0 %v5136
      %v5225 = vpop.f32.mrb[0].mxu0
      %v5226 = vadd.f32 0.0, %v5225
      %v5227 = vpop.f32.mrb[0].mxu0
      %v5228 = vpop.f32.mrb[0].mxu0
      %v5229 = vadd.f32 0.0, %v5228
      %v5230 = vpop.f32.mrb[0].mxu0
      %5231 = vmatprep.mubr.bf16.mxu0 0
      %5232 = vmatmul.mubr.bf16.gmra.mrb[0].mxu0 %v5139
      %v5233 = vpop.f32.mrb[0].mxu0
      %v5234 = vadd.f32 0.0, %v5233
      %v5235 = vpop.f32.mrb[0].mxu0
      %v5236 = vpop.f32.mrb[0].mxu0
      %v5237 = vadd.f32 0.0, %v5236
      %v5238 = vpop.f32.mrb[0].mxu0
      %5239 = vmatprep.mubr.bf16.mxu0 0
      %5240 = vmatmul.mubr.bf16.gmra.mrb[0].mxu0 %v5142
      %v5241 = vpop.f32.mrb[0].mxu0
      %v5242 = vadd.f32 0.0, %v5241
      %v5243 = vpop.f32.mrb[0].mxu0
      %v5244 = vpop.f32.mrb[0].mxu0
      %v5245 = vadd.f32 0.0, %v5244
      %v5246 = vpop.f32.mrb[0].mxu0
      %5247 = vmatprep.mubr.bf16.mxu0 0
      %5248 = vmatmul.mubr.bf16.gmra.mrb[0].mxu0 %v5145
      %v5249 = vpop.f32.mrb[0].mxu0
      %v5250 = vadd.f32 0.0, %v5249
      %v5251 = vpop.f32.mrb[0].mxu0
      %v5252 = vpop.f32.mrb[0].mxu0
      %v5253 = vadd.f32 0.0, %v5252
      %v5254 = vpop.f32.mrb[0].mxu0
      %5255 = vmatprep.mubr.bf16.mxu0 0
      %5256 = vmatmul.mubr.bf16.gmra.mrb[0].mxu0 %v5148
      %v5257 = vpop.f32.mrb[0].mxu0
      %v5258 = vadd.f32 0.0, %v5257
      %v5259 = vpop.f32.mrb[0].mxu0
      %v5260 = vpop.f32.mrb[0].mxu0
      %v5261 = vadd.f32 0.0, %v5260
      %v5262 = vpop.f32.mrb[0].mxu0
      %5263 = vmatprep.mubr.bf16.mxu0 0
      %5264 = vmatmul.mubr.bf16.gmra.mrb[0].mxu0 %v5151
      %v5265 = vpop.f32.mrb[0].mxu0
      %v5266 = vadd.f32 0.0, %v5265
      %v5267 = vpop.f32.mrb[0].mxu0
      %v5268 = vpop.f32.mrb[0].mxu0
      %v5269 = vadd.f32 0.0, %v5268
      %v5270 = vpop.f32.mrb[0].mxu0
      %5271 = vmatprep.mubr.bf16.mxu0 0
      %5272 = vmatmul.mubr.bf16.gmra.mrb[0].mxu0 %v5154
      %v5273 = vpop.f32.mrb[0].mxu0
      %v5274 = vadd.f32 0.0, %v5273
      %v5275 = vpop.f32.mrb[0].mxu0
      %v5276 = vpop.f32.mrb[0].mxu0
      %v5277 = vadd.f32 0.0, %v5276
      %v5278 = vpop.f32.mrb[0].mxu0
      %5279 = vmatprep.mubr.bf16.mxu0 0
      %5280 = vmatmul.mubr.bf16.gmra.mrb[0].mxu0 %v5157
      %v5281 = vpop.f32.mrb[0].mxu0
      %v5282 = vadd.f32 0.0, %v5281
      %v5283 = vpop.f32.mrb[0].mxu0
      %v5284 = vpop.f32.mrb[0].mxu0
      %v5285 = vadd.f32 0.0, %v5284
      %v5286 = vpop.f32.mrb[0].mxu0
      %5287 = vmatprep.mubr.bf16.mxu0 0
      %5288 = vmatmul.mubr.bf16.gmra.mrb[0].mxu0 %v5160
      %v5289 = vpop.f32.mrb[0].mxu0
      %v5290 = vadd.f32 0.0, %v5289
      %v5291 = vpop.f32.mrb[0].mxu0
      %v5292 = vpop.f32.mrb[0].mxu0
      %v5293 = vadd.f32 0.0, %v5292
      %v5294 = vpop.f32.mrb[0].mxu0
      %5295 = vmatprep.mubr.bf16.mxu0 0
      %5296 = vmatmul.mubr.bf16.gmra.mrb[0].mxu0 %v5163
      %v5297 = vpop.f32.mrb[0].mxu0
      %v5298 = vadd.f32 0.0, %v5297
      %v5299 = vpop.f32.mrb[0].mxu0
      %v5300 = vpop.f32.mrb[0].mxu0
      %v5301 = vadd.f32 0.0, %v5300
      %v5302 = vpop.f32.mrb[0].mxu0
      %5303 = vmatprep.mubr.bf16.mxu0 0
      %5304 = vmatmul.mubr.bf16.gmra.mrb[0].mxu0 %v5166
      %v5305 = vpop.f32.mrb[0].mxu0
      %v5306 = vadd.f32 0.0, %v5305
      %v5307 = vpop.f32.mrb[0].mxu0
      %v5308 = vpop.f32.mrb[0].mxu0
      %v5309 = vadd.f32 0.0, %v5308
      %v5310 = vpop.f32.mrb[0].mxu0
      %5311 = vmatprep.mubr.bf16.mxu0 0
      %5312 = vmatmul.mubr.bf16.gmra.mrb[0].mxu0 %v5169
      %v5313 = vpop.f32.mrb[0].mxu0
      %v5314 = vadd.f32 0.0, %v5313
      %v5315 = vpop.f32.mrb[0].mxu0
      %v5316 = vpop.f32.mrb[0].mxu0
      %v5317 = vadd.f32 0.0, %v5316
      %v5318 = vpop.f32.mrb[0].mxu0
      %5319 = vmatprep.mubr.bf16.mxu0 0
      %5320 = vmatmul.mubr.bf16.gmra.mrb[0].mxu0 %v5172
      %v5321 = vpop.f32.mrb[0].mxu0
      %v5322 = vadd.f32 0.0, %v5321
      %v5323 = vpop.f32.mrb[0].mxu0
      %v5324 = vpop.f32.mrb[0].mxu0
      %v5325 = vadd.f32 0.0, %v5324
      %v5326 = vpop.f32.mrb[0].mxu0
      %5327 = vmatprep.mubr.bf16.mxu0 0
      %5328 = vmatmul.mubr.bf16.gmra.mrb[0].mxu0 %v5175
      %v5329 = vpop.f32.mrb[0].mxu0
      %v5330 = vadd.f32 0.0, %v5329
      %v5331 = vpop.f32.mrb[0].mxu0
      %v5332 = vpop.f32.mrb[0].mxu0
      %v5333 = vadd.f32 0.0, %v5332
      %v5334 = vpop.f32.mrb[0].mxu0
      %5335 = vmatprep.mubr.bf16.mxu0 0
      %5336 = vmatmul.mubr.bf16.gmra.mrb[0].mxu0 %v5178
      %v5337 = vpop.f32.mrb[0].mxu0
      %v5338 = vadd.f32 0.0, %v5337
      %v5339 = vpop.f32.mrb[0].mxu0
      %v5340 = vpop.f32.mrb[0].mxu0
      %v5341 = vadd.f32 0.0, %v5340
      %v5342 = vpop.f32.mrb[0].mxu0
      %5343 = vdwg.mxu0
      %v5344 = vadd.f32 %v5050, %v5218
      %v5345 = vadd.f32 %v5051, %v5221
      %v5346 = vadd.f32 %v5052, %v5226
      %v5347 = vadd.f32 %v5053, %v5229
      %v5348 = vadd.f32 %v5054, %v5234
      %v5349 = vadd.f32 %v5055, %v5237
      %v5350 = vadd.f32 %v5056, %v5242
      %v5351 = vadd.f32 %v5057, %v5245
      %v5352 = vadd.f32 %v5058, %v5250
      %v5353 = vadd.f32 %v5059, %v5253
      %v5354 = vadd.f32 %v5060, %v5258
      %v5355 = vadd.f32 %v5061, %v5261
      %v5356 = vadd.f32 %v5062, %v5266
      %v5357 = vadd.f32 %v5063, %v5269
      %v5358 = vadd.f32 %v5064, %v5274
      %v5359 = vadd.f32 %v5065, %v5277
      %v5360 = vadd.f32 %v5066, %v5282
      %v5361 = vadd.f32 %v5067, %v5285
      %v5362 = vadd.f32 %v5068, %v5290
      %v5363 = vadd.f32 %v5069, %v5293
      %v5364 = vadd.f32 %v5070, %v5298
      %v5365 = vadd.f32 %v5071, %v5301
      %v5366 = vadd.f32 %v5072, %v5306
      %v5367 = vadd.f32 %v5073, %v5309
      %v5368 = vadd.f32 %v5074, %v5314
      %v5369 = vadd.f32 %v5075, %v5317
      %v5370 = vadd.f32 %v5076, %v5322
      %v5371 = vadd.f32 %v5077, %v5325
      %v5372 = vadd.f32 %v5078, %v5330
      %v5373 = vadd.f32 %v5079, %v5333
      %v5374 = vadd.f32 %v5080, %v5338
      %v5375 = vadd.f32 %v5081, %v5341
      %v5376 = vld [vmem:[%s4787 + $0x2] sm:$0xff]
      %v5377 = vld [vmem:[%s4787 + $0xa] sm:$0xff]
      %v5378 = vld [vmem:[%s4787 + $0x1a] sm:$0xff]
      %v5379 = vld [vmem:[%s4787 + $0x22] sm:$0xff]
      %v5380 = vld [vmem:[%s4787 + $0x32] sm:$0xff]
      %v5381 = vld [vmem:[%s4787 + $0x3a] sm:$0xff]
      %v5382 = vld [vmem:[%s4787 + $0x4a] sm:$0xff]
      %v5383 = vld [vmem:[%s4787 + $0x52] sm:$0xff]
      %v5384 = vld [vmem:[%s4787 + $0x62] sm:$0xff]
      %v5385 = vld [vmem:[%s4787 + $0x6a] sm:$0xff]
      %v5386 = vld [vmem:[%s4787 + $0x7a] sm:$0xff]
      %v5387 = vld [vmem:[%s4787 + $0x82] sm:$0xff]
      %v5388 = vld [vmem:[%s4787 + $0x92] sm:$0xff]
      %v5389 = vld [vmem:[%s4787 + $0x9a] sm:$0xff]
      %v5390 = vld [vmem:[%s4787 + $0xaa] sm:$0xff]
      %v5391 = vld [vmem:[%s4787 + $0xb2] sm:$0xff]
      %v5392 = vld [vmem:[%s4787 + $0xc2] sm:$0xff]
      %v5393 = vld [vmem:[%s4787 + $0xca] sm:$0xff]
      %v5394 = vld [vmem:[%s4787 + $0xda] sm:$0xff]
      %v5395 = vld [vmem:[%s4787 + $0xe2] sm:$0xff]
      %v5396 = vld [vmem:[%s4787 + $0xf2] sm:$0xff]
      %v5397 = vld [vmem:[%s4787 + $0xfa] sm:$0xff]
      %v5398 = vld [vmem:[%s4787 + $0x10a] sm:$0xff]
      %v5399 = vld [vmem:[%s4787 + $0x112] sm:$0xff]
      %v5400 = vld [vmem:[%s4787 + $0x122] sm:$0xff]
      %v5401 = vld [vmem:[%s4787 + $0x12a] sm:$0xff]
      %v5402 = vld [vmem:[%s4787 + $0x13a] sm:$0xff]
      %v5403 = vld [vmem:[%s4787 + $0x142] sm:$0xff]
      %v5404 = vld [vmem:[%s4787 + $0x152] sm:$0xff]
      %v5405 = vld [vmem:[%s4787 + $0x15a] sm:$0xff]
      %v5406 = vld [vmem:[%s4787 + $0x16a] sm:$0xff]
      %v5407 = vld [vmem:[%s4787 + $0x172] sm:$0xff]
      %v5408 = vpack.c.bf16 %v5377, %v5376
      %v5409 = vpack.c.bf16 %v5379, %v5378
      %v5410 = vpack.c.bf16 %v5381, %v5380
      %v5411 = vpack.c.bf16 %v5383, %v5382
      %v5412 = vpack.c.bf16 %v5385, %v5384
      %v5413 = vpack.c.bf16 %v5387, %v5386
      %v5414 = vpack.c.bf16 %v5389, %v5388
      %v5415 = vpack.c.bf16 %v5391, %v5390
      %v5416 = vpack.c.bf16 %v5393, %v5392
      %v5417 = vpack.c.bf16 %v5395, %v5394
      %v5418 = vpack.c.bf16 %v5397, %v5396
      %v5419 = vpack.c.bf16 %v5399, %v5398
      %v5420 = vpack.c.bf16 %v5401, %v5400
      %v5421 = vpack.c.bf16 %v5403, %v5402
      %v5422 = vpack.c.bf16 %v5405, %v5404
      %v5423 = vpack.c.bf16 %v5407, %v5406
      %s5424 = scalar_lea.vmem %s3, 32
      %v5425 = vld [vmem:[%s5424] sm:$0xf]
      %v5427 = vsel %vm226, %v5408, 0
      %v5430 = vsel %vm226, %v5409, 0
      %v5433 = vsel %vm226, %v5410, 0
      %v5436 = vsel %vm226, %v5411, 0
      %v5439 = vsel %vm226, %v5412, 0
      %v5442 = vsel %vm226, %v5413, 0
      %v5445 = vsel %vm226, %v5414, 0
      %v5448 = vsel %vm226, %v5415, 0
      %v5451 = vsel %vm226, %v5416, 0
      %v5454 = vsel %vm226, %v5417, 0
      %v5457 = vsel %vm226, %v5418, 0
      %v5460 = vsel %vm226, %v5419, 0
      %v5463 = vsel %vm226, %v5420, 0
      %v5466 = vsel %vm226, %v5421, 0
      %v5469 = vsel %vm226, %v5422, 0
      %v5472 = vsel %vm226, %v5423, 0
      %v5475 = vsel %vm548, %v5425, 0
      %5477 = vmatprep.subr.bf16.mxu0 0
      %5478 = vmatpush1.bf16.msra.mxu0 %v5475
      %5479 = vmatprep.subr.bf16.mxu0 0
      %5480 = vmatpush1.bf16.msra.mxu0 0
      %5481 = vmatprep.subr.bf16.mxu0 0
      %5482 = vmatpush1.bf16.msra.mxu0 0
      %5483 = vmatprep.subr.bf16.mxu0 0
      %5484 = vmatpush1.bf16.msra.mxu0 0
      %5485 = vmatprep.subr.bf16.mxu0 0
      %5486 = vmatpush1.bf16.msra.mxu0 0
      %5487 = vmatprep.subr.bf16.mxu0 0
      %5488 = vmatpush1.bf16.msra.mxu0 0
      %5489 = vmatprep.subr.bf16.mxu0 0
      %5490 = vmatpush1.bf16.msra.mxu0 0
      %5491 = vmatprep.subr.bf16.mxu0 0
      %5492 = vmatpush1.bf16.msra.mxu0 0
      %5493 = vmatprep.subr.bf16.mxu0 0
      %5494 = vmatpush1.bf16.msra.mxu0 0
      %5495 = vmatprep.subr.bf16.mxu0 0
      %5496 = vmatpush1.bf16.msra.mxu0 0
      %5497 = vmatprep.subr.bf16.mxu0 0
      %5498 = vmatpush1.bf16.msra.mxu0 0
      %5499 = vmatprep.subr.bf16.mxu0 0
      %5500 = vmatpush1.bf16.msra.mxu0 0
      %5501 = vmatprep.subr.bf16.mxu0 0
      %5502 = vmatpush1.bf16.msra.mxu0 0
      %5503 = vmatprep.subr.bf16.mxu0 0
      %5504 = vmatpush1.bf16.msra.mxu0 0
      %5505 = vmatprep.subr.bf16.mxu0 0
      %5506 = vmatpush1.bf16.msra.mxu0 0
      %5507 = vmatprep.subr.bf16.mxu0 0
      %5508 = vmatpush1.bf16.msra.mxu0 0
      %5509 = vmatprep.mubr.bf16.mxu0 0
      %5510 = vmatmul.mubr.bf16.gmra.mrb[0].mxu0 %v5427
      %v5511 = vpop.f32.mrb[0].mxu0
      %v5512 = vadd.f32 0.0, %v5511
      %v5513 = vpop.f32.mrb[0].mxu0
      %v5514 = vpop.f32.mrb[0].mxu0
      %v5515 = vadd.f32 0.0, %v5514
      %v5516 = vpop.f32.mrb[0].mxu0
      %5517 = vmatprep.mubr.bf16.mxu0 0
      %5518 = vmatmul.mubr.bf16.gmra.mrb[0].mxu0 %v5430
      %v5519 = vpop.f32.mrb[0].mxu0
      %v5520 = vadd.f32 0.0, %v5519
      %v5521 = vpop.f32.mrb[0].mxu0
      %v5522 = vpop.f32.mrb[0].mxu0
      %v5523 = vadd.f32 0.0, %v5522
      %v5524 = vpop.f32.mrb[0].mxu0
      %5525 = vmatprep.mubr.bf16.mxu0 0
      %5526 = vmatmul.mubr.bf16.gmra.mrb[0].mxu0 %v5433
      %v5527 = vpop.f32.mrb[0].mxu0
      %v5528 = vadd.f32 0.0, %v5527
      %v5529 = vpop.f32.mrb[0].mxu0
      %v5530 = vpop.f32.mrb[0].mxu0
      %v5531 = vadd.f32 0.0, %v5530
      %v5532 = vpop.f32.mrb[0].mxu0
      %5533 = vmatprep.mubr.bf16.mxu0 0
      %5534 = vmatmul.mubr.bf16.gmra.mrb[0].mxu0 %v5436
      %v5535 = vpop.f32.mrb[0].mxu0
      %v5536 = vadd.f32 0.0, %v5535
      %v5537 = vpop.f32.mrb[0].mxu0
      %v5538 = vpop.f32.mrb[0].mxu0
      %v5539 = vadd.f32 0.0, %v5538
      %v5540 = vpop.f32.mrb[0].mxu0
      %5541 = vmatprep.mubr.bf16.mxu0 0
      %5542 = vmatmul.mubr.bf16.gmra.mrb[0].mxu0 %v5439
      %v5543 = vpop.f32.mrb[0].mxu0
      %v5544 = vadd.f32 0.0, %v5543
      %v5545 = vpop.f32.mrb[0].mxu0
      %v5546 = vpop.f32.mrb[0].mxu0
      %v5547 = vadd.f32 0.0, %v5546
      %v5548 = vpop.f32.mrb[0].mxu0
      %5549 = vmatprep.mubr.bf16.mxu0 0
      %5550 = vmatmul.mubr.bf16.gmra.mrb[0].mxu0 %v5442
      %v5551 = vpop.f32.mrb[0].mxu0
      %v5552 = vadd.f32 0.0, %v5551
      %v5553 = vpop.f32.mrb[0].mxu0
      %v5554 = vpop.f32.mrb[0].mxu0
      %v5555 = vadd.f32 0.0, %v5554
      %v5556 = vpop.f32.mrb[0].mxu0
      %5557 = vmatprep.mubr.bf16.mxu0 0
      %5558 = vmatmul.mubr.bf16.gmra.mrb[0].mxu0 %v5445
      %v5559 = vpop.f32.mrb[0].mxu0
      %v5560 = vadd.f32 0.0, %v5559
      %v5561 = vpop.f32.mrb[0].mxu0
      %v5562 = vpop.f32.mrb[0].mxu0
      %v5563 = vadd.f32 0.0, %v5562
      %v5564 = vpop.f32.mrb[0].mxu0
      %5565 = vmatprep.mubr.bf16.mxu0 0
      %5566 = vmatmul.mubr.bf16.gmra.mrb[0].mxu0 %v5448
      %v5567 = vpop.f32.mrb[0].mxu0
      %v5568 = vadd.f32 0.0, %v5567
      %v5569 = vpop.f32.mrb[0].mxu0
      %v5570 = vpop.f32.mrb[0].mxu0
      %v5571 = vadd.f32 0.0, %v5570
      %v5572 = vpop.f32.mrb[0].mxu0
      %5573 = vmatprep.mubr.bf16.mxu0 0
      %5574 = vmatmul.mubr.bf16.gmra.mrb[0].mxu0 %v5451
      %v5575 = vpop.f32.mrb[0].mxu0
      %v5576 = vadd.f32 0.0, %v5575
      %v5577 = vpop.f32.mrb[0].mxu0
      %v5578 = vpop.f32.mrb[0].mxu0
      %v5579 = vadd.f32 0.0, %v5578
      %v5580 = vpop.f32.mrb[0].mxu0
      %5581 = vmatprep.mubr.bf16.mxu0 0
      %5582 = vmatmul.mubr.bf16.gmra.mrb[0].mxu0 %v5454
      %v5583 = vpop.f32.mrb[0].mxu0
      %v5584 = vadd.f32 0.0, %v5583
      %v5585 = vpop.f32.mrb[0].mxu0
      %v5586 = vpop.f32.mrb[0].mxu0
      %v5587 = vadd.f32 0.0, %v5586
      %v5588 = vpop.f32.mrb[0].mxu0
      %5589 = vmatprep.mubr.bf16.mxu0 0
      %5590 = vmatmul.mubr.bf16.gmra.mrb[0].mxu0 %v5457
      %v5591 = vpop.f32.mrb[0].mxu0
      %v5592 = vadd.f32 0.0, %v5591
      %v5593 = vpop.f32.mrb[0].mxu0
      %v5594 = vpop.f32.mrb[0].mxu0
      %v5595 = vadd.f32 0.0, %v5594
      %v5596 = vpop.f32.mrb[0].mxu0
      %5597 = vmatprep.mubr.bf16.mxu0 0
      %5598 = vmatmul.mubr.bf16.gmra.mrb[0].mxu0 %v5460
      %v5599 = vpop.f32.mrb[0].mxu0
      %v5600 = vadd.f32 0.0, %v5599
      %v5601 = vpop.f32.mrb[0].mxu0
      %v5602 = vpop.f32.mrb[0].mxu0
      %v5603 = vadd.f32 0.0, %v5602
      %v5604 = vpop.f32.mrb[0].mxu0
      %5605 = vmatprep.mubr.bf16.mxu0 0
      %5606 = vmatmul.mubr.bf16.gmra.mrb[0].mxu0 %v5463
      %v5607 = vpop.f32.mrb[0].mxu0
      %v5608 = vadd.f32 0.0, %v5607
      %v5609 = vpop.f32.mrb[0].mxu0
      %v5610 = vpop.f32.mrb[0].mxu0
      %v5611 = vadd.f32 0.0, %v5610
      %v5612 = vpop.f32.mrb[0].mxu0
      %5613 = vmatprep.mubr.bf16.mxu0 0
      %5614 = vmatmul.mubr.bf16.gmra.mrb[0].mxu0 %v5466
      %v5615 = vpop.f32.mrb[0].mxu0
      %v5616 = vadd.f32 0.0, %v5615
      %v5617 = vpop.f32.mrb[0].mxu0
      %v5618 = vpop.f32.mrb[0].mxu0
      %v5619 = vadd.f32 0.0, %v5618
      %v5620 = vpop.f32.mrb[0].mxu0
      %5621 = vmatprep.mubr.bf16.mxu0 0
      %5622 = vmatmul.mubr.bf16.gmra.mrb[0].mxu0 %v5469
      %v5623 = vpop.f32.mrb[0].mxu0
      %v5624 = vadd.f32 0.0, %v5623
      %v5625 = vpop.f32.mrb[0].mxu0
      %v5626 = vpop.f32.mrb[0].mxu0
      %v5627 = vadd.f32 0.0, %v5626
      %v5628 = vpop.f32.mrb[0].mxu0
      %5629 = vmatprep.mubr.bf16.mxu0 0
      %5630 = vmatmul.mubr.bf16.gmra.mrb[0].mxu0 %v5472
      %v5631 = vpop.f32.mrb[0].mxu0
      %v5632 = vadd.f32 0.0, %v5631
      %v5633 = vpop.f32.mrb[0].mxu0
      %v5634 = vpop.f32.mrb[0].mxu0
      %v5635 = vadd.f32 0.0, %v5634
      %v5636 = vpop.f32.mrb[0].mxu0
      %5637 = vdwg.mxu0
      %v5638 = vadd.f32 %v5344, %v5512
      %v5639 = vadd.f32 %v5345, %v5515
      %v5640 = vadd.f32 %v5346, %v5520
      %v5641 = vadd.f32 %v5347, %v5523
      %v5642 = vadd.f32 %v5348, %v5528
      %v5643 = vadd.f32 %v5349, %v5531
      %v5644 = vadd.f32 %v5350, %v5536
      %v5645 = vadd.f32 %v5351, %v5539
      %v5646 = vadd.f32 %v5352, %v5544
      %v5647 = vadd.f32 %v5353, %v5547
      %v5648 = vadd.f32 %v5354, %v5552
      %v5649 = vadd.f32 %v5355, %v5555
      %v5650 = vadd.f32 %v5356, %v5560
      %v5651 = vadd.f32 %v5357, %v5563
      %v5652 = vadd.f32 %v5358, %v5568
      %v5653 = vadd.f32 %v5359, %v5571
      %v5654 = vadd.f32 %v5360, %v5576
      %v5655 = vadd.f32 %v5361, %v5579
      %v5656 = vadd.f32 %v5362, %v5584
      %v5657 = vadd.f32 %v5363, %v5587
      %v5658 = vadd.f32 %v5364, %v5592
      %v5659 = vadd.f32 %v5365, %v5595
      %v5660 = vadd.f32 %v5366, %v5600
      %v5661 = vadd.f32 %v5367, %v5603
      %v5662 = vadd.f32 %v5368, %v5608
      %v5663 = vadd.f32 %v5369, %v5611
      %v5664 = vadd.f32 %v5370, %v5616
      %v5665 = vadd.f32 %v5371, %v5619
      %v5666 = vadd.f32 %v5372, %v5624
      %v5667 = vadd.f32 %v5373, %v5627
      %v5668 = vadd.f32 %v5374, %v5632
      %v5669 = vadd.f32 %v5375, %v5635
      %v5670 = vld [vmem:[%s4] sm:$0x1]
      %v5672 = vlaneseq
      %v5673 = vshrl.u32 %v5672, 7
      %v5674 = vsub.s32 0, %v5673
      %v5675 = vrot.slane %v5670, %v5674
      %v5677 = vadd.f32 %v5638, %v5675
      %v5678 = vadd.f32 %v5639, %v5675
      %v5679 = vadd.f32 %v5640, %v5675
      %v5680 = vadd.f32 %v5641, %v5675
      %v5681 = vadd.f32 %v5642, %v5675
      %v5682 = vadd.f32 %v5643, %v5675
      %v5683 = vadd.f32 %v5644, %v5675
      %v5684 = vadd.f32 %v5645, %v5675
      %v5685 = vadd.f32 %v5646, %v5675
      %v5686 = vadd.f32 %v5647, %v5675
      %v5687 = vadd.f32 %v5648, %v5675
      %v5688 = vadd.f32 %v5649, %v5675
      %v5689 = vadd.f32 %v5650, %v5675
      %v5690 = vadd.f32 %v5651, %v5675
      %v5691 = vadd.f32 %v5652, %v5675
      %v5692 = vadd.f32 %v5653, %v5675
      %v5693 = vadd.f32 %v5654, %v5675
      %v5694 = vadd.f32 %v5655, %v5675
      %v5695 = vadd.f32 %v5656, %v5675
      %v5696 = vadd.f32 %v5657, %v5675
      %v5697 = vadd.f32 %v5658, %v5675
      %v5698 = vadd.f32 %v5659, %v5675
      %v5699 = vadd.f32 %v5660, %v5675
      %v5700 = vadd.f32 %v5661, %v5675
      %v5701 = vadd.f32 %v5662, %v5675
      %v5702 = vadd.f32 %v5663, %v5675
      %v5703 = vadd.f32 %v5664, %v5675
      %v5704 = vadd.f32 %v5665, %v5675
      %v5705 = vadd.f32 %v5666, %v5675
      %v5706 = vadd.f32 %v5667, %v5675
      %v5707 = vadd.f32 %v5668, %v5675
      %v5708 = vadd.f32 %v5669, %v5675
      %v5709 = vadd.f32 %v5677, %v336
      %v5710 = vadd.f32 %v5678, %v337
      %v5711 = vadd.f32 %v5679, %v338
      %v5712 = vadd.f32 %v5680, %v339
      %v5713 = vadd.f32 %v5681, %v340
      %v5714 = vadd.f32 %v5682, %v341
      %v5715 = vadd.f32 %v5683, %v342
      %v5716 = vadd.f32 %v5684, %v343
      %v5717 = vadd.f32 %v5685, %v344
      %v5718 = vadd.f32 %v5686, %v345
      %v5719 = vadd.f32 %v5687, %v346
      %v5720 = vadd.f32 %v5688, %v347
      %v5721 = vadd.f32 %v5689, %v348
      %v5722 = vadd.f32 %v5690, %v349
      %v5723 = vadd.f32 %v5691, %v350
      %v5724 = vadd.f32 %v5692, %v351
      %v5725 = vadd.f32 %v5693, %v352
      %v5726 = vadd.f32 %v5694, %v353
      %v5727 = vadd.f32 %v5695, %v354
      %v5728 = vadd.f32 %v5696, %v355
      %v5729 = vadd.f32 %v5697, %v356
      %v5730 = vadd.f32 %v5698, %v357
      %v5731 = vadd.f32 %v5699, %v358
      %v5732 = vadd.f32 %v5700, %v359
      %v5733 = vadd.f32 %v5701, %v360
      %v5734 = vadd.f32 %v5702, %v361
      %v5735 = vadd.f32 %v5703, %v362
      %v5736 = vadd.f32 %v5704, %v363
      %v5737 = vadd.f32 %v5705, %v364
      %v5738 = vadd.f32 %v5706, %v365
      %v5739 = vadd.f32 %v5707, %v366
      %v5740 = vadd.f32 %v5708, %v367
      %v5741 = vmax.f32 %v5709, 0.0
      %v5742 = vmax.f32 %v5710, 0.0
      %v5743 = vmax.f32 %v5711, 0.0
      %v5744 = vmax.f32 %v5712, 0.0
      %v5745 = vmax.f32 %v5713, 0.0
      %v5746 = vmax.f32 %v5714, 0.0
      %v5747 = vmax.f32 %v5715, 0.0
      %v5748 = vmax.f32 %v5716, 0.0
      %v5749 = vmax.f32 %v5717, 0.0
      %v5750 = vmax.f32 %v5718, 0.0
      %v5751 = vmax.f32 %v5719, 0.0
      %v5752 = vmax.f32 %v5720, 0.0
      %v5753 = vmax.f32 %v5721, 0.0
      %v5754 = vmax.f32 %v5722, 0.0
      %v5755 = vmax.f32 %v5723, 0.0
      %v5756 = vmax.f32 %v5724, 0.0
      %v5757 = vmax.f32 %v5725, 0.0
      %v5758 = vmax.f32 %v5726, 0.0
      %v5759 = vmax.f32 %v5727, 0.0
      %v5760 = vmax.f32 %v5728, 0.0
      %v5761 = vmax.f32 %v5729, 0.0
      %v5762 = vmax.f32 %v5730, 0.0
      %v5763 = vmax.f32 %v5731, 0.0
      %v5764 = vmax.f32 %v5732, 0.0
      %v5765 = vmax.f32 %v5733, 0.0
      %v5766 = vmax.f32 %v5734, 0.0
      %v5767 = vmax.f32 %v5735, 0.0
      %v5768 = vmax.f32 %v5736, 0.0
      %v5769 = vmax.f32 %v5737, 0.0
      %v5770 = vmax.f32 %v5738, 0.0
      %v5771 = vmax.f32 %v5739, 0.0
      %v5772 = vmax.f32 %v5740, 0.0
      %5773 = vst.msk [vmem:[%s224] sm:$0xff] %vm226, %v5741
      %5774 = vst.msk [vmem:[%s224 + $0x8] sm:$0xff] %vm226, %v5742
      %5775 = vst.msk [vmem:[%s224 + $0x10] sm:$0xff] %vm226, %v5743
      %5776 = vst.msk [vmem:[%s224 + $0x18] sm:$0xff] %vm226, %v5744
      %5777 = vst.msk [vmem:[%s224 + $0x20] sm:$0xff] %vm226, %v5745
      %5778 = vst.msk [vmem:[%s224 + $0x28] sm:$0xff] %vm226, %v5746
      %5779 = vst.msk [vmem:[%s224 + $0x30] sm:$0xff] %vm226, %v5747
      %5780 = vst.msk [vmem:[%s224 + $0x38] sm:$0xff] %vm226, %v5748
      %5781 = vst.msk [vmem:[%s224 + $0x40] sm:$0xff] %vm226, %v5749
      %5782 = vst.msk [vmem:[%s224 + $0x48] sm:$0xff] %vm226, %v5750
      %5783 = vst.msk [vmem:[%s224 + $0x50] sm:$0xff] %vm226, %v5751
      %5784 = vst.msk [vmem:[%s224 + $0x58] sm:$0xff] %vm226, %v5752
      %5785 = vst.msk [vmem:[%s224 + $0x60] sm:$0xff] %vm226, %v5753
      %5786 = vst.msk [vmem:[%s224 + $0x68] sm:$0xff] %vm226, %v5754
      %5787 = vst.msk [vmem:[%s224 + $0x70] sm:$0xff] %vm226, %v5755
      %5788 = vst.msk [vmem:[%s224 + $0x78] sm:$0xff] %vm226, %v5756
      %5789 = vst.msk [vmem:[%s224 + $0x80] sm:$0xff] %vm226, %v5757
      %5790 = vst.msk [vmem:[%s224 + $0x88] sm:$0xff] %vm226, %v5758
      %5791 = vst.msk [vmem:[%s224 + $0x90] sm:$0xff] %vm226, %v5759
      %5792 = vst.msk [vmem:[%s224 + $0x98] sm:$0xff] %vm226, %v5760
      %5793 = vst.msk [vmem:[%s224 + $0xa0] sm:$0xff] %vm226, %v5761
      %5794 = vst.msk [vmem:[%s224 + $0xa8] sm:$0xff] %vm226, %v5762
      %5795 = vst.msk [vmem:[%s224 + $0xb0] sm:$0xff] %vm226, %v5763
      %5796 = vst.msk [vmem:[%s224 + $0xb8] sm:$0xff] %vm226, %v5764
      %5797 = vst.msk [vmem:[%s224 + $0xc0] sm:$0xff] %vm226, %v5765
      %5798 = vst.msk [vmem:[%s224 + $0xc8] sm:$0xff] %vm226, %v5766
      %5799 = vst.msk [vmem:[%s224 + $0xd0] sm:$0xff] %vm226, %v5767
      %5800 = vst.msk [vmem:[%s224 + $0xd8] sm:$0xff] %vm226, %v5768
      %5801 = vst.msk [vmem:[%s224 + $0xe0] sm:$0xff] %vm226, %v5769
      %5802 = vst.msk [vmem:[%s224 + $0xe8] sm:$0xff] %vm226, %v5770
      %5803 = vst.msk [vmem:[%s224 + $0xf0] sm:$0xff] %vm226, %v5771
      %5804 = vst.msk [vmem:[%s224 + $0xf8] sm:$0xff] %vm226, %v5772
      %p5805 = scmp.lt.s32.totalorder %s16, 1
      %s5806 = scalar_select %p5805, %s16, 1
      %s5807 = smul.addr %s5806, 32
      %s5808 = smul.addr %s5807, 8
      %s5809 = scalar_lea.vmem %s5, %s5808
      // Predicated region
      $region41: #{basic_block_forward.1} parent=39 // pred_check
        %p5810 = pneg %p144
      $region42: #{basic_block_forward.1} parent=39 // pred_check_branch
        %5812 = sbr.rel (%p5810) target = $region44
      $region43: #{basic_block_forward.1} parent=39 // pred_region
        _
      $region44: #{basic_block_forward.1} parent=39 // pred_fallthru
        _
    $region40: #{basic_block_forward.1} parent=5 // pred_fallthru
      _
    %p5813 = scmp.le.s32.totalorder 2, %s11
    // Predicated region
    $region45: #{basic_block_forward.1} parent=5 // pred_check
      %p5814 = pneg %p5813
    $region46: #{basic_block_forward.1} parent=5 // pred_check_branch
      %5816 = sbr.rel (%p5814) target = $region48
    $region47: #{basic_block_forward.1} parent=5 // pred_region
      %s5817 = ssub.s32 %s11, 2
      // Predicated region
      $region49: #{basic_block_forward.1} parent=47 // pred_check
        %p5818 = pneg %p150
      $region50: #{basic_block_forward.1} parent=47 // pred_check_branch
        %5820 = sbr.rel (%p5818) target = $region52
      $region51: #{basic_block_forward.1} parent=47 // pred_region
        %p5821 = scmp.lt.s32.totalorder %s17, 1
        %s5822 = scalar_select %p5821, %s17, 1
        %s5823 = smul.addr %s5822, 32
        %s5824 = smul.addr %s5823, 8
        %s5825 = scalar_lea.vmem %s5, %s5824
      $region52: #{basic_block_forward.1} parent=47 // pred_fallthru
        _
    $region48: #{basic_block_forward.1} parent=5 // pred_fallthru
      _
  $region6: #{basic_block_forward.1} parent=0 // loop_footer
    %s15 = sadd.s32 1, %s11
  $region7: #{basic_block_forward.1} parent=0 // loop_footer_branch
    %10 = sbr.rel target = $region3
  $region8: #{basic_block_forward.1} parent=0 // loop_exit
    _

</llo_original>
